<compile_context>
chip_gen: v6e
topology: v6e:2x2x1
jax: 0.10.0
libtpu: 0.0.40
codegen_flags: <defaults>
</compile_context>

<pallas_src>
from functools import partial

import jax
import jax.numpy as jnp
from jax.experimental import pallas as pl
from jax.experimental.pallas import tpu as pltpu

EPS = 1e-5  # PyTorch nn.LayerNorm default eps
BF16 = jnp.bfloat16
F32 = jnp.float32


def _layernorm(x, g, b):
    mu = jnp.mean(x, axis=-1, keepdims=True)
    var = jnp.mean((x - mu) ** 2, axis=-1, keepdims=True)
    return (x - mu) * jax.lax.rsqrt(var + EPS) * g + b


# ---------------- Pallas kernels ----------------

def _embed_qkv_kernel(x_ref, pos_ref, w1_ref, b1_ref, g1_ref, be1_ref,
                      wq_ref, bq_ref, wk_ref, bk_ref, wv_ref, bv_ref,
                      h_ref, q_ref, k_ref, v_ref):
    # x_ref: (TM, Pin) f32 token rows; weights bf16, f32 accumulation on the MXU.
    xb = x_ref[...].astype(BF16)
    h = jnp.dot(xb, w1_ref[...], preferred_element_type=F32) + b1_ref[...]
    h = h + pos_ref[...]                       # positional encoding (per token)
    h = _layernorm(h, g1_ref[...], be1_ref[...])
    h_ref[...] = h                             # f32 residual source for stage 3
    hb = h.astype(BF16)
    # 1/sqrt(dh) attention scale already folded into wq/bq (free, done once on host)
    q_ref[...] = (jnp.dot(hb, wq_ref[...],
                          preferred_element_type=F32) + bq_ref[...]).astype(BF16)
    k_ref[...] = (jnp.dot(hb, wk_ref[...],
                          preferred_element_type=F32) + bk_ref[...]).astype(BF16)
    v_ref[...] = (jnp.dot(hb, wv_ref[...],
                          preferred_element_type=F32) + bv_ref[...]).astype(BF16)


def _attn_kernel(q_ref, k_ref, v_ref, o_ref):
    # refs: (tbt*nh, S, dh) bf16 -> all heads of tbt (t,b) slices in one grid step.
    s = jnp.einsum("bqd,bkd->bqk", q_ref[...], k_ref[...],
                   preferred_element_type=F32)
    s = s - jnp.max(s, axis=-1, keepdims=True)
    p = jnp.exp(s)
    # exact divide (not approx reciprocal): the downstream IFNode threshold is
    # discontinuous, so the softmax must match the reference to f32 accuracy.
    p = p / jnp.sum(p, axis=-1, keepdims=True)
    o = jnp.einsum("bqk,bkd->bqd", p.astype(BF16), v_ref[...],
                   preferred_element_type=F32)
    o_ref[...] = o.astype(BF16)


def _out_mlp_kernel(h_ref, a_ref, wo_ref, bo_ref, g2_ref, be2_ref,
                    wm1_ref, bm1_ref, wm2_ref, bm2_ref, y_ref, *, hd_chunk):
    # h_ref: (TM, D) f32 post-LN1 rows; a_ref: (TM, D) bf16 attention output.
    attn = jnp.dot(a_ref[...], wo_ref[...],
                   preferred_element_type=F32) + bo_ref[...]
    x = h_ref[...] + attn                      # residual 1
    x = _layernorm(x, g2_ref[...], be2_ref[...])
    xb = x.astype(BF16)
    hd = wm1_ref.shape[1]
    mlp = jnp.zeros(y_ref.shape, F32)
    # Chunk the MLP over Hd (static python loop) so the (TM, chunk) f32 intermediate
    # stays small; spikes are per-column -> identical numerics to the full matmul.
    for c0 in range(0, hd, hd_chunk):
        c1 = min(hd, c0 + hd_chunk)
        m = jnp.dot(xb, wm1_ref[:, c0:c1],
                    preferred_element_type=F32) + bm1_ref[:, c0:c1]
        spk = (m >= 1.0).astype(BF16)          # IFNode single-step spike, exact {0,1}
        mlp = mlp + jnp.dot(spk, wm2_ref[c0:c1, :], preferred_element_type=F32)
    y_ref[...] = x + mlp + bm2_ref[...]        # residual 2


# ---------------- tiling heuristic ----------------

def _pick_tbt(tb, s, rows_per_tile):
    """Pick tbt = number of (t,b) slices per grid step."""
    divs = [d for d in range(1, tb + 1) if tb % d == 0]
    # keep >= 2 grid steps when possible (megacore sharding on v7x + pipelining)
    capped = [d for d in divs if tb // d >= 2] or divs
    # (8,128) rule: TM must be a multiple of 8 (unless the block is the full array)
    ok = [d for d in capped if (d * s) % 8 == 0]
    if not ok:
        ok = [d for d in divs if (d * s) % 8 == 0] or [tb]
    fits = [d for d in ok if d * s <= rows_per_tile] or [min(ok)]

    def score(d):
        tm = d * s
        return (tm % 256 == 0, tm % 128 == 0, tm)   # MXU-friendly, then largest

    return max(fits, key=score)


# ---------------- wrapper ----------------

def vit_block_forward(x, params, *, patch_size, num_heads,
                      rows_per_tile=512, hd_chunk=512):
    T, B, C, H, W = x.shape
    p = patch_size
    h_sp, w_sp = H // p, W // p
    S = h_sp * w_sp
    D = params["w1"].shape[1]
    Hd = params["wm1"].shape[1]
    nh = num_heads
    dh = D // nh
    Pin = p * p * C
    TB = T * B
    ROWS = TB * S
    scale = 1.0 / (dh ** 0.5)

    # ---- weight prep: bf16 MXU operands (f32 biases / LN params) ----
    w1 = params["w1"].astype(BF16)
    wq = (params["wq"] * scale).astype(BF16)     # fold attention scale into wq/bq
    bq = params["bq"] * scale
    wk = params["wk"].astype(BF16)
    wv = params["wv"].astype(BF16)
    wo = params["wo"].astype(BF16)
    wm1 = params["wm1"].astype(BF16)
    wm2 = params["wm2"].astype(BF16)

    # rearrange 't b c (h p1) (w p2) -> (t b h w) (p1 p2 c)'  (glue)
    xp = x.reshape(T, B, C, h_sp, p, w_sp, p)
    xp = jnp.transpose(xp, (0, 1, 3, 5, 4, 6, 2)).reshape(ROWS, Pin)

    # ---- row tiling: tbt whole (t,b) slices (= TM token rows) per grid step ----
    tbt = _pick_tbt(TB, S, rows_per_tile)
    TM = tbt * S
    grid = (TB // tbt,)
    pos_tile = jnp.tile(params["pos_enc"], (tbt, 1))        # (TM, D), VMEM-resident

    cp = pltpu.CompilerParams(
        dimension_semantics=("parallel",),        # all grid steps independent
        vmem_limit_bytes=48 * 1024 * 1024)        # headroom, still safe on v7x (64 MiB)

    def rows(f):                                   # pipelined row tiles
        return pl.BlockSpec((TM, f), lambda i: (i, 0))

    # constant operands: whole array resident in VMEM, single copy (no double-buffer)
    const = pl.BlockSpec(memory_space=pltpu.MemorySpace.VMEM)

    # Stage 1: patch embedding + pos-enc + LayerNorm1 + q/k/v projections
    h, q, k, v = pl.pallas_call(
        _embed_qkv_kernel,
        grid=grid,
        in_specs=[rows(Pin)] + [const] * 11,
        out_specs=(rows(D), rows(D), rows(D), rows(D)),
        out_shape=(jax.ShapeDtypeStruct((ROWS, D), F32),
                   jax.ShapeDtypeStruct((ROWS, D), BF16),
                   jax.ShapeDtypeStruct((ROWS, D), BF16),
                   jax.ShapeDtypeStruct((ROWS, D), BF16)),
        compiler_params=cp,
    )(xp, pos_tile, w1, params["b1"], params["g1"], params["be1"],
      wq, bq, wk, params["bk"], wv, params["bv"])

    # quirky contiguous head split, exactly torch's .view(t*b*nh, S, dh).
    # (ROWS, D) is contiguous row-major -> these reshapes are zero-copy bitcasts.
    qh = q.reshape(TB * nh, S, dh)
    kh = k.reshape(TB * nh, S, dh)
    vh = v.reshape(TB * nh, S, dh)

    # Stage 2: attention, all heads of tbt (t,b) slices per grid step
    head_spec = pl.BlockSpec((tbt * nh, S, dh), lambda i: (i, 0, 0))
    ah = pl.pallas_call(
        _attn_kernel,
        grid=grid,
        in_specs=[head_spec, head_spec, head_spec],
        out_specs=head_spec,
        out_shape=jax.ShapeDtypeStruct((TB * nh, S, dh), BF16),
        compiler_params=cp,
    )(qh, kh, vh)

    a = ah.reshape(ROWS, D)   # torch .view(t, b, S, D) equivalent, zero-copy

    # Stage 3: out projection + residual + LayerNorm2 + spiking MLP + residual
    y = pl.pallas_call(
        partial(_out_mlp_kernel, hd_chunk=hd_chunk),
        grid=grid,
        in_specs=[rows(D), rows(D)] + [const] * 8,
        out_specs=rows(D),
        out_shape=jax.ShapeDtypeStruct((ROWS, D), F32),
        compiler_params=cp,
    )(h, a, wo, params["bo"], params["g2"], params["be2"],
      wm1, params["bm1"], wm2, params["bm2"])

    # rearrange 't b (h w) c -> t b c h w'  (glue)
    y = y.reshape(T, B, h_sp, w_sp, D)
    return jnp.transpose(y, (0, 1, 4, 2, 3))


# ---------------- parameter init (deterministic, synthetic) ----------------

def init_params(key, in_channels, out_channels, patch_size, mlp_ratio, seq_len):
    D = out_channels
    Pin = in_channels * patch_size * patch_size
    Hd = int(out_channels * mlp_ratio)
    keys = jax.random.split(key, 7)

    def lin(k, fan_in, fan_out):
        k1, k2 = jax.random.split(k)
        w = jax.random.normal(k1, (fan_in, fan_out), F32) / jnp.sqrt(
            jnp.float32(fan_in))
        b = jax.random.normal(k2, (1, fan_out), F32) * 0.01
        return w, b

    params = {}
    params["w1"], params["b1"] = lin(keys[0], Pin, D)
    params["wq"], params["bq"] = lin(keys[1], D, D)
    params["wk"], params["bk"] = lin(keys[2], D, D)
    params["wv"], params["bv"] = lin(keys[3], D, D)
    params["wo"], params["bo"] = lin(keys[4], D, D)
    params["wm1"], params["bm1"] = lin(keys[5], D, Hd)
    params["wm2"], params["bm2"] = lin(keys[6], Hd, D)
    # LayerNorm affine params, PyTorch default init (weight=1, bias=0)
    params["g1"] = jnp.ones((1, D), F32)
    params["be1"] = jnp.zeros((1, D), F32)
    params["g2"] = jnp.ones((1, D), F32)
    params["be2"] = jnp.zeros((1, D), F32)
    # fixed sinusoidal positional encoding, exactly as in the module
    pos = jnp.arange(seq_len, dtype=F32)
    dim = jnp.arange(0, D, 2, dtype=F32) / D
    ang = pos[:, None] / (10000.0 ** dim[None, :])
    pe = jnp.zeros((seq_len, D), F32)
    pe = pe.at[:, 0::2].set(jnp.sin(ang))
    pe = pe.at[:, 1::2].set(jnp.cos(ang))
    params["pos_enc"] = pe
    return params


# ---------------- pure-JAX reference (mirrors kernel numerics) ----------------

def vit_block_reference(x, params, *, patch_size, num_heads):
    T, B, C, H, W = x.shape
    p = patch_size
    h_sp, w_sp = H // p, W // p
    S = h_sp * w_sp
    D = params["w1"].shape[1]
    nh = num_heads
    dh = D // nh
    scale = 1.0 / (dh ** 0.5)

    xp = x.reshape(T, B, C, h_sp, p, w_sp, p)
    xp = jnp.transpose(xp, (0, 1, 3, 5, 4, 6, 2)).reshape(T, B, S, p * p * C)

    w1 = params["w1"].astype(BF16)
    wq = (params["wq"] * scale).astype(BF16)
    bq = params["bq"] * scale
    wk = params["wk"].astype(BF16)
    wv = params["wv"].astype(BF16)
    wo = params["wo"].astype(BF16)
    wm1 = params["wm1"].astype(BF16)
    wm2 = params["wm2"].astype(BF16)

    h = jnp.dot(xp.astype(BF16), w1, preferred_element_type=F32) + params["b1"]
    h = h + params["pos_enc"][None, None]
    h = _layernorm(h, params["g1"], params["be1"])
    hb = h.astype(BF16)
    q = (jnp.dot(hb, wq, preferred_element_type=F32) + bq).astype(BF16)
    k = (jnp.dot(hb, wk, preferred_element_type=F32) + params["bk"]).astype(BF16)
    v = (jnp.dot(hb, wv, preferred_element_type=F32) + params["bv"]).astype(BF16)
    qh = q.reshape(T * B * nh, S, dh)
    kh = k.reshape(T * B * nh, S, dh)
    vh = v.reshape(T * B * nh, S, dh)
    s = jnp.einsum("bqd,bkd->bqk", qh, kh, preferred_element_type=F32)
    s = s - jnp.max(s, axis=-1, keepdims=True)
    pw = jnp.exp(s)
    pw = pw / jnp.sum(pw, axis=-1, keepdims=True)
    a = jnp.einsum("bqk,bkd->bqd", pw.astype(BF16), vh,
                   preferred_element_type=F32)
    a = a.astype(BF16).reshape(T, B, S, D)
    attn = jnp.dot(a, wo, preferred_element_type=F32) + params["bo"]
    x2 = h + attn
    x2 = _layernorm(x2, params["g2"], params["be2"])
    m = jnp.dot(x2.astype(BF16), wm1, preferred_element_type=F32) + params["bm1"]
    spk = (m >= 1.0).astype(BF16)
    mlp = jnp.dot(spk, wm2, preferred_element_type=F32) + params["bm2"]
    y = x2 + mlp
    y = y.reshape(T, B, h_sp, w_sp, D)
    return jnp.transpose(y, (0, 1, 4, 2, 3))


if __name__ == "__main__":
    # small shapes consistent with the module's forward
    T, B, C, H, W = 2, 2, 4, 16, 16
    patch_size, num_heads, mlp_ratio = 4, 4, 2.0
    out_channels = 32
    S = (W // patch_size) ** 2

    key = jax.random.PRNGKey(0)
    kx, kp = jax.random.split(key)
    x = jax.random.normal(kx, (T, B, C, H, W), F32)
    params = init_params(kp, C, out_channels, patch_size, mlp_ratio, S)

    fwd = jax.jit(partial(vit_block_forward,
                          patch_size=patch_size, num_heads=num_heads))
    y = jax.block_until_ready(fwd(x, params))

    y_ref = vit_block_reference(x, params,
                                patch_size=patch_size, num_heads=num_heads)

    assert y.shape == (T, B, out_channels, H // patch_size, W // patch_size)
    max_err = float(jnp.max(jnp.abs(y - y_ref.astype(F32))))
    assert max_err < 5e-3, f"max_err={max_err}"
    print("KERNEL_OK")
</pallas_src>

<mosaic_0001>
module attributes {stable_mosaic.version = 11 : i64} {
  func.func @_attn_kernel(%arg0: i32, %arg1: memref<8x16x8xbf16, #tpu.memory_space<vmem>>, %arg2: memref<8x16x8xbf16, #tpu.memory_space<vmem>>, %arg3: memref<8x16x8xbf16, #tpu.memory_space<vmem>>, %arg4: memref<8x16x8xbf16, #tpu.memory_space<vmem>>) attributes {dimension_semantics = [#tpu.dimension_semantics<parallel>], iteration_bounds = array<i64: 2>, scalar_prefetch = 0 : i64, scratch_operands = 0 : i64, tpu.core_type = #tpu.core_type<tc>, window_params = [{transform_indices = @transform_0, window_bounds = array<i64: 8, 16, 8>}, {transform_indices = @transform_1, window_bounds = array<i64: 8, 16, 8>}, {transform_indices = @transform_2, window_bounds = array<i64: 8, 16, 8>}, {transform_indices = @transform_3, window_bounds = array<i64: 8, 16, 8>}]} {
    %c0 = arith.constant 0 : index
    %c0_0 = arith.constant 0 : index
    %c0_1 = arith.constant 0 : index
    %0 = vector.load %arg1[%c0, %c0_0, %c0_1] : memref<8x16x8xbf16, #tpu.memory_space<vmem>>, vector<8x16x8xbf16>
    %c0_2 = arith.constant 0 : index
    %c0_3 = arith.constant 0 : index
    %c0_4 = arith.constant 0 : index
    %1 = vector.load %arg2[%c0_2, %c0_3, %c0_4] : memref<8x16x8xbf16, #tpu.memory_space<vmem>>, vector<8x16x8xbf16>
    "tpu.trace_start"() <{level = 10 : i32, message = "bqd,bkd->bqk"}> : () -> ()
    %cst = arith.constant dense<0.000000e+00> : vector<8x16x16xf32>
    %2 = tpu.matmul %0, %1, %cst {dimension_numbers = #tpu.dot_dimension_numbers<[2], [2], [1], [1], [0, 0, 0, 1, 1, 1], [0], [0]>} : vector<8x16x8xbf16>, vector<8x16x8xbf16>, vector<8x16x16xf32> -> vector<8x16x16xf32>
    "tpu.trace_stop"() : () -> ()
    %cst_5 = arith.constant dense<0xFF800000> : vector<8x16xf32>
    %3 = vector.multi_reduction <maximumf>, %2, %cst_5 [2] : vector<8x16x16xf32> to vector<8x16xf32>
    %4 = vector.shape_cast %3 : vector<8x16xf32> to vector<8x16x1xf32>
    %5 = vector.broadcast %4 : vector<8x16x1xf32> to vector<8x16x16xf32>
    %6 = arith.subf %2, %5 : vector<8x16x16xf32>
    %7 = math.exp %6 : vector<8x16x16xf32>
    %cst_6 = arith.constant dense<0.000000e+00> : vector<8x16xf32>
    %8 = vector.multi_reduction <add>, %7, %cst_6 [2] : vector<8x16x16xf32> to vector<8x16xf32>
    %9 = vector.shape_cast %8 : vector<8x16xf32> to vector<8x16x1xf32>
    %10 = vector.broadcast %9 : vector<8x16x1xf32> to vector<8x16x16xf32>
    %11 = arith.divf %7, %10 : vector<8x16x16xf32>
    %12 = arith.truncf %11 : vector<8x16x16xf32> to vector<8x16x16xbf16>
    %c0_7 = arith.constant 0 : index
    %c0_8 = arith.constant 0 : index
    %c0_9 = arith.constant 0 : index
    %13 = vector.load %arg3[%c0_7, %c0_8, %c0_9] : memref<8x16x8xbf16, #tpu.memory_space<vmem>>, vector<8x16x8xbf16>
    "tpu.trace_start"() <{level = 10 : i32, message = "bqk,bkd->bqd"}> : () -> ()
    %cst_10 = arith.constant dense<0.000000e+00> : vector<8x16x8xf32>
    %14 = tpu.matmul %12, %13, %cst_10 {dimension_numbers = #tpu.dot_dimension_numbers<[2], [1], [1], [2], [0, 0, 0, 1, 1, 2], [0], [0]>} : vector<8x16x16xbf16>, vector<8x16x8xbf16>, vector<8x16x8xf32> -> vector<8x16x8xf32>
    "tpu.trace_stop"() : () -> ()
    %15 = arith.truncf %14 : vector<8x16x8xf32> to vector<8x16x8xbf16>
    %c0_11 = arith.constant 0 : index
    %c0_12 = arith.constant 0 : index
    %c0_13 = arith.constant 0 : index
    %16 = vector.load %arg4[%c0_11, %c0_12, %c0_13] : memref<8x16x8xbf16, #tpu.memory_space<vmem>>, vector<8x16x8xbf16>
    tpu.vector_store %arg4[%c0_11, %c0_12, %c0_13], %15 {strides = array<i32>} : memref<8x16x8xbf16, #tpu.memory_space<vmem>>, vector<8x16x8xbf16>,
    return
  }
  func.func @transform_0(%arg0: i32) -> (i32, i32, i32) {
    %c0_i32 = arith.constant 0 : i32
    %c0_i32_0 = arith.constant 0 : i32
    %c0_i32_1 = arith.constant 0 : i32
    return %arg0, %c0_i32, %c0_i32_0 : i32, i32, i32
  }
  func.func @transform_1(%arg0: i32) -> (i32, i32, i32) {
    %c0_i32 = arith.constant 0 : i32
    %c0_i32_0 = arith.constant 0 : i32
    %c0_i32_1 = arith.constant 0 : i32
    return %arg0, %c0_i32, %c0_i32_0 : i32, i32, i32
  }
  func.func @transform_2(%arg0: i32) -> (i32, i32, i32) {
    %c0_i32 = arith.constant 0 : i32
    %c0_i32_0 = arith.constant 0 : i32
    %c0_i32_1 = arith.constant 0 : i32
    return %arg0, %c0_i32, %c0_i32_0 : i32, i32, i32
  }
  func.func @transform_3(%arg0: i32) -> (i32, i32, i32) {
    %c0_i32 = arith.constant 0 : i32
    %c0_i32_0 = arith.constant 0 : i32
    %c0_i32_1 = arith.constant 0 : i32
    return %arg0, %c0_i32, %c0_i32_0 : i32, i32, i32
  }
}

module attributes {stable_mosaic.version = 11 : i64} {
  func.func @_embed_qkv_kernel(%arg0: i32, %arg1: memref<32x64xf32, #tpu.memory_space<vmem>>, %arg2: memref<32x32xf32, #tpu.memory_space<vmem>>, %arg3: memref<64x32xbf16, #tpu.memory_space<vmem>>, %arg4: memref<1x32xf32, #tpu.memory_space<vmem>>, %arg5: memref<1x32xf32, #tpu.memory_space<vmem>>, %arg6: memref<1x32xf32, #tpu.memory_space<vmem>>, %arg7: memref<32x32xbf16, #tpu.memory_space<vmem>>, %arg8: memref<1x32xf32, #tpu.memory_space<vmem>>, %arg9: memref<32x32xbf16, #tpu.memory_space<vmem>>, %arg10: memref<1x32xf32, #tpu.memory_space<vmem>>, %arg11: memref<32x32xbf16, #tpu.memory_space<vmem>>, %arg12: memref<1x32xf32, #tpu.memory_space<vmem>>, %arg13: memref<32x32xf32, #tpu.memory_space<vmem>>, %arg14: memref<32x32xbf16, #tpu.memory_space<vmem>>, %arg15: memref<32x32xbf16, #tpu.memory_space<vmem>>, %arg16: memref<32x32xbf16, #tpu.memory_space<vmem>>) attributes {dimension_semantics = [#tpu.dimension_semantics<parallel>], iteration_bounds = array<i64: 2>, scalar_prefetch = 0 : i64, scratch_operands = 0 : i64, tpu.core_type = #tpu.core_type<tc>, window_params = [{transform_indices = @transform_0, window_bounds = array<i64: 32, 64>}, {pipeline_mode = #tpu.pipeline_mode<synchronous>, transform_indices = @transform_1, window_bounds = array<i64: 32, 32>}, {pipeline_mode = #tpu.pipeline_mode<synchronous>, transform_indices = @transform_2, window_bounds = array<i64: 64, 32>}, {pipeline_mode = #tpu.pipeline_mode<synchronous>, transform_indices = @transform_3, window_bounds = array<i64: 1, 32>}, {pipeline_mode = #tpu.pipeline_mode<synchronous>, transform_indices = @transform_4, window_bounds = array<i64: 1, 32>}, {pipeline_mode = #tpu.pipeline_mode<synchronous>, transform_indices = @transform_5, window_bounds = array<i64: 1, 32>}, {pipeline_mode = #tpu.pipeline_mode<synchronous>, transform_indices = @transform_6, window_bounds = array<i64: 32, 32>}, {pipeline_mode = #tpu.pipeline_mode<synchronous>, transform_indices = @transform_7, window_bounds = array<i64: 1, 32>}, {pipeline_mode = #tpu.pipeline_mode<synchronous>, transform_indices = @transform_8, window_bounds = array<i64: 32, 32>}, {pipeline_mode = #tpu.pipeline_mode<synchronous>, transform_indices = @transform_9, window_bounds = array<i64: 1, 32>}, {pipeline_mode = #tpu.pipeline_mode<synchronous>, transform_indices = @transform_10, window_bounds = array<i64: 32, 32>}, {pipeline_mode = #tpu.pipeline_mode<synchronous>, transform_indices = @transform_11, window_bounds = array<i64: 1, 32>}, {transform_indices = @transform_12, window_bounds = array<i64: 32, 32>}, {transform_indices = @transform_13, window_bounds = array<i64: 32, 32>}, {transform_indices = @transform_14, window_bounds = array<i64: 32, 32>}, {transform_indices = @transform_15, window_bounds = array<i64: 32, 32>}]} {
    %c0 = arith.constant 0 : index
    %c0_0 = arith.constant 0 : index
    %0 = vector.load %arg1[%c0, %c0_0] : memref<32x64xf32, #tpu.memory_space<vmem>>, vector<32x64xf32>
    %1 = arith.truncf %0 : vector<32x64xf32> to vector<32x64xbf16>
    %c0_1 = arith.constant 0 : index
    %c0_2 = arith.constant 0 : index
    %2 = vector.load %arg3[%c0_1, %c0_2] : memref<64x32xbf16, #tpu.memory_space<vmem>>, vector<64x32xbf16>
    %cst = arith.constant dense<0.000000e+00> : vector<32x32xf32>
    %3 = tpu.matmul %1, %2, %cst {dimension_numbers = #tpu.dot_dimension_numbers<[1], [0], [0], [1], [0, 0, 1, 1], [], []>} : vector<32x64xbf16>, vector<64x32xbf16>, vector<32x32xf32> -> vector<32x32xf32>
    %c0_3 = arith.constant 0 : index
    %c0_4 = arith.constant 0 : index
    %4 = vector.load %arg4[%c0_3, %c0_4] : memref<1x32xf32, #tpu.memory_space<vmem>>, vector<1x32xf32>
    %5 = vector.broadcast %4 : vector<1x32xf32> to vector<32x32xf32>
    %6 = arith.addf %3, %5 : vector<32x32xf32>
    %c0_5 = arith.constant 0 : index
    %c0_6 = arith.constant 0 : index
    %7 = vector.load %arg2[%c0_5, %c0_6] : memref<32x32xf32, #tpu.memory_space<vmem>>, vector<32x32xf32>
    %8 = arith.addf %6, %7 : vector<32x32xf32>
    %c0_7 = arith.constant 0 : index
    %c0_8 = arith.constant 0 : index
    %9 = vector.load %arg5[%c0_7, %c0_8] : memref<1x32xf32, #tpu.memory_space<vmem>>, vector<1x32xf32>
    %c0_9 = arith.constant 0 : index
    %c0_10 = arith.constant 0 : index
    %10 = vector.load %arg6[%c0_9, %c0_10] : memref<1x32xf32, #tpu.memory_space<vmem>>, vector<1x32xf32>
    %cst_11 = arith.constant dense<0.000000e+00> : vector<32xf32>
    %11 = vector.multi_reduction <add>, %8, %cst_11 [1] : vector<32x32xf32> to vector<32xf32>
    %12 = vector.shape_cast %11 : vector<32xf32> to vector<32x1xf32>
    %cst_12 = arith.constant 3.200000e+01 : f32
    %13 = vector.broadcast %cst_12 : f32 to vector<32x1xf32>
    %14 = arith.divf %12, %13 : vector<32x1xf32>
    %15 = vector.broadcast %14 : vector<32x1xf32> to vector<32x32xf32>
    %16 = arith.subf %8, %15 : vector<32x32xf32>
    %17 = arith.mulf %16, %16 : vector<32x32xf32>
    %cst_13 = arith.constant dense<0.000000e+00> : vector<32xf32>
    %18 = vector.multi_reduction <add>, %17, %cst_13 [1] : vector<32x32xf32> to vector<32xf32>
    %19 = vector.shape_cast %18 : vector<32xf32> to vector<32x1xf32>
    %cst_14 = arith.constant 3.200000e+01 : f32
    %20 = vector.broadcast %cst_14 : f32 to vector<32x1xf32>
    %21 = arith.divf %19, %20 : vector<32x1xf32>
    %22 = vector.broadcast %14 : vector<32x1xf32> to vector<32x32xf32>
    %23 = arith.subf %8, %22 : vector<32x32xf32>
    %cst_15 = arith.constant 9.99999974E-6 : f32
    %24 = vector.broadcast %cst_15 : f32 to vector<32x1xf32>
    %25 = arith.addf %21, %24 : vector<32x1xf32>
    %26 = math.rsqrt %25 : vector<32x1xf32>
    %27 = vector.broadcast %26 : vector<32x1xf32> to vector<32x32xf32>
    %28 = arith.mulf %23, %27 : vector<32x32xf32>
    %29 = vector.broadcast %9 : vector<1x32xf32> to vector<32x32xf32>
    %30 = arith.mulf %28, %29 : vector<32x32xf32>
    %31 = vector.broadcast %10 : vector<1x32xf32> to vector<32x32xf32>
    %32 = arith.addf %30, %31 : vector<32x32xf32>
    %c0_16 = arith.constant 0 : index
    %c0_17 = arith.constant 0 : index
    %33 = vector.load %arg13[%c0_16, %c0_17] : memref<32x32xf32, #tpu.memory_space<vmem>>, vector<32x32xf32>
    tpu.vector_store %arg13[%c0_16, %c0_17], %32 {strides = array<i32>} : memref<32x32xf32, #tpu.memory_space<vmem>>, vector<32x32xf32>,
    %34 = arith.truncf %32 : vector<32x32xf32> to vector<32x32xbf16>
    %c0_18 = arith.constant 0 : index
    %c0_19 = arith.constant 0 : index
    %35 = vector.load %arg7[%c0_18, %c0_19] : memref<32x32xbf16, #tpu.memory_space<vmem>>, vector<32x32xbf16>
    %cst_20 = arith.constant dense<0.000000e+00> : vector<32x32xf32>
    %36 = tpu.matmul %34, %35, %cst_20 {dimension_numbers = #tpu.dot_dimension_numbers<[1], [0], [0], [1], [0, 0, 1, 1], [], []>} : vector<32x32xbf16>, vector<32x32xbf16>, vector<32x32xf32> -> vector<32x32xf32>
    %c0_21 = arith.constant 0 : index
    %c0_22 = arith.constant 0 : index
    %37 = vector.load %arg8[%c0_21, %c0_22] : memref<1x32xf32, #tpu.memory_space<vmem>>, vector<1x32xf32>
    %38 = vector.broadcast %37 : vector<1x32xf32> to vector<32x32xf32>
    %39 = arith.addf %36, %38 : vector<32x32xf32>
    %40 = arith.truncf %39 : vector<32x32xf32> to vector<32x32xbf16>
    %c0_23 = arith.constant 0 : index
    %c0_24 = arith.constant 0 : index
    %41 = vector.load %arg14[%c0_23, %c0_24] : memref<32x32xbf16, #tpu.memory_space<vmem>>, vector<32x32xbf16>
    tpu.vector_store %arg14[%c0_23, %c0_24], %40 {strides = array<i32>} : memref<32x32xbf16, #tpu.memory_space<vmem>>, vector<32x32xbf16>,
    %c0_25 = arith.constant 0 : index
    %c0_26 = arith.constant 0 : index
    %42 = vector.load %arg9[%c0_25, %c0_26] : memref<32x32xbf16, #tpu.memory_space<vmem>>, vector<32x32xbf16>
    %cst_27 = arith.constant dense<0.000000e+00> : vector<32x32xf32>
    %43 = tpu.matmul %34, %42, %cst_27 {dimension_numbers = #tpu.dot_dimension_numbers<[1], [0], [0], [1], [0, 0, 1, 1], [], []>} : vector<32x32xbf16>, vector<32x32xbf16>, vector<32x32xf32> -> vector<32x32xf32>
    %c0_28 = arith.constant 0 : index
    %c0_29 = arith.constant 0 : index
    %44 = vector.load %arg10[%c0_28, %c0_29] : memref<1x32xf32, #tpu.memory_space<vmem>>, vector<1x32xf32>
    %45 = vector.broadcast %44 : vector<1x32xf32> to vector<32x32xf32>
    %46 = arith.addf %43, %45 : vector<32x32xf32>
    %47 = arith.truncf %46 : vector<32x32xf32> to vector<32x32xbf16>
    %c0_30 = arith.constant 0 : index
    %c0_31 = arith.constant 0 : index
    %48 = vector.load %arg15[%c0_30, %c0_31] : memref<32x32xbf16, #tpu.memory_space<vmem>>, vector<32x32xbf16>
    tpu.vector_store %arg15[%c0_30, %c0_31], %47 {strides = array<i32>} : memref<32x32xbf16, #tpu.memory_space<vmem>>, vector<32x32xbf16>,
    %c0_32 = arith.constant 0 : index
    %c0_33 = arith.constant 0 : index
    %49 = vector.load %arg11[%c0_32, %c0_33] : memref<32x32xbf16, #tpu.memory_space<vmem>>, vector<32x32xbf16>
    %cst_34 = arith.constant dense<0.000000e+00> : vector<32x32xf32>
    %50 = tpu.matmul %34, %49, %cst_34 {dimension_numbers = #tpu.dot_dimension_numbers<[1], [0], [0], [1], [0, 0, 1, 1], [], []>} : vector<32x32xbf16>, vector<32x32xbf16>, vector<32x32xf32> -> vector<32x32xf32>
    %c0_35 = arith.constant 0 : index
    %c0_36 = arith.constant 0 : index
    %51 = vector.load %arg12[%c0_35, %c0_36] : memref<1x32xf32, #tpu.memory_space<vmem>>, vector<1x32xf32>
    %52 = vector.broadcast %51 : vector<1x32xf32> to vector<32x32xf32>
    %53 = arith.addf %50, %52 : vector<32x32xf32>
    %54 = arith.truncf %53 : vector<32x32xf32> to vector<32x32xbf16>
    %c0_37 = arith.constant 0 : index
    %c0_38 = arith.constant 0 : index
    %55 = vector.load %arg16[%c0_37, %c0_38] : memref<32x32xbf16, #tpu.memory_space<vmem>>, vector<32x32xbf16>
    tpu.vector_store %arg16[%c0_37, %c0_38], %54 {strides = array<i32>} : memref<32x32xbf16, #tpu.memory_space<vmem>>, vector<32x32xbf16>,
    return
  }
  func.func @transform_0(%arg0: i32) -> (i32, i32) {
    %c0_i32 = arith.constant 0 : i32
    %c0_i32_0 = arith.constant 0 : i32
    return %arg0, %c0_i32 : i32, i32
  }
  func.func @transform_1(%arg0: i32) -> (i32, i32) {
    %c0_i32 = arith.constant 0 : i32
    %c0_i32_0 = arith.constant 0 : i32
    %c0_i32_1 = arith.constant 0 : i32
    return %c0_i32, %c0_i32_0 : i32, i32
  }
  func.func @transform_2(%arg0: i32) -> (i32, i32) {
    %c0_i32 = arith.constant 0 : i32
    %c0_i32_0 = arith.constant 0 : i32
    %c0_i32_1 = arith.constant 0 : i32
    return %c0_i32, %c0_i32_0 : i32, i32
  }
  func.func @transform_3(%arg0: i32) -> (i32, i32) {
    %c0_i32 = arith.constant 0 : i32
    %c0_i32_0 = arith.constant 0 : i32
    %c0_i32_1 = arith.constant 0 : i32
    return %c0_i32, %c0_i32_0 : i32, i32
  }
  func.func @transform_4(%arg0: i32) -> (i32, i32) {
    %c0_i32 = arith.constant 0 : i32
    %c0_i32_0 = arith.constant 0 : i32
    %c0_i32_1 = arith.constant 0 : i32
    return %c0_i32, %c0_i32_0 : i32, i32
  }
  func.func @transform_5(%arg0: i32) -> (i32, i32) {
    %c0_i32 = arith.constant 0 : i32
    %c0_i32_0 = arith.constant 0 : i32
    %c0_i32_1 = arith.constant 0 : i32
    return %c0_i32, %c0_i32_0 : i32, i32
  }
  func.func @transform_6(%arg0: i32) -> (i32, i32) {
    %c0_i32 = arith.constant 0 : i32
    %c0_i32_0 = arith.constant 0 : i32
    %c0_i32_1 = arith.constant 0 : i32
    return %c0_i32, %c0_i32_0 : i32, i32
  }
  func.func @transform_7(%arg0: i32) -> (i32, i32) {
    %c0_i32 = arith.constant 0 : i32
    %c0_i32_0 = arith.constant 0 : i32
    %c0_i32_1 = arith.constant 0 : i32
    return %c0_i32, %c0_i32_0 : i32, i32
  }
  func.func @transform_8(%arg0: i32) -> (i32, i32) {
    %c0_i32 = arith.constant 0 : i32
    %c0_i32_0 = arith.constant 0 : i32
    %c0_i32_1 = arith.constant 0 : i32
    return %c0_i32, %c0_i32_0 : i32, i32
  }
  func.func @transform_9(%arg0: i32) -> (i32, i32) {
    %c0_i32 = arith.constant 0 : i32
    %c0_i32_0 = arith.constant 0 : i32
    %c0_i32_1 = arith.constant 0 : i32
    return %c0_i32, %c0_i32_0 : i32, i32
  }
  func.func @transform_10(%arg0: i32) -> (i32, i32) {
    %c0_i32 = arith.constant 0 : i32
    %c0_i32_0 = arith.constant 0 : i32
    %c0_i32_1 = arith.constant 0 : i32
    return %c0_i32, %c0_i32_0 : i32, i32
  }
  func.func @transform_11(%arg0: i32) -> (i32, i32) {
    %c0_i32 = arith.constant 0 : i32
    %c0_i32_0 = arith.constant 0 : i32
    %c0_i32_1 = arith.constant 0 : i32
    return %c0_i32, %c0_i32_0 : i32, i32
  }
  func.func @transform_12(%arg0: i32) -> (i32, i32) {
    %c0_i32 = arith.constant 0 : i32
    %c0_i32_0 = arith.constant 0 : i32
    return %arg0, %c0_i32 : i32, i32
  }
  func.func @transform_13(%arg0: i32) -> (i32, i32) {
    %c0_i32 = arith.constant 0 : i32
    %c0_i32_0 = arith.constant 0 : i32
    return %arg0, %c0_i32 : i32, i32
  }
  func.func @transform_14(%arg0: i32) -> (i32, i32) {
    %c0_i32 = arith.constant 0 : i32
    %c0_i32_0 = arith.constant 0 : i32
    return %arg0, %c0_i32 : i32, i32
  }
  func.func @transform_15(%arg0: i32) -> (i32, i32) {
    %c0_i32 = arith.constant 0 : i32
    %c0_i32_0 = arith.constant 0 : i32
    return %arg0, %c0_i32 : i32, i32
  }
}

module attributes {stable_mosaic.version = 11 : i64} {
  func.func @_out_mlp_kernel(%arg0: i32, %arg1: memref<32x32xf32, #tpu.memory_space<vmem>>, %arg2: memref<32x32xbf16, #tpu.memory_space<vmem>>, %arg3: memref<32x32xbf16, #tpu.memory_space<vmem>>, %arg4: memref<1x32xf32, #tpu.memory_space<vmem>>, %arg5: memref<1x32xf32, #tpu.memory_space<vmem>>, %arg6: memref<1x32xf32, #tpu.memory_space<vmem>>, %arg7: memref<32x64xbf16, #tpu.memory_space<vmem>>, %arg8: memref<1x64xf32, #tpu.memory_space<vmem>>, %arg9: memref<64x32xbf16, #tpu.memory_space<vmem>>, %arg10: memref<1x32xf32, #tpu.memory_space<vmem>>, %arg11: memref<32x32xf32, #tpu.memory_space<vmem>>) attributes {dimension_semantics = [#tpu.dimension_semantics<parallel>], iteration_bounds = array<i64: 2>, scalar_prefetch = 0 : i64, scratch_operands = 0 : i64, tpu.core_type = #tpu.core_type<tc>, window_params = [{transform_indices = @transform_0, window_bounds = array<i64: 32, 32>}, {transform_indices = @transform_1, window_bounds = array<i64: 32, 32>}, {pipeline_mode = #tpu.pipeline_mode<synchronous>, transform_indices = @transform_2, window_bounds = array<i64: 32, 32>}, {pipeline_mode = #tpu.pipeline_mode<synchronous>, transform_indices = @transform_3, window_bounds = array<i64: 1, 32>}, {pipeline_mode = #tpu.pipeline_mode<synchronous>, transform_indices = @transform_4, window_bounds = array<i64: 1, 32>}, {pipeline_mode = #tpu.pipeline_mode<synchronous>, transform_indices = @transform_5, window_bounds = array<i64: 1, 32>}, {pipeline_mode = #tpu.pipeline_mode<synchronous>, transform_indices = @transform_6, window_bounds = array<i64: 32, 64>}, {pipeline_mode = #tpu.pipeline_mode<synchronous>, transform_indices = @transform_7, window_bounds = array<i64: 1, 64>}, {pipeline_mode = #tpu.pipeline_mode<synchronous>, transform_indices = @transform_8, window_bounds = array<i64: 64, 32>}, {pipeline_mode = #tpu.pipeline_mode<synchronous>, transform_indices = @transform_9, window_bounds = array<i64: 1, 32>}, {transform_indices = @transform_10, window_bounds = array<i64: 32, 32>}]} {
    %c0 = arith.constant 0 : index
    %c0_0 = arith.constant 0 : index
    %0 = vector.load %arg2[%c0, %c0_0] : memref<32x32xbf16, #tpu.memory_space<vmem>>, vector<32x32xbf16>
    %c0_1 = arith.constant 0 : index
    %c0_2 = arith.constant 0 : index
    %1 = vector.load %arg3[%c0_1, %c0_2] : memref<32x32xbf16, #tpu.memory_space<vmem>>, vector<32x32xbf16>
    %cst = arith.constant dense<0.000000e+00> : vector<32x32xf32>
    %2 = tpu.matmul %0, %1, %cst {dimension_numbers = #tpu.dot_dimension_numbers<[1], [0], [0], [1], [0, 0, 1, 1], [], []>} : vector<32x32xbf16>, vector<32x32xbf16>, vector<32x32xf32> -> vector<32x32xf32>
    %c0_3 = arith.constant 0 : index
    %c0_4 = arith.constant 0 : index
    %3 = vector.load %arg4[%c0_3, %c0_4] : memref<1x32xf32, #tpu.memory_space<vmem>>, vector<1x32xf32>
    %4 = vector.broadcast %3 : vector<1x32xf32> to vector<32x32xf32>
    %5 = arith.addf %2, %4 : vector<32x32xf32>
    %c0_5 = arith.constant 0 : index
    %c0_6 = arith.constant 0 : index
    %6 = vector.load %arg1[%c0_5, %c0_6] : memref<32x32xf32, #tpu.memory_space<vmem>>, vector<32x32xf32>
    %7 = arith.addf %6, %5 : vector<32x32xf32>
    %c0_7 = arith.constant 0 : index
    %c0_8 = arith.constant 0 : index
    %8 = vector.load %arg5[%c0_7, %c0_8] : memref<1x32xf32, #tpu.memory_space<vmem>>, vector<1x32xf32>
    %c0_9 = arith.constant 0 : index
    %c0_10 = arith.constant 0 : index
    %9 = vector.load %arg6[%c0_9, %c0_10] : memref<1x32xf32, #tpu.memory_space<vmem>>, vector<1x32xf32>
    %cst_11 = arith.constant dense<0.000000e+00> : vector<32xf32>
    %10 = vector.multi_reduction <add>, %7, %cst_11 [1] : vector<32x32xf32> to vector<32xf32>
    %11 = vector.shape_cast %10 : vector<32xf32> to vector<32x1xf32>
    %cst_12 = arith.constant 3.200000e+01 : f32
    %12 = vector.broadcast %cst_12 : f32 to vector<32x1xf32>
    %13 = arith.divf %11, %12 : vector<32x1xf32>
    %14 = vector.broadcast %13 : vector<32x1xf32> to vector<32x32xf32>
    %15 = arith.subf %7, %14 : vector<32x32xf32>
    %16 = arith.mulf %15, %15 : vector<32x32xf32>
    %cst_13 = arith.constant dense<0.000000e+00> : vector<32xf32>
    %17 = vector.multi_reduction <add>, %16, %cst_13 [1] : vector<32x32xf32> to vector<32xf32>
    %18 = vector.shape_cast %17 : vector<32xf32> to vector<32x1xf32>
    %cst_14 = arith.constant 3.200000e+01 : f32
    %19 = vector.broadcast %cst_14 : f32 to vector<32x1xf32>
    %20 = arith.divf %18, %19 : vector<32x1xf32>
    %21 = vector.broadcast %13 : vector<32x1xf32> to vector<32x32xf32>
    %22 = arith.subf %7, %21 : vector<32x32xf32>
    %cst_15 = arith.constant 9.99999974E-6 : f32
    %23 = vector.broadcast %cst_15 : f32 to vector<32x1xf32>
    %24 = arith.addf %20, %23 : vector<32x1xf32>
    %25 = math.rsqrt %24 : vector<32x1xf32>
    %26 = vector.broadcast %25 : vector<32x1xf32> to vector<32x32xf32>
    %27 = arith.mulf %22, %26 : vector<32x32xf32>
    %28 = vector.broadcast %8 : vector<1x32xf32> to vector<32x32xf32>
    %29 = arith.mulf %27, %28 : vector<32x32xf32>
    %30 = vector.broadcast %9 : vector<1x32xf32> to vector<32x32xf32>
    %31 = arith.addf %29, %30 : vector<32x32xf32>
    %32 = arith.truncf %31 : vector<32x32xf32> to vector<32x32xbf16>
    %cst_16 = arith.constant 0.000000e+00 : f32
    %33 = vector.broadcast %cst_16 : f32 to vector<32x32xf32>
    %c0_17 = arith.constant 0 : index
    %c0_18 = arith.constant 0 : index
    %34 = vector.load %arg7[%c0_17, %c0_18] : memref<32x64xbf16, #tpu.memory_space<vmem>>, vector<32x64xbf16>
    %cst_19 = arith.constant dense<0.000000e+00> : vector<32x64xf32>
    %35 = tpu.matmul %32, %34, %cst_19 {dimension_numbers = #tpu.dot_dimension_numbers<[1], [0], [0], [1], [0, 0, 1, 1], [], []>} : vector<32x32xbf16>, vector<32x64xbf16>, vector<32x64xf32> -> vector<32x64xf32>
    %c0_20 = arith.constant 0 : index
    %c0_21 = arith.constant 0 : index
    %36 = vector.load %arg8[%c0_20, %c0_21] : memref<1x64xf32, #tpu.memory_space<vmem>>, vector<1x64xf32>
    %37 = vector.broadcast %36 : vector<1x64xf32> to vector<32x64xf32>
    %38 = arith.addf %35, %37 : vector<32x64xf32>
    %cst_22 = arith.constant 1.000000e+00 : f32
    %39 = vector.broadcast %cst_22 : f32 to vector<32x64xf32>
    %40 = arith.cmpf oge, %38, %39 : vector<32x64xf32>
    %41 = arith.extui %40 : vector<32x64xi1> to vector<32x64xi32>
    %42 = arith.sitofp %41 : vector<32x64xi32> to vector<32x64xf32>
    %43 = arith.truncf %42 : vector<32x64xf32> to vector<32x64xbf16>
    %c0_23 = arith.constant 0 : index
    %c0_24 = arith.constant 0 : index
    %44 = vector.load %arg9[%c0_23, %c0_24] : memref<64x32xbf16, #tpu.memory_space<vmem>>, vector<64x32xbf16>
    %cst_25 = arith.constant dense<0.000000e+00> : vector<32x32xf32>
    %45 = tpu.matmul %43, %44, %cst_25 {dimension_numbers = #tpu.dot_dimension_numbers<[1], [0], [0], [1], [0, 0, 1, 1], [], []>} : vector<32x64xbf16>, vector<64x32xbf16>, vector<32x32xf32> -> vector<32x32xf32>
    %46 = arith.addf %33, %45 : vector<32x32xf32>
    %47 = arith.addf %31, %46 : vector<32x32xf32>
    %c0_26 = arith.constant 0 : index
    %c0_27 = arith.constant 0 : index
    %48 = vector.load %arg10[%c0_26, %c0_27] : memref<1x32xf32, #tpu.memory_space<vmem>>, vector<1x32xf32>
    %49 = vector.broadcast %48 : vector<1x32xf32> to vector<32x32xf32>
    %50 = arith.addf %47, %49 : vector<32x32xf32>
    %c0_28 = arith.constant 0 : index
    %c0_29 = arith.constant 0 : index
    %51 = vector.load %arg11[%c0_28, %c0_29] : memref<32x32xf32, #tpu.memory_space<vmem>>, vector<32x32xf32>
    tpu.vector_store %arg11[%c0_28, %c0_29], %50 {strides = array<i32>} : memref<32x32xf32, #tpu.memory_space<vmem>>, vector<32x32xf32>,
    return
  }
  func.func @transform_0(%arg0: i32) -> (i32, i32) {
    %c0_i32 = arith.constant 0 : i32
    %c0_i32_0 = arith.constant 0 : i32
    return %arg0, %c0_i32 : i32, i32
  }
  func.func @transform_1(%arg0: i32) -> (i32, i32) {
    %c0_i32 = arith.constant 0 : i32
    %c0_i32_0 = arith.constant 0 : i32
    return %arg0, %c0_i32 : i32, i32
  }
  func.func @transform_2(%arg0: i32) -> (i32, i32) {
    %c0_i32 = arith.constant 0 : i32
    %c0_i32_0 = arith.constant 0 : i32
    %c0_i32_1 = arith.constant 0 : i32
    return %c0_i32, %c0_i32_0 : i32, i32
  }
  func.func @transform_3(%arg0: i32) -> (i32, i32) {
    %c0_i32 = arith.constant 0 : i32
    %c0_i32_0 = arith.constant 0 : i32
    %c0_i32_1 = arith.constant 0 : i32
    return %c0_i32, %c0_i32_0 : i32, i32
  }
  func.func @transform_4(%arg0: i32) -> (i32, i32) {
    %c0_i32 = arith.constant 0 : i32
    %c0_i32_0 = arith.constant 0 : i32
    %c0_i32_1 = arith.constant 0 : i32
    return %c0_i32, %c0_i32_0 : i32, i32
  }
  func.func @transform_5(%arg0: i32) -> (i32, i32) {
    %c0_i32 = arith.constant 0 : i32
    %c0_i32_0 = arith.constant 0 : i32
    %c0_i32_1 = arith.constant 0 : i32
    return %c0_i32, %c0_i32_0 : i32, i32
  }
  func.func @transform_6(%arg0: i32) -> (i32, i32) {
    %c0_i32 = arith.constant 0 : i32
    %c0_i32_0 = arith.constant 0 : i32
    %c0_i32_1 = arith.constant 0 : i32
    return %c0_i32, %c0_i32_0 : i32, i32
  }
  func.func @transform_7(%arg0: i32) -> (i32, i32) {
    %c0_i32 = arith.constant 0 : i32
    %c0_i32_0 = arith.constant 0 : i32
    %c0_i32_1 = arith.constant 0 : i32
    return %c0_i32, %c0_i32_0 : i32, i32
  }
  func.func @transform_8(%arg0: i32) -> (i32, i32) {
    %c0_i32 = arith.constant 0 : i32
    %c0_i32_0 = arith.constant 0 : i32
    %c0_i32_1 = arith.constant 0 : i32
    return %c0_i32, %c0_i32_0 : i32, i32
  }
  func.func @transform_9(%arg0: i32) -> (i32, i32) {
    %c0_i32 = arith.constant 0 : i32
    %c0_i32_0 = arith.constant 0 : i32
    %c0_i32_1 = arith.constant 0 : i32
    return %c0_i32, %c0_i32_0 : i32, i32
  }
  func.func @transform_10(%arg0: i32) -> (i32, i32) {
    %c0_i32 = arith.constant 0 : i32
    %c0_i32_0 = arith.constant 0 : i32
    return %arg0, %c0_i32 : i32, i32
  }
}

</mosaic_0001>

<llo_original>
// kernel: vit_block_forward.3
$region0: #{vit_block_forward.3}
  #allocation0 [shape = 'u32[]', space=smem, size = 0x4, offset = 0x4, fixed_abs, tag = 'smem constant byte address 0x4 - core index']
  #allocation1 [shape = 'u32[144,128]{1,0:T(1,128)}', space=vmem, size = 0x12000, scoped, tag = 'internal scratch']
  %s0 = inlined_call_operand.vmem [shape: f32[64,64], index: 0, kind: input, shape index: {}]
  %s1 = inlined_call_operand.vmem [shape: f32[32,32], index: 1, kind: input, shape index: {}]
  %s2 = inlined_call_operand.vmem [shape: bf16[64,32], index: 2, kind: input, shape index: {}]
  %s3 = inlined_call_operand.vmem [shape: f32[1,32], index: 3, kind: input, shape index: {}]
  %s4 = inlined_call_operand.vmem [shape: f32[1,32], index: 4, kind: input, shape index: {}]
  %s5 = inlined_call_operand.vmem [shape: f32[1,32], index: 5, kind: input, shape index: {}]
  %s6 = inlined_call_operand.vmem [shape: bf16[32,32], index: 6, kind: input, shape index: {}]
  %s7 = inlined_call_operand.vmem [shape: f32[1,32], index: 7, kind: input, shape index: {}]
  %s8 = inlined_call_operand.vmem [shape: bf16[32,32], index: 8, kind: input, shape index: {}]
  %s9 = inlined_call_operand.vmem [shape: f32[1,32], index: 9, kind: input, shape index: {}]
  %s10 = inlined_call_operand.vmem [shape: bf16[32,32], index: 10, kind: input, shape index: {}]
  %s11 = inlined_call_operand.vmem [shape: f32[1,32], index: 11, kind: input, shape index: {}]
  %s12 = inlined_call_operand.vmem [shape: f32[64,32], index: 12, kind: output, shape index: {0}]
  %s13 = inlined_call_operand.vmem [shape: bf16[64,32], index: 13, kind: output, shape index: {1}]
  %s14 = inlined_call_operand.vmem [shape: bf16[64,32], index: 14, kind: output, shape index: {2}]
  %s15 = inlined_call_operand.vmem [shape: bf16[64,32], index: 15, kind: output, shape index: {3}]
  %16 = xla_tuple %s12, %s13, %s14, %s15
  %s17 = sld [smem:[#allocation0]]
  $region105: #{vit_block_forward.3} parent=0
    _
  %s19 = ssub.s32 1, %s17
  %s20 = scalar_select 0, %s19, %s17
  loop: start=0, step=1, limit=4
  $region2: #{vit_block_forward.3} parent=0 // loop_pre_header
    _
  $region3: #{vit_block_forward.3} parent=0 // loop_header
    %s22 = sphi 0, %s26
    %p23 = scmp.ge.s32.totalorder %s22, 4
    %s32 = sphi 0, %s34
    %s35 = sphi 0, %s32
    %s36 = sphi 0, %s35
    %s52 = sphi 0, %s36
    %s56 = sphi 0, %s56
    %s58 = sphi 0, %s56
    %s59 = sphi 0, %s58
    %s73 = sphi 0, %s59
    %s77 = sphi 0, %s77
    %s79 = sphi 0, %s77
    %s80 = sphi 0, %s79
    %s94 = sphi 0, %s80
    %s98 = sphi 0, %s98
    %s100 = sphi 0, %s98
    %s101 = sphi 0, %s100
    %s115 = sphi 0, %s101
    %s119 = sphi 0, %s119
    %s121 = sphi 0, %s119
    %s122 = sphi 0, %s121
    %s136 = sphi 0, %s122
    %s140 = sphi 0, %s140
    %s142 = sphi 0, %s140
    %s143 = sphi 0, %s142
    %s157 = sphi 0, %s143
    %s161 = sphi 0, %s161
    %s163 = sphi 0, %s161
    %s164 = sphi 0, %s163
    %s178 = sphi 0, %s164
    %s182 = sphi 0, %s182
    %s184 = sphi 0, %s182
    %s185 = sphi 0, %s184
    %s199 = sphi 0, %s185
    %s203 = sphi 0, %s203
    %s205 = sphi 0, %s203
    %s206 = sphi 0, %s205
    %s220 = sphi 0, %s206
    %s224 = sphi 0, %s224
    %s226 = sphi 0, %s224
    %s227 = sphi 0, %s226
    %s241 = sphi 0, %s227
    %s245 = sphi 0, %s245
    %s247 = sphi 0, %s245
    %s248 = sphi 0, %s247
    %s262 = sphi 0, %s248
    %s266 = sphi 0, %s266
    %s268 = sphi 0, %s266
    %s269 = sphi 0, %s268
    %s283 = sphi 0, %s269
    %s289 = sphi 0, %s291
    %s292 = sphi 0, %s289
    %s293 = sphi 0, %s292
    %s309 = sphi 0, %s293
    %s315 = sphi 0, %s317
    %s318 = sphi 0, %s315
    %s319 = sphi 0, %s318
    %s335 = sphi 0, %s319
    %s341 = sphi 0, %s343
    %s344 = sphi 0, %s341
    %s345 = sphi 0, %s344
    %s361 = sphi 0, %s345
    %s367 = sphi 0, %s369
    %s370 = sphi 0, %s367
    %s371 = sphi 0, %s370
    %s387 = sphi 0, %s371
  $region4: #{vit_block_forward.3} parent=0 // loop_header_branch
    %25 = sbr.rel (%p23) target = $region8
  $region5: #{vit_block_forward.3} parent=0 // loop_body
    %s27 = ssub.s32 %s22, 1
    %s28 = ssub.s32 %s22, 2
    %s29 = sadd.s32 %s22, 1
    %s30 = ssub.s32 %s22, %s29
    %p31 = scmp.eq.s32.totalorder %s30, 0
    %s33 = sadd.s32 %s32, 1
    %s34 = scalar_select %p31, %s32, %s33
    %p37 = pneg %p31
    %p38 = scmp.eq.s32.totalorder %s22, 1
    %p39 = por %p37, %p38
    %p40 = scmp.ne.s32.totalorder %s32, %s35
    %p41 = scmp.eq.s32.totalorder %s22, 0
    %p42 = por %p40, %p41
    %p43 = scmp.ne.s32.totalorder %s32, %s35
    %p44 = scmp.eq.s32.totalorder %s27, 1
    %p45 = por %p43, %p44
    %p46 = scmp.ne.s32.totalorder %s35, %s36
    %p47 = scmp.eq.s32.totalorder %s27, 0
    %p48 = por %p46, %p47
    %p49 = scmp.ne.s32.totalorder %s35, %s36
    %p50 = scmp.eq.s32.totalorder %s28, 1
    %p51 = por %p49, %p50
    %p53 = scmp.ne.s32.totalorder %s36, %s52
    %p54 = scmp.eq.s32.totalorder %s28, 0
    %p55 = por %p53, %p54
    %s57 = sadd.s32 %s56, 1
    %p60 = scmp.eq.s32.totalorder %s22, 1
    %p61 = scmp.ne.s32.totalorder %s56, %s58
    %p62 = scmp.eq.s32.totalorder %s22, 0
    %p63 = por %p61, %p62
    %p64 = scmp.ne.s32.totalorder %s56, %s58
    %p65 = scmp.eq.s32.totalorder %s27, 1
    %p66 = por %p64, %p65
    %p67 = scmp.ne.s32.totalorder %s58, %s59
    %p68 = scmp.eq.s32.totalorder %s27, 0
    %p69 = por %p67, %p68
    %p70 = scmp.ne.s32.totalorder %s58, %s59
    %p71 = scmp.eq.s32.totalorder %s28, 1
    %p72 = por %p70, %p71
    %p74 = scmp.ne.s32.totalorder %s59, %s73
    %p75 = scmp.eq.s32.totalorder %s28, 0
    %p76 = por %p74, %p75
    %s78 = sadd.s32 %s77, 1
    %p81 = scmp.eq.s32.totalorder %s22, 1
    %p82 = scmp.ne.s32.totalorder %s77, %s79
    %p83 = scmp.eq.s32.totalorder %s22, 0
    %p84 = por %p82, %p83
    %p85 = scmp.ne.s32.totalorder %s77, %s79
    %p86 = scmp.eq.s32.totalorder %s27, 1
    %p87 = por %p85, %p86
    %p88 = scmp.ne.s32.totalorder %s79, %s80
    %p89 = scmp.eq.s32.totalorder %s27, 0
    %p90 = por %p88, %p89
    %p91 = scmp.ne.s32.totalorder %s79, %s80
    %p92 = scmp.eq.s32.totalorder %s28, 1
    %p93 = por %p91, %p92
    %p95 = scmp.ne.s32.totalorder %s80, %s94
    %p96 = scmp.eq.s32.totalorder %s28, 0
    %p97 = por %p95, %p96
    %s99 = sadd.s32 %s98, 1
    %p102 = scmp.eq.s32.totalorder %s22, 1
    %p103 = scmp.ne.s32.totalorder %s98, %s100
    %p104 = scmp.eq.s32.totalorder %s22, 0
    %p105 = por %p103, %p104
    %p106 = scmp.ne.s32.totalorder %s98, %s100
    %p107 = scmp.eq.s32.totalorder %s27, 1
    %p108 = por %p106, %p107
    %p109 = scmp.ne.s32.totalorder %s100, %s101
    %p110 = scmp.eq.s32.totalorder %s27, 0
    %p111 = por %p109, %p110
    %p112 = scmp.ne.s32.totalorder %s100, %s101
    %p113 = scmp.eq.s32.totalorder %s28, 1
    %p114 = por %p112, %p113
    %p116 = scmp.ne.s32.totalorder %s101, %s115
    %p117 = scmp.eq.s32.totalorder %s28, 0
    %p118 = por %p116, %p117
    %s120 = sadd.s32 %s119, 1
    %p123 = scmp.eq.s32.totalorder %s22, 1
    %p124 = scmp.ne.s32.totalorder %s119, %s121
    %p125 = scmp.eq.s32.totalorder %s22, 0
    %p126 = por %p124, %p125
    %p127 = scmp.ne.s32.totalorder %s119, %s121
    %p128 = scmp.eq.s32.totalorder %s27, 1
    %p129 = por %p127, %p128
    %p130 = scmp.ne.s32.totalorder %s121, %s122
    %p131 = scmp.eq.s32.totalorder %s27, 0
    %p132 = por %p130, %p131
    %p133 = scmp.ne.s32.totalorder %s121, %s122
    %p134 = scmp.eq.s32.totalorder %s28, 1
    %p135 = por %p133, %p134
    %p137 = scmp.ne.s32.totalorder %s122, %s136
    %p138 = scmp.eq.s32.totalorder %s28, 0
    %p139 = por %p137, %p138
    %s141 = sadd.s32 %s140, 1
    %p144 = scmp.eq.s32.totalorder %s22, 1
    %p145 = scmp.ne.s32.totalorder %s140, %s142
    %p146 = scmp.eq.s32.totalorder %s22, 0
    %p147 = por %p145, %p146
    %p148 = scmp.ne.s32.totalorder %s140, %s142
    %p149 = scmp.eq.s32.totalorder %s27, 1
    %p150 = por %p148, %p149
    %p151 = scmp.ne.s32.totalorder %s142, %s143
    %p152 = scmp.eq.s32.totalorder %s27, 0
    %p153 = por %p151, %p152
    %p154 = scmp.ne.s32.totalorder %s142, %s143
    %p155 = scmp.eq.s32.totalorder %s28, 1
    %p156 = por %p154, %p155
    %p158 = scmp.ne.s32.totalorder %s143, %s157
    %p159 = scmp.eq.s32.totalorder %s28, 0
    %p160 = por %p158, %p159
    %s162 = sadd.s32 %s161, 1
    %p165 = scmp.eq.s32.totalorder %s22, 1
    %p166 = scmp.ne.s32.totalorder %s161, %s163
    %p167 = scmp.eq.s32.totalorder %s22, 0
    %p168 = por %p166, %p167
    %p169 = scmp.ne.s32.totalorder %s161, %s163
    %p170 = scmp.eq.s32.totalorder %s27, 1
    %p171 = por %p169, %p170
    %p172 = scmp.ne.s32.totalorder %s163, %s164
    %p173 = scmp.eq.s32.totalorder %s27, 0
    %p174 = por %p172, %p173
    %p175 = scmp.ne.s32.totalorder %s163, %s164
    %p176 = scmp.eq.s32.totalorder %s28, 1
    %p177 = por %p175, %p176
    %p179 = scmp.ne.s32.totalorder %s164, %s178
    %p180 = scmp.eq.s32.totalorder %s28, 0
    %p181 = por %p179, %p180
    %s183 = sadd.s32 %s182, 1
    %p186 = scmp.eq.s32.totalorder %s22, 1
    %p187 = scmp.ne.s32.totalorder %s182, %s184
    %p188 = scmp.eq.s32.totalorder %s22, 0
    %p189 = por %p187, %p188
    %p190 = scmp.ne.s32.totalorder %s182, %s184
    %p191 = scmp.eq.s32.totalorder %s27, 1
    %p192 = por %p190, %p191
    %p193 = scmp.ne.s32.totalorder %s184, %s185
    %p194 = scmp.eq.s32.totalorder %s27, 0
    %p195 = por %p193, %p194
    %p196 = scmp.ne.s32.totalorder %s184, %s185
    %p197 = scmp.eq.s32.totalorder %s28, 1
    %p198 = por %p196, %p197
    %p200 = scmp.ne.s32.totalorder %s185, %s199
    %p201 = scmp.eq.s32.totalorder %s28, 0
    %p202 = por %p200, %p201
    %s204 = sadd.s32 %s203, 1
    %p207 = scmp.eq.s32.totalorder %s22, 1
    %p208 = scmp.ne.s32.totalorder %s203, %s205
    %p209 = scmp.eq.s32.totalorder %s22, 0
    %p210 = por %p208, %p209
    %p211 = scmp.ne.s32.totalorder %s203, %s205
    %p212 = scmp.eq.s32.totalorder %s27, 1
    %p213 = por %p211, %p212
    %p214 = scmp.ne.s32.totalorder %s205, %s206
    %p215 = scmp.eq.s32.totalorder %s27, 0
    %p216 = por %p214, %p215
    %p217 = scmp.ne.s32.totalorder %s205, %s206
    %p218 = scmp.eq.s32.totalorder %s28, 1
    %p219 = por %p217, %p218
    %p221 = scmp.ne.s32.totalorder %s206, %s220
    %p222 = scmp.eq.s32.totalorder %s28, 0
    %p223 = por %p221, %p222
    %s225 = sadd.s32 %s224, 1
    %p228 = scmp.eq.s32.totalorder %s22, 1
    %p229 = scmp.ne.s32.totalorder %s224, %s226
    %p230 = scmp.eq.s32.totalorder %s22, 0
    %p231 = por %p229, %p230
    %p232 = scmp.ne.s32.totalorder %s224, %s226
    %p233 = scmp.eq.s32.totalorder %s27, 1
    %p234 = por %p232, %p233
    %p235 = scmp.ne.s32.totalorder %s226, %s227
    %p236 = scmp.eq.s32.totalorder %s27, 0
    %p237 = por %p235, %p236
    %p238 = scmp.ne.s32.totalorder %s226, %s227
    %p239 = scmp.eq.s32.totalorder %s28, 1
    %p240 = por %p238, %p239
    %p242 = scmp.ne.s32.totalorder %s227, %s241
    %p243 = scmp.eq.s32.totalorder %s28, 0
    %p244 = por %p242, %p243
    %s246 = sadd.s32 %s245, 1
    %p249 = scmp.eq.s32.totalorder %s22, 1
    %p250 = scmp.ne.s32.totalorder %s245, %s247
    %p251 = scmp.eq.s32.totalorder %s22, 0
    %p252 = por %p250, %p251
    %p253 = scmp.ne.s32.totalorder %s245, %s247
    %p254 = scmp.eq.s32.totalorder %s27, 1
    %p255 = por %p253, %p254
    %p256 = scmp.ne.s32.totalorder %s247, %s248
    %p257 = scmp.eq.s32.totalorder %s27, 0
    %p258 = por %p256, %p257
    %p259 = scmp.ne.s32.totalorder %s247, %s248
    %p260 = scmp.eq.s32.totalorder %s28, 1
    %p261 = por %p259, %p260
    %p263 = scmp.ne.s32.totalorder %s248, %s262
    %p264 = scmp.eq.s32.totalorder %s28, 0
    %p265 = por %p263, %p264
    %s267 = sadd.s32 %s266, 1
    %p270 = scmp.eq.s32.totalorder %s22, 1
    %p271 = scmp.ne.s32.totalorder %s266, %s268
    %p272 = scmp.eq.s32.totalorder %s22, 0
    %p273 = por %p271, %p272
    %p274 = scmp.ne.s32.totalorder %s266, %s268
    %p275 = scmp.eq.s32.totalorder %s27, 1
    %p276 = por %p274, %p275
    %p277 = scmp.ne.s32.totalorder %s268, %s269
    %p278 = scmp.eq.s32.totalorder %s27, 0
    %p279 = por %p277, %p278
    %p280 = scmp.ne.s32.totalorder %s268, %s269
    %p281 = scmp.eq.s32.totalorder %s28, 1
    %p282 = por %p280, %p281
    %p284 = scmp.ne.s32.totalorder %s269, %s283
    %p285 = scmp.eq.s32.totalorder %s28, 0
    %p286 = por %p284, %p285
    %s287 = ssub.s32 %s22, %s29
    %p288 = scmp.eq.s32.totalorder %s287, 0
    %s290 = sadd.s32 %s289, 1
    %s291 = scalar_select %p288, %s289, %s290
    %p294 = pneg %p288
    %p295 = scmp.eq.s32.totalorder %s22, 1
    %p296 = por %p294, %p295
    %p297 = scmp.ne.s32.totalorder %s289, %s292
    %p298 = scmp.eq.s32.totalorder %s22, 0
    %p299 = por %p297, %p298
    %p300 = scmp.ne.s32.totalorder %s289, %s292
    %p301 = scmp.eq.s32.totalorder %s27, 1
    %p302 = por %p300, %p301
    %p303 = scmp.ne.s32.totalorder %s292, %s293
    %p304 = scmp.eq.s32.totalorder %s27, 0
    %p305 = por %p303, %p304
    %p306 = scmp.ne.s32.totalorder %s292, %s293
    %p307 = scmp.eq.s32.totalorder %s28, 1
    %p308 = por %p306, %p307
    %p310 = scmp.ne.s32.totalorder %s293, %s309
    %p311 = scmp.eq.s32.totalorder %s28, 0
    %p312 = por %p310, %p311
    %s313 = ssub.s32 %s22, %s29
    %p314 = scmp.eq.s32.totalorder %s313, 0
    %s316 = sadd.s32 %s315, 1
    %s317 = scalar_select %p314, %s315, %s316
    %p320 = pneg %p314
    %p321 = scmp.eq.s32.totalorder %s22, 1
    %p322 = por %p320, %p321
    %p323 = scmp.ne.s32.totalorder %s315, %s318
    %p324 = scmp.eq.s32.totalorder %s22, 0
    %p325 = por %p323, %p324
    %p326 = scmp.ne.s32.totalorder %s315, %s318
    %p327 = scmp.eq.s32.totalorder %s27, 1
    %p328 = por %p326, %p327
    %p329 = scmp.ne.s32.totalorder %s318, %s319
    %p330 = scmp.eq.s32.totalorder %s27, 0
    %p331 = por %p329, %p330
    %p332 = scmp.ne.s32.totalorder %s318, %s319
    %p333 = scmp.eq.s32.totalorder %s28, 1
    %p334 = por %p332, %p333
    %p336 = scmp.ne.s32.totalorder %s319, %s335
    %p337 = scmp.eq.s32.totalorder %s28, 0
    %p338 = por %p336, %p337
    %s339 = ssub.s32 %s22, %s29
    %p340 = scmp.eq.s32.totalorder %s339, 0
    %s342 = sadd.s32 %s341, 1
    %s343 = scalar_select %p340, %s341, %s342
    %p346 = pneg %p340
    %p347 = scmp.eq.s32.totalorder %s22, 1
    %p348 = por %p346, %p347
    %p349 = scmp.ne.s32.totalorder %s341, %s344
    %p350 = scmp.eq.s32.totalorder %s22, 0
    %p351 = por %p349, %p350
    %p352 = scmp.ne.s32.totalorder %s341, %s344
    %p353 = scmp.eq.s32.totalorder %s27, 1
    %p354 = por %p352, %p353
    %p355 = scmp.ne.s32.totalorder %s344, %s345
    %p356 = scmp.eq.s32.totalorder %s27, 0
    %p357 = por %p355, %p356
    %p358 = scmp.ne.s32.totalorder %s344, %s345
    %p359 = scmp.eq.s32.totalorder %s28, 1
    %p360 = por %p358, %p359
    %p362 = scmp.ne.s32.totalorder %s345, %s361
    %p363 = scmp.eq.s32.totalorder %s28, 0
    %p364 = por %p362, %p363
    %s365 = ssub.s32 %s22, %s29
    %p366 = scmp.eq.s32.totalorder %s365, 0
    %s368 = sadd.s32 %s367, 1
    %s369 = scalar_select %p366, %s367, %s368
    %p372 = pneg %p366
    %p373 = scmp.eq.s32.totalorder %s22, 1
    %p374 = por %p372, %p373
    %p375 = scmp.ne.s32.totalorder %s367, %s370
    %p376 = scmp.eq.s32.totalorder %s22, 0
    %p377 = por %p375, %p376
    %p378 = scmp.ne.s32.totalorder %s367, %s370
    %p379 = scmp.eq.s32.totalorder %s27, 1
    %p380 = por %p378, %p379
    %p381 = scmp.ne.s32.totalorder %s370, %s371
    %p382 = scmp.eq.s32.totalorder %s27, 0
    %p383 = por %p381, %p382
    %p384 = scmp.ne.s32.totalorder %s370, %s371
    %p385 = scmp.eq.s32.totalorder %s28, 1
    %p386 = por %p384, %p385
    %p388 = scmp.ne.s32.totalorder %s371, %s387
    %p389 = scmp.eq.s32.totalorder %s28, 0
    %p390 = por %p388, %p389
    %p391 = scmp.le.s32.totalorder 1, %s22
    %p392 = scmp.lt.s32.totalorder %s22, 3
    %p393 = pnand %p391, %p392
    %p394 = pneg %p393
    // Predicated region
    $region9: #{vit_block_forward.3} parent=5 // pred_check
      _
    $region10: #{vit_block_forward.3} parent=5 // pred_check_branch
      %396 = sbr.rel (%p393) target = $region12
    $region11: #{vit_block_forward.3} parent=5 // pred_region
      %s397 = ssub.s32 %s22, 1
      // Predicated region
      $region13: #{vit_block_forward.3} parent=11 // pred_check
        %p398 = pneg %p69
      $region14: #{vit_block_forward.3} parent=11 // pred_check_branch
        %400 = sbr.rel (%p398) target = $region16
      $region15: #{vit_block_forward.3} parent=11 // pred_region
        _
      $region16: #{vit_block_forward.3} parent=11 // pred_fallthru
        _
      // Predicated region
      $region17: #{vit_block_forward.3} parent=11 // pred_check
        %p401 = pneg %p90
      $region18: #{vit_block_forward.3} parent=11 // pred_check_branch
        %403 = sbr.rel (%p401) target = $region20
      $region19: #{vit_block_forward.3} parent=11 // pred_region
        _
      $region20: #{vit_block_forward.3} parent=11 // pred_fallthru
        _
      // Predicated region
      $region21: #{vit_block_forward.3} parent=11 // pred_check
        %p404 = pneg %p111
      $region22: #{vit_block_forward.3} parent=11 // pred_check_branch
        %406 = sbr.rel (%p404) target = $region24
      $region23: #{vit_block_forward.3} parent=11 // pred_region
        _
      $region24: #{vit_block_forward.3} parent=11 // pred_fallthru
        _
      // Predicated region
      $region25: #{vit_block_forward.3} parent=11 // pred_check
        %p407 = pneg %p132
      $region26: #{vit_block_forward.3} parent=11 // pred_check_branch
        %409 = sbr.rel (%p407) target = $region28
      $region27: #{vit_block_forward.3} parent=11 // pred_region
        _
      $region28: #{vit_block_forward.3} parent=11 // pred_fallthru
        _
      // Predicated region
      $region29: #{vit_block_forward.3} parent=11 // pred_check
        %p410 = pneg %p153
      $region30: #{vit_block_forward.3} parent=11 // pred_check_branch
        %412 = sbr.rel (%p410) target = $region32
      $region31: #{vit_block_forward.3} parent=11 // pred_region
        _
      $region32: #{vit_block_forward.3} parent=11 // pred_fallthru
        _
      // Predicated region
      $region33: #{vit_block_forward.3} parent=11 // pred_check
        %p413 = pneg %p174
      $region34: #{vit_block_forward.3} parent=11 // pred_check_branch
        %415 = sbr.rel (%p413) target = $region36
      $region35: #{vit_block_forward.3} parent=11 // pred_region
        _
      $region36: #{vit_block_forward.3} parent=11 // pred_fallthru
        _
      // Predicated region
      $region37: #{vit_block_forward.3} parent=11 // pred_check
        %p416 = pneg %p195
      $region38: #{vit_block_forward.3} parent=11 // pred_check_branch
        %418 = sbr.rel (%p416) target = $region40
      $region39: #{vit_block_forward.3} parent=11 // pred_region
        _
      $region40: #{vit_block_forward.3} parent=11 // pred_fallthru
        _
      // Predicated region
      $region41: #{vit_block_forward.3} parent=11 // pred_check
        %p419 = pneg %p216
      $region42: #{vit_block_forward.3} parent=11 // pred_check_branch
        %421 = sbr.rel (%p419) target = $region44
      $region43: #{vit_block_forward.3} parent=11 // pred_region
        _
      $region44: #{vit_block_forward.3} parent=11 // pred_fallthru
        _
      // Predicated region
      $region45: #{vit_block_forward.3} parent=11 // pred_check
        %p422 = pneg %p237
      $region46: #{vit_block_forward.3} parent=11 // pred_check_branch
        %424 = sbr.rel (%p422) target = $region48
      $region47: #{vit_block_forward.3} parent=11 // pred_region
        _
      $region48: #{vit_block_forward.3} parent=11 // pred_fallthru
        _
      // Predicated region
      $region49: #{vit_block_forward.3} parent=11 // pred_check
        %p425 = pneg %p258
      $region50: #{vit_block_forward.3} parent=11 // pred_check_branch
        %427 = sbr.rel (%p425) target = $region52
      $region51: #{vit_block_forward.3} parent=11 // pred_region
        _
      $region52: #{vit_block_forward.3} parent=11 // pred_fallthru
        _
      // Predicated region
      $region53: #{vit_block_forward.3} parent=11 // pred_check
        %p428 = pneg %p279
      $region54: #{vit_block_forward.3} parent=11 // pred_check_branch
        %430 = sbr.rel (%p428) target = $region56
      $region55: #{vit_block_forward.3} parent=11 // pred_region
        _
      $region56: #{vit_block_forward.3} parent=11 // pred_fallthru
        _
    $region12: #{vit_block_forward.3} parent=5 // pred_fallthru
      _
    %p431 = scmp.lt.s32.totalorder %s22, 2
    // Predicated region
    $region57: #{vit_block_forward.3} parent=5 // pred_check
      %p432 = pneg %p431
    $region58: #{vit_block_forward.3} parent=5 // pred_check_branch
      %434 = sbr.rel (%p432) target = $region60
    $region59: #{vit_block_forward.3} parent=5 // pred_region
      // Predicated region
      $region61: #{vit_block_forward.3} parent=59 // pred_check
        %p435 = pneg %p42
      $region62: #{vit_block_forward.3} parent=59 // pred_check_branch
        %437 = sbr.rel (%p435) target = $region64
      $region63: #{vit_block_forward.3} parent=59 // pred_region
        %s438 = smul.u32 4, %s22
        %p439 = scmp.lt.s32.totalorder %s438, 7
        %s440 = scalar_select %p439, %s438, 7
        %s441 = smul.addr %s440, 8
        %s442 = scalar_lea.vmem %s0, %s441
        %s443 = smul.u32 4, %s22
      $region64: #{vit_block_forward.3} parent=59 // pred_fallthru
        _
    $region60: #{vit_block_forward.3} parent=5 // pred_fallthru
      _
    %p444 = scmp.le.s32.totalorder 1, %s22
    %p445 = scmp.lt.s32.totalorder %s22, 3
    %p446 = pnand %p444, %p445
    %p447 = pneg %p446
    // Predicated region
    $region65: #{vit_block_forward.3} parent=5 // pred_check
      _
    $region66: #{vit_block_forward.3} parent=5 // pred_check_branch
      %449 = sbr.rel (%p446) target = $region68
    $region67: #{vit_block_forward.3} parent=5 // pred_region
      %s450 = ssub.s32 %s22, 1
      %s451 = smul.u32 4, %s27
      %p452 = scmp.lt.s32.totalorder %s451, 7
      %s453 = scalar_select %p452, %s451, 7
      %s454 = smul.addr %s453, 8
      %s455 = scalar_lea.vmem %s0, %s454
      %p456 = pneg %p48
      %p457 = pneg %p45
      %p458 = pneg %p69
      %p459 = pneg %p66
      %p460 = pneg %p90
      %p461 = pneg %p87
      %p462 = pneg %p111
      %p463 = pneg %p108
      %p464 = pneg %p132
      %p465 = pneg %p129
      %p466 = pneg %p153
      %p467 = pneg %p150
      %p468 = pneg %p174
      %p469 = pneg %p171
      %p470 = pneg %p195
      %p471 = pneg %p192
      %p472 = pneg %p216
      %p473 = pneg %p213
      %p474 = pneg %p237
      %p475 = pneg %p234
      %p476 = pneg %p258
      %p477 = pneg %p255
      %p478 = pneg %p279
      %p479 = pneg %p276
      %p480 = pneg %p305
      %p481 = pneg %p302
      %s482 = smul.u32 4, %s27
      %p483 = scmp.lt.s32.totalorder %s482, 7
      %s484 = scalar_select %p483, %s482, 7
      %s485 = smul.addr %s484, 8
      %s486 = scalar_lea.vmem %s12, %s485
      %p487 = pneg %p331
      %p488 = pneg %p328
      %s489 = smul.u32 4, %s27
      %p490 = scmp.lt.s32.totalorder %s489, 7
      %s491 = scalar_select %p490, %s489, 7
      %s492 = smul.addr %s491, 4
      %s493 = scalar_lea.vmem %s13, %s492
      %p494 = pneg %p357
      %p495 = pneg %p354
      %s496 = smul.u32 4, %s27
      %p497 = scmp.lt.s32.totalorder %s496, 7
      %s498 = scalar_select %p497, %s496, 7
      %s499 = smul.addr %s498, 4
      %s500 = scalar_lea.vmem %s14, %s499
      %p501 = pneg %p383
      %p502 = pneg %p380
      %s503 = smul.u32 4, %s27
      %p504 = scmp.lt.s32.totalorder %s503, 7
      %s505 = scalar_select %p504, %s503, 7
      %s506 = smul.addr %s505, 4
      %s507 = scalar_lea.vmem %s15, %s506
      %s508 = smul.u32 4, %s27
      %p509 = scmp.lt.s32.totalorder %s508, 7
      %s510 = scalar_select %p509, %s508, 7
      %s511 = smul.addr %s510, 8
      %s512 = scalar_lea.vmem %s0, %s511
      %s513 = smul.u32 4, %s27
      %s514 = smul.u32 4, %s27
      %p515 = scmp.lt.s32.totalorder %s514, 7
      %s516 = scalar_select %p515, %s514, 7
      %s517 = smul.addr %s516, 8
      %s518 = scalar_lea.vmem %s12, %s517
      %s519 = smul.u32 4, %s27
      %s520 = smul.u32 4, %s27
      %p521 = scmp.lt.s32.totalorder %s520, 7
      %s522 = scalar_select %p521, %s520, 7
      %s523 = smul.addr %s522, 4
      %s524 = scalar_lea.vmem %s13, %s523
      %s525 = smul.u32 4, %s27
      %s526 = smul.u32 4, %s27
      %p527 = scmp.lt.s32.totalorder %s526, 7
      %s528 = scalar_select %p527, %s526, 7
      %s529 = smul.addr %s528, 4
      %s530 = scalar_lea.vmem %s14, %s529
      %s531 = smul.u32 4, %s27
      %s532 = smul.u32 4, %s27
      %p533 = scmp.lt.s32.totalorder %s532, 7
      %s534 = scalar_select %p533, %s532, 7
      %s535 = smul.addr %s534, 4
      %s536 = scalar_lea.vmem %s15, %s535
      %s537 = smul.u32 4, %s27
      %v539 = vld [vmem:[%s512] sm:$0xff]
      %v540 = vld [vmem:[%s512 + $0x8] sm:$0xff]
      %v541 = vld [vmem:[%s512 + $0x10] sm:$0xff]
      %v542 = vld [vmem:[%s512 + $0x18] sm:$0xff]
      %v543 = vpack.c.bf16 %v540, %v539
      %v544 = vpack.c.bf16 %v542, %v541
      %v545 = vld [vmem:[%s2] sm:$0xf]
      %v546 = vld [vmem:[%s2 + $0x4] sm:$0xf]
      %v547 = vld [vmem:[%s2 + $0x8] sm:$0xf]
      %v548 = vld [vmem:[%s2 + $0xc] sm:$0xf]
      %v549 = vld [vmem:[%s2 + $0x10] sm:$0xf]
      %v550 = vld [vmem:[%s2 + $0x14] sm:$0xf]
      %v551 = vld [vmem:[%s2 + $0x18] sm:$0xf]
      %v552 = vld [vmem:[%s2 + $0x1c] sm:$0xf]
      %v553 = vld [vmem:[%s3] sm:$0x1]
      %v555 = vlaneseq
      %v556 = vshrl.u32 %v555, 7
      %v557 = vsub.s32 0, %v556
      %v558 = vrot.slane %v553, %v557
      %v568 = vunpack.c.l.b16 %v545
      %v569 = vunpack.c.l.b16 %v546
      %v570 = vunpack.c.l.b16 %v547
      %v571 = vunpack.c.l.b16 %v548
      %v572 = vunpack.c.l.b16 %v549
      %v573 = vunpack.c.l.b16 %v550
      %v574 = vunpack.c.l.b16 %v551
      %v575 = vunpack.c.l.b16 %v552
      %v576 = vpack.c.b16 %v569, %v568
      %v577 = vpack.c.b16 %v571, %v570
      %v578 = vpack.c.b16 %v573, %v572
      %v579 = vpack.c.b16 %v575, %v574
      %vm584 = vcmask 523264
      %v586 = vsel %vm584, %v543, 0
      %v589 = vsel %vm584, %v544, 0
      %591 = vmatprep.subr.bf16.mxu0 0
      %592 = vmatpush1.bf16.msra.mxu0 0
      %593 = vmatprep.subr.bf16.mxu0 0
      %594 = vmatpush1.bf16.msra.mxu0 0
      %595 = vmatprep.subr.bf16.mxu0 0
      %596 = vmatpush1.bf16.msra.mxu0 0
      %597 = vmatprep.subr.bf16.mxu0 0
      %598 = vmatpush1.bf16.msra.mxu0 0
      %599 = vmatprep.subr.bf16.mxu0 0
      %600 = vmatpush1.bf16.msra.mxu0 %v579
      %601 = vmatprep.subr.bf16.mxu0 0
      %602 = vmatpush1.bf16.msra.mxu0 %v578
      %603 = vmatprep.subr.bf16.mxu0 0
      %604 = vmatpush1.bf16.msra.mxu0 %v577
      %605 = vmatprep.subr.bf16.mxu0 0
      %606 = vmatpush1.bf16.msra.mxu0 %v576
      %607 = vmatprep.subr.bf16.mxu0 0
      %608 = vmatpush2.bf16.msra.mxu0 0
      %609 = vmatprep.subr.bf16.mxu0 0
      %610 = vmatpush2.bf16.msra.mxu0 0
      %611 = vmatprep.subr.bf16.mxu0 0
      %612 = vmatpush2.bf16.msra.mxu0 0
      %613 = vmatprep.subr.bf16.mxu0 0
      %614 = vmatpush2.bf16.msra.mxu0 0
      %615 = vmatprep.subr.bf16.mxu0 0
      %616 = vmatpush2.bf16.msra.mxu0 0
      %617 = vmatprep.subr.bf16.mxu0 0
      %618 = vmatpush2.bf16.msra.mxu0 0
      %619 = vmatprep.subr.bf16.mxu0 0
      %620 = vmatpush2.bf16.msra.mxu0 0
      %621 = vmatprep.subr.bf16.mxu0 0
      %622 = vmatpush2.bf16.msra.mxu0 0
      %623 = vmatprep.mubr.bf16.mxu0 0
      %624 = vmatmul.mubr.bf16.gmra.mxu0 %v586
      %v625 = vpop.f32.mrf.mxu0
      %v626 = vadd.f32 %v558, %v625
      %v627 = vpop.f32.mrf.mxu0
      %v628 = vpop.f32.mrf.mxu0
      %v629 = vadd.f32 %v558, %v628
      %v630 = vpop.f32.mrf.mxu0
      %631 = vmatprep.mubr.bf16.mxu0 0
      %632 = vmatmul.mubr.bf16.gmra.mxu0 %v589
      %v633 = vpop.f32.mrf.mxu0
      %v634 = vadd.f32 %v558, %v633
      %v635 = vpop.f32.mrf.mxu0
      %v636 = vpop.f32.mrf.mxu0
      %v637 = vadd.f32 %v558, %v636
      %v638 = vpop.f32.mrf.mxu0
      %639 = vdwg.mxu0
      %v640 = vld [vmem:[%s1] sm:$0xff]
      %v641 = vld [vmem:[%s1 + $0x8] sm:$0xff]
      %v642 = vld [vmem:[%s1 + $0x10] sm:$0xff]
      %v643 = vld [vmem:[%s1 + $0x18] sm:$0xff]
      %v644 = vadd.f32 %v626, %v640
      %v645 = vadd.f32 %v629, %v641
      %v646 = vadd.f32 %v634, %v642
      %v647 = vadd.f32 %v637, %v643
      %v648 = vld [vmem:[%s4] sm:$0x1]
      %v649 = vld [vmem:[%s5] sm:$0x1]
      %vm650 = vcmask 261120
      %v651 = vsel %vm650, %v644, 0.0
      %652 = vadd.xlane.f32.xlu0 %v651
      %v653 = vpop.xlane.xlu0 %652
      %v654 = vsel %vm650, %v645, 0.0
      %655 = vadd.xlane.f32.xlu0 %v654
      %v656 = vpop.xlane.xlu0 %655
      %v657 = vsel %vm650, %v646, 0.0
      %658 = vadd.xlane.f32.xlu0 %v657
      %v659 = vpop.xlane.xlu0 %658
      %v660 = vsel %vm650, %v647, 0.0
      %661 = vadd.xlane.f32.xlu0 %v660
      %v662 = vpop.xlane.xlu0 %661
      %v663 = vrcp.pop 32.0
      %v664 = vmul.f32 %v653, %v663
      %v665 = vmul.f32 %v656, %v663
      %v666 = vmul.f32 %v659, %v663
      %v667 = vmul.f32 %v662, %v663
      %v668 = vsub.f32 %v644, %v664
      %v669 = vsub.f32 %v645, %v665
      %v670 = vsub.f32 %v646, %v666
      %v671 = vsub.f32 %v647, %v667
      %v672 = vmul.f32 %v668, %v668
      %v673 = vmul.f32 %v669, %v669
      %v674 = vmul.f32 %v670, %v670
      %v675 = vmul.f32 %v671, %v671
      %v676 = vsel %vm650, %v672, 0.0
      %677 = vadd.xlane.f32.xlu0 %v676
      %v678 = vpop.xlane.xlu0 %677
      %v679 = vsel %vm650, %v673, 0.0
      %680 = vadd.xlane.f32.xlu0 %v679
      %v681 = vpop.xlane.xlu0 %680
      %v682 = vsel %vm650, %v674, 0.0
      %683 = vadd.xlane.f32.xlu0 %v682
      %v684 = vpop.xlane.xlu0 %683
      %v685 = vsel %vm650, %v675, 0.0
      %686 = vadd.xlane.f32.xlu0 %v685
      %v687 = vpop.xlane.xlu0 %686
      %v688 = vmul.f32 %v678, %v663
      %v689 = vmul.f32 %v681, %v663
      %v690 = vmul.f32 %v684, %v663
      %v691 = vmul.f32 %v687, %v663
      %v692 = vadd.f32 %v688, 1e-05
      %v693 = vadd.f32 %v689, 1e-05
      %v694 = vadd.f32 %v690, 1e-05
      %v695 = vadd.f32 %v691, 1e-05
      %v696 = vrsqrt.pop %v692
      %v697 = vrsqrt.pop %v693
      %v698 = vrsqrt.pop %v694
      %v699 = vrsqrt.pop %v695
      %v700 = vmul.f32 %v668, %v696
      %v701 = vmul.f32 %v669, %v697
      %v702 = vmul.f32 %v670, %v698
      %v703 = vmul.f32 %v671, %v699
      %v705 = vlaneseq
      %v706 = vshrl.u32 %v705, 7
      %v707 = vsub.s32 0, %v706
      %v708 = vrot.slane %v648, %v707
      %v710 = vmul.f32 %v700, %v708
      %v711 = vmul.f32 %v701, %v708
      %v712 = vmul.f32 %v702, %v708
      %v713 = vmul.f32 %v703, %v708
      %v715 = vlaneseq
      %v716 = vshrl.u32 %v715, 7
      %v717 = vsub.s32 0, %v716
      %v718 = vrot.slane %v649, %v717
      %v720 = vadd.f32 %v710, %v718
      %v721 = vadd.f32 %v711, %v718
      %v722 = vadd.f32 %v712, %v718
      %v723 = vadd.f32 %v713, %v718
      %724 = vst.msk [vmem:[%s518] sm:$0xff] %vm650, %v720
      %725 = vst.msk [vmem:[%s518 + $0x8] sm:$0xff] %vm650, %v721
      %726 = vst.msk [vmem:[%s518 + $0x10] sm:$0xff] %vm650, %v722
      %727 = vst.msk [vmem:[%s518 + $0x18] sm:$0xff] %vm650, %v723
      %v728 = vpack.c.bf16 %v721, %v720
      %v729 = vpack.c.bf16 %v723, %v722
      %v730 = vld [vmem:[%s6] sm:$0xf]
      %v731 = vld [vmem:[%s6 + $0x4] sm:$0xf]
      %v732 = vld [vmem:[%s6 + $0x8] sm:$0xf]
      %v733 = vld [vmem:[%s6 + $0xc] sm:$0xf]
      %v734 = vld [vmem:[%s7] sm:$0x1]
      %v736 = vlaneseq
      %v737 = vshrl.u32 %v736, 7
      %v738 = vsub.s32 0, %v737
      %v739 = vrot.slane %v734, %v738
      %v745 = vunpack.c.l.b16 %v730
      %v746 = vunpack.c.l.b16 %v731
      %v747 = vunpack.c.l.b16 %v732
      %v748 = vunpack.c.l.b16 %v733
      %v749 = vpack.c.b16 %v746, %v745
      %v750 = vpack.c.b16 %v748, %v747
      %v754 = vsel %vm650, %v728, 0
      %v757 = vsel %vm650, %v729, 0
      %759 = vmatprep.subr.bf16.mxu0 0
      %760 = vmatpush1.bf16.msra.mxu0 0
      %761 = vmatprep.subr.bf16.mxu0 0
      %762 = vmatpush1.bf16.msra.mxu0 0
      %763 = vmatprep.subr.bf16.mxu0 0
      %764 = vmatpush1.bf16.msra.mxu0 0
      %765 = vmatprep.subr.bf16.mxu0 0
      %766 = vmatpush1.bf16.msra.mxu0 0
      %767 = vmatprep.subr.bf16.mxu0 0
      %768 = vmatpush1.bf16.msra.mxu0 0
      %769 = vmatprep.subr.bf16.mxu0 0
      %770 = vmatpush1.bf16.msra.mxu0 0
      %771 = vmatprep.subr.bf16.mxu0 0
      %772 = vmatpush1.bf16.msra.mxu0 %v750
      %773 = vmatprep.subr.bf16.mxu0 0
      %774 = vmatpush1.bf16.msra.mxu0 %v749
      %775 = vmatprep.subr.bf16.mxu0 0
      %776 = vmatpush2.bf16.msra.mxu0 0
      %777 = vmatprep.subr.bf16.mxu0 0
      %778 = vmatpush2.bf16.msra.mxu0 0
      %779 = vmatprep.subr.bf16.mxu0 0
      %780 = vmatpush2.bf16.msra.mxu0 0
      %781 = vmatprep.subr.bf16.mxu0 0
      %782 = vmatpush2.bf16.msra.mxu0 0
      %783 = vmatprep.subr.bf16.mxu0 0
      %784 = vmatpush2.bf16.msra.mxu0 0
      %785 = vmatprep.subr.bf16.mxu0 0
      %786 = vmatpush2.bf16.msra.mxu0 0
      %787 = vmatprep.subr.bf16.mxu0 0
      %788 = vmatpush2.bf16.msra.mxu0 0
      %789 = vmatprep.subr.bf16.mxu0 0
      %790 = vmatpush2.bf16.msra.mxu0 0
      %791 = vmatprep.mubr.bf16.mxu0 0
      %792 = vmatmul.mubr.bf16.gmra.mxu0 %v754
      %v793 = vpop.f32.mrf.mxu0
      %v794 = vadd.f32 %v739, %v793
      %v795 = vpop.f32.mrf.mxu0
      %v796 = vpop.f32.mrf.mxu0
      %v797 = vadd.f32 %v739, %v796
      %v798 = vpop.f32.mrf.mxu0
      %799 = vmatprep.mubr.bf16.mxu0 0
      %800 = vmatmul.mubr.bf16.gmra.mxu0 %v757
      %v801 = vpop.f32.mrf.mxu0
      %v802 = vadd.f32 %v739, %v801
      %v803 = vpop.f32.mrf.mxu0
      %v804 = vpop.f32.mrf.mxu0
      %v805 = vadd.f32 %v739, %v804
      %v806 = vpop.f32.mrf.mxu0
      %807 = vdwg.mxu0
      %v808 = vpack.c.bf16 %v797, %v794
      %v809 = vpack.c.bf16 %v805, %v802
      %v812 = vunpack.c.l.b16 %v808
      %v813 = vunpack.c.h.b16 %v808
      %v814 = vunpack.c.l.b16 %v809
      %v815 = vunpack.c.h.b16 %v809
      %v816 = vpack.c.b16 %v812, %v812
      %v817 = vpack.c.b16 %v813, %v813
      %v818 = vpack.c.b16 %v814, %v814
      %v819 = vpack.c.b16 %v815, %v815
      %vm824 = vcmask 257024
      %825 = vst.msk [vmem:[%s524] sm:$0xf] %vm824, %v816
      %826 = vst.msk [vmem:[%s524 + $0x4] sm:$0xf] %vm824, %v817
      %827 = vst.msk [vmem:[%s524 + $0x8] sm:$0xf] %vm824, %v818
      %828 = vst.msk [vmem:[%s524 + $0xc] sm:$0xf] %vm824, %v819
      %v829 = vld [vmem:[%s8] sm:$0xf]
      %v830 = vld [vmem:[%s8 + $0x4] sm:$0xf]
      %v831 = vld [vmem:[%s8 + $0x8] sm:$0xf]
      %v832 = vld [vmem:[%s8 + $0xc] sm:$0xf]
      %v833 = vld [vmem:[%s9] sm:$0x1]
      %v835 = vlaneseq
      %v836 = vshrl.u32 %v835, 7
      %v837 = vsub.s32 0, %v836
      %v838 = vrot.slane %v833, %v837
      %v844 = vunpack.c.l.b16 %v829
      %v845 = vunpack.c.l.b16 %v830
      %v846 = vunpack.c.l.b16 %v831
      %v847 = vunpack.c.l.b16 %v832
      %v848 = vpack.c.b16 %v845, %v844
      %v849 = vpack.c.b16 %v847, %v846
      %852 = vmatprep.subr.bf16.mxu0 0
      %853 = vmatpush1.bf16.msra.mxu0 0
      %854 = vmatprep.subr.bf16.mxu0 0
      %855 = vmatpush1.bf16.msra.mxu0 0
      %856 = vmatprep.subr.bf16.mxu0 0
      %857 = vmatpush1.bf16.msra.mxu0 0
      %858 = vmatprep.subr.bf16.mxu0 0
      %859 = vmatpush1.bf16.msra.mxu0 0
      %860 = vmatprep.subr.bf16.mxu0 0
      %861 = vmatpush1.bf16.msra.mxu0 0
      %862 = vmatprep.subr.bf16.mxu0 0
      %863 = vmatpush1.bf16.msra.mxu0 0
      %864 = vmatprep.subr.bf16.mxu0 0
      %865 = vmatpush1.bf16.msra.mxu0 %v849
      %866 = vmatprep.subr.bf16.mxu0 0
      %867 = vmatpush1.bf16.msra.mxu0 %v848
      %868 = vmatprep.subr.bf16.mxu0 0
      %869 = vmatpush2.bf16.msra.mxu0 0
      %870 = vmatprep.subr.bf16.mxu0 0
      %871 = vmatpush2.bf16.msra.mxu0 0
      %872 = vmatprep.subr.bf16.mxu0 0
      %873 = vmatpush2.bf16.msra.mxu0 0
      %874 = vmatprep.subr.bf16.mxu0 0
      %875 = vmatpush2.bf16.msra.mxu0 0
      %876 = vmatprep.subr.bf16.mxu0 0
      %877 = vmatpush2.bf16.msra.mxu0 0
      %878 = vmatprep.subr.bf16.mxu0 0
      %879 = vmatpush2.bf16.msra.mxu0 0
      %880 = vmatprep.subr.bf16.mxu0 0
      %881 = vmatpush2.bf16.msra.mxu0 0
      %882 = vmatprep.subr.bf16.mxu0 0
      %883 = vmatpush2.bf16.msra.mxu0 0
      %884 = vmatprep.mubr.bf16.mxu0 0
      %885 = vmatmul.mubr.bf16.gmra.mxu0 %v754
      %v886 = vpop.f32.mrf.mxu0
      %v887 = vadd.f32 %v838, %v886
      %v888 = vpop.f32.mrf.mxu0
      %v889 = vpop.f32.mrf.mxu0
      %v890 = vadd.f32 %v838, %v889
      %v891 = vpop.f32.mrf.mxu0
      %892 = vmatprep.mubr.bf16.mxu0 0
      %893 = vmatmul.mubr.bf16.gmra.mxu0 %v757
      %v894 = vpop.f32.mrf.mxu0
      %v895 = vadd.f32 %v838, %v894
      %v896 = vpop.f32.mrf.mxu0
      %v897 = vpop.f32.mrf.mxu0
      %v898 = vadd.f32 %v838, %v897
      %v899 = vpop.f32.mrf.mxu0
      %900 = vdwg.mxu0
      %v901 = vpack.c.bf16 %v890, %v887
      %v902 = vpack.c.bf16 %v898, %v895
      %v905 = vunpack.c.l.b16 %v901
      %v906 = vunpack.c.h.b16 %v901
      %v907 = vunpack.c.l.b16 %v902
      %v908 = vunpack.c.h.b16 %v902
      %v909 = vpack.c.b16 %v905, %v905
      %v910 = vpack.c.b16 %v906, %v906
      %v911 = vpack.c.b16 %v907, %v907
      %v912 = vpack.c.b16 %v908, %v908
      %917 = vst.msk [vmem:[%s530] sm:$0xf] %vm824, %v909
      %918 = vst.msk [vmem:[%s530 + $0x4] sm:$0xf] %vm824, %v910
      %919 = vst.msk [vmem:[%s530 + $0x8] sm:$0xf] %vm824, %v911
      %920 = vst.msk [vmem:[%s530 + $0xc] sm:$0xf] %vm824, %v912
      %v921 = vld [vmem:[%s10] sm:$0xf]
      %v922 = vld [vmem:[%s10 + $0x4] sm:$0xf]
      %v923 = vld [vmem:[%s10 + $0x8] sm:$0xf]
      %v924 = vld [vmem:[%s10 + $0xc] sm:$0xf]
      %v925 = vld [vmem:[%s11] sm:$0x1]
      %v927 = vlaneseq
      %v928 = vshrl.u32 %v927, 7
      %v929 = vsub.s32 0, %v928
      %v930 = vrot.slane %v925, %v929
      %v936 = vunpack.c.l.b16 %v921
      %v937 = vunpack.c.l.b16 %v922
      %v938 = vunpack.c.l.b16 %v923
      %v939 = vunpack.c.l.b16 %v924
      %v940 = vpack.c.b16 %v937, %v936
      %v941 = vpack.c.b16 %v939, %v938
      %944 = vmatprep.subr.bf16.mxu0 0
      %945 = vmatpush1.bf16.msra.mxu0 0
      %946 = vmatprep.subr.bf16.mxu0 0
      %947 = vmatpush1.bf16.msra.mxu0 0
      %948 = vmatprep.subr.bf16.mxu0 0
      %949 = vmatpush1.bf16.msra.mxu0 0
      %950 = vmatprep.subr.bf16.mxu0 0
      %951 = vmatpush1.bf16.msra.mxu0 0
      %952 = vmatprep.subr.bf16.mxu0 0
      %953 = vmatpush1.bf16.msra.mxu0 0
      %954 = vmatprep.subr.bf16.mxu0 0
      %955 = vmatpush1.bf16.msra.mxu0 0
      %956 = vmatprep.subr.bf16.mxu0 0
      %957 = vmatpush1.bf16.msra.mxu0 %v941
      %958 = vmatprep.subr.bf16.mxu0 0
      %959 = vmatpush1.bf16.msra.mxu0 %v940
      %960 = vmatprep.subr.bf16.mxu0 0
      %961 = vmatpush2.bf16.msra.mxu0 0
      %962 = vmatprep.subr.bf16.mxu0 0
      %963 = vmatpush2.bf16.msra.mxu0 0
      %964 = vmatprep.subr.bf16.mxu0 0
      %965 = vmatpush2.bf16.msra.mxu0 0
      %966 = vmatprep.subr.bf16.mxu0 0
      %967 = vmatpush2.bf16.msra.mxu0 0
      %968 = vmatprep.subr.bf16.mxu0 0
      %969 = vmatpush2.bf16.msra.mxu0 0
      %970 = vmatprep.subr.bf16.mxu0 0
      %971 = vmatpush2.bf16.msra.mxu0 0
      %972 = vmatprep.subr.bf16.mxu0 0
      %973 = vmatpush2.bf16.msra.mxu0 0
      %974 = vmatprep.subr.bf16.mxu0 0
      %975 = vmatpush2.bf16.msra.mxu0 0
      %976 = vmatprep.mubr.bf16.mxu0 0
      %977 = vmatmul.mubr.bf16.gmra.mxu0 %v754
      %v978 = vpop.f32.mrf.mxu0
      %v979 = vadd.f32 %v930, %v978
      %v980 = vpop.f32.mrf.mxu0
      %v981 = vpop.f32.mrf.mxu0
      %v982 = vadd.f32 %v930, %v981
      %v983 = vpop.f32.mrf.mxu0
      %984 = vmatprep.mubr.bf16.mxu0 0
      %985 = vmatmul.mubr.bf16.gmra.mxu0 %v757
      %v986 = vpop.f32.mrf.mxu0
      %v987 = vadd.f32 %v930, %v986
      %v988 = vpop.f32.mrf.mxu0
      %v989 = vpop.f32.mrf.mxu0
      %v990 = vadd.f32 %v930, %v989
      %v991 = vpop.f32.mrf.mxu0
      %992 = vdwg.mxu0
      %v993 = vpack.c.bf16 %v982, %v979
      %v994 = vpack.c.bf16 %v990, %v987
      %v997 = vunpack.c.l.b16 %v993
      %v998 = vunpack.c.h.b16 %v993
      %v999 = vunpack.c.l.b16 %v994
      %v1000 = vunpack.c.h.b16 %v994
      %v1001 = vpack.c.b16 %v997, %v997
      %v1002 = vpack.c.b16 %v998, %v998
      %v1003 = vpack.c.b16 %v999, %v999
      %v1004 = vpack.c.b16 %v1000, %v1000
      %1009 = vst.msk [vmem:[%s536] sm:$0xf] %vm824, %v1001
      %1010 = vst.msk [vmem:[%s536 + $0x4] sm:$0xf] %vm824, %v1002
      %1011 = vst.msk [vmem:[%s536 + $0x8] sm:$0xf] %vm824, %v1003
      %1012 = vst.msk [vmem:[%s536 + $0xc] sm:$0xf] %vm824, %v1004
      %s1013 = smul.u32 4, %s27
      %p1014 = scmp.lt.s32.totalorder %s1013, 7
      %s1015 = scalar_select %p1014, %s1013, 7
      %s1016 = smul.addr %s1015, 8
      %s1017 = scalar_lea.vmem %s12, %s1016
      %s1018 = smul.u32 4, %s27
      %p1019 = scmp.lt.s32.totalorder %s1018, 7
      %s1020 = scalar_select %p1019, %s1018, 7
      %s1021 = smul.addr %s1020, 4
      %s1022 = scalar_lea.vmem %s13, %s1021
      %s1023 = smul.u32 4, %s27
      %p1024 = scmp.lt.s32.totalorder %s1023, 7
      %s1025 = scalar_select %p1024, %s1023, 7
      %s1026 = smul.addr %s1025, 4
      %s1027 = scalar_lea.vmem %s14, %s1026
      %s1028 = smul.u32 4, %s27
      %p1029 = scmp.lt.s32.totalorder %s1028, 7
      %s1030 = scalar_select %p1029, %s1028, 7
      %s1031 = smul.addr %s1030, 4
      %s1032 = scalar_lea.vmem %s15, %s1031
      // Predicated region
      $region69: #{vit_block_forward.3} parent=67 // pred_check
        %p1033 = pneg %p302
      $region70: #{vit_block_forward.3} parent=67 // pred_check_branch
        %1035 = sbr.rel (%p1033) target = $region72
      $region71: #{vit_block_forward.3} parent=67 // pred_region
        %s1036 = smul.u32 4, %s27
      $region72: #{vit_block_forward.3} parent=67 // pred_fallthru
        _
      // Predicated region
      $region73: #{vit_block_forward.3} parent=67 // pred_check
        %p1037 = pneg %p328
      $region74: #{vit_block_forward.3} parent=67 // pred_check_branch
        %1039 = sbr.rel (%p1037) target = $region76
      $region75: #{vit_block_forward.3} parent=67 // pred_region
        %s1040 = smul.u32 4, %s27
      $region76: #{vit_block_forward.3} parent=67 // pred_fallthru
        _
      // Predicated region
      $region77: #{vit_block_forward.3} parent=67 // pred_check
        %p1041 = pneg %p354
      $region78: #{vit_block_forward.3} parent=67 // pred_check_branch
        %1043 = sbr.rel (%p1041) target = $region80
      $region79: #{vit_block_forward.3} parent=67 // pred_region
        %s1044 = smul.u32 4, %s27
      $region80: #{vit_block_forward.3} parent=67 // pred_fallthru
        _
      // Predicated region
      $region81: #{vit_block_forward.3} parent=67 // pred_check
        %p1045 = pneg %p380
      $region82: #{vit_block_forward.3} parent=67 // pred_check_branch
        %1047 = sbr.rel (%p1045) target = $region84
      $region83: #{vit_block_forward.3} parent=67 // pred_region
        %s1048 = smul.u32 4, %s27
      $region84: #{vit_block_forward.3} parent=67 // pred_fallthru
        _
    $region68: #{vit_block_forward.3} parent=5 // pred_fallthru
      _
    %p1049 = scmp.le.s32.totalorder 2, %s22
    // Predicated region
    $region85: #{vit_block_forward.3} parent=5 // pred_check
      %p1050 = pneg %p1049
    $region86: #{vit_block_forward.3} parent=5 // pred_check_branch
      %1052 = sbr.rel (%p1050) target = $region88
    $region87: #{vit_block_forward.3} parent=5 // pred_region
      %s1053 = ssub.s32 %s22, 2
      // Predicated region
      $region89: #{vit_block_forward.3} parent=87 // pred_check
        %p1054 = pneg %p308
      $region90: #{vit_block_forward.3} parent=87 // pred_check_branch
        %1056 = sbr.rel (%p1054) target = $region92
      $region91: #{vit_block_forward.3} parent=87 // pred_region
        %s1057 = smul.u32 4, %s28
        %p1058 = scmp.lt.s32.totalorder %s1057, 7
        %s1059 = scalar_select %p1058, %s1057, 7
        %s1060 = smul.addr %s1059, 8
        %s1061 = scalar_lea.vmem %s12, %s1060
      $region92: #{vit_block_forward.3} parent=87 // pred_fallthru
        _
      // Predicated region
      $region93: #{vit_block_forward.3} parent=87 // pred_check
        %p1062 = pneg %p334
      $region94: #{vit_block_forward.3} parent=87 // pred_check_branch
        %1064 = sbr.rel (%p1062) target = $region96
      $region95: #{vit_block_forward.3} parent=87 // pred_region
        %s1065 = smul.u32 4, %s28
        %p1066 = scmp.lt.s32.totalorder %s1065, 7
        %s1067 = scalar_select %p1066, %s1065, 7
        %s1068 = smul.addr %s1067, 4
        %s1069 = scalar_lea.vmem %s13, %s1068
      $region96: #{vit_block_forward.3} parent=87 // pred_fallthru
        _
      // Predicated region
      $region97: #{vit_block_forward.3} parent=87 // pred_check
        %p1070 = pneg %p360
      $region98: #{vit_block_forward.3} parent=87 // pred_check_branch
        %1072 = sbr.rel (%p1070) target = $region100
      $region99: #{vit_block_forward.3} parent=87 // pred_region
        %s1073 = smul.u32 4, %s28
        %p1074 = scmp.lt.s32.totalorder %s1073, 7
        %s1075 = scalar_select %p1074, %s1073, 7
        %s1076 = smul.addr %s1075, 4
        %s1077 = scalar_lea.vmem %s14, %s1076
      $region100: #{vit_block_forward.3} parent=87 // pred_fallthru
        _
      // Predicated region
      $region101: #{vit_block_forward.3} parent=87 // pred_check
        %p1078 = pneg %p386
      $region102: #{vit_block_forward.3} parent=87 // pred_check_branch
        %1080 = sbr.rel (%p1078) target = $region104
      $region103: #{vit_block_forward.3} parent=87 // pred_region
        %s1081 = smul.u32 4, %s28
        %p1082 = scmp.lt.s32.totalorder %s1081, 7
        %s1083 = scalar_select %p1082, %s1081, 7
        %s1084 = smul.addr %s1083, 4
        %s1085 = scalar_lea.vmem %s15, %s1084
      $region104: #{vit_block_forward.3} parent=87 // pred_fallthru
        _
    $region88: #{vit_block_forward.3} parent=5 // pred_fallthru
      _
  $region6: #{vit_block_forward.3} parent=0 // loop_footer
    %s26 = sadd.s32 1, %s22
  $region7: #{vit_block_forward.3} parent=0 // loop_footer_branch
    %21 = sbr.rel target = $region3
  $region8: #{vit_block_forward.3} parent=0 // loop_exit
    _

// kernel: vit_block_forward.4
$region0: #{vit_block_forward.4}
  #allocation0 [shape = 'u32[]', space=smem, size = 0x4, offset = 0x4, fixed_abs, tag = 'smem constant byte address 0x4 - core index']
  #allocation1 [shape = 'u32[144,128]{1,0:T(1,128)}', space=vmem, size = 0x12000, scoped, tag = 'internal scratch']
  %s0 = inlined_call_operand.vmem [shape: bf16[16,16,8], index: 0, kind: input, shape index: {}]
  %s1 = inlined_call_operand.vmem [shape: bf16[16,16,8], index: 1, kind: input, shape index: {}]
  %s2 = inlined_call_operand.vmem [shape: bf16[16,16,8], index: 2, kind: input, shape index: {}]
  %s3 = inlined_call_operand.vmem [shape: bf16[16,16,8], index: 3, kind: output, shape index: {}]
  %s4 = sld [smem:[#allocation0]]
  $region45: #{vit_block_forward.4} parent=0
    _
  %s6 = ssub.s32 1, %s4
  %s7 = scalar_select 0, %s6, %s4
  loop: start=0, step=1, limit=4
  $region2: #{vit_block_forward.4} parent=0 // loop_pre_header
    _
  $region3: #{vit_block_forward.4} parent=0 // loop_header
    %s9 = sphi 0, %s13
    %p10 = scmp.ge.s32.totalorder %s9, 4
    %s19 = sphi 0, %s21
    %s22 = sphi 0, %s19
    %s23 = sphi 0, %s22
    %s39 = sphi 0, %s23
    %s45 = sphi 0, %s47
    %s48 = sphi 0, %s45
    %s49 = sphi 0, %s48
    %s65 = sphi 0, %s49
    %s71 = sphi 0, %s73
    %s74 = sphi 0, %s71
    %s75 = sphi 0, %s74
    %s91 = sphi 0, %s75
    %s97 = sphi 0, %s99
    %s100 = sphi 0, %s97
    %s101 = sphi 0, %s100
    %s117 = sphi 0, %s101
  $region4: #{vit_block_forward.4} parent=0 // loop_header_branch
    %12 = sbr.rel (%p10) target = $region8
  $region5: #{vit_block_forward.4} parent=0 // loop_body
    %s14 = ssub.s32 %s9, 1
    %s15 = ssub.s32 %s9, 2
    %s16 = sadd.s32 %s9, 1
    %s17 = ssub.s32 %s9, %s16
    %p18 = scmp.eq.s32.totalorder %s17, 0
    %s20 = sadd.s32 %s19, 1
    %s21 = scalar_select %p18, %s19, %s20
    %p24 = pneg %p18
    %p25 = scmp.eq.s32.totalorder %s9, 1
    %p26 = por %p24, %p25
    %p27 = scmp.ne.s32.totalorder %s19, %s22
    %p28 = scmp.eq.s32.totalorder %s9, 0
    %p29 = por %p27, %p28
    %p30 = scmp.ne.s32.totalorder %s19, %s22
    %p31 = scmp.eq.s32.totalorder %s14, 1
    %p32 = por %p30, %p31
    %p33 = scmp.ne.s32.totalorder %s22, %s23
    %p34 = scmp.eq.s32.totalorder %s14, 0
    %p35 = por %p33, %p34
    %p36 = scmp.ne.s32.totalorder %s22, %s23
    %p37 = scmp.eq.s32.totalorder %s15, 1
    %p38 = por %p36, %p37
    %p40 = scmp.ne.s32.totalorder %s23, %s39
    %p41 = scmp.eq.s32.totalorder %s15, 0
    %p42 = por %p40, %p41
    %s43 = ssub.s32 %s9, %s16
    %p44 = scmp.eq.s32.totalorder %s43, 0
    %s46 = sadd.s32 %s45, 1
    %s47 = scalar_select %p44, %s45, %s46
    %p50 = pneg %p44
    %p51 = scmp.eq.s32.totalorder %s9, 1
    %p52 = por %p50, %p51
    %p53 = scmp.ne.s32.totalorder %s45, %s48
    %p54 = scmp.eq.s32.totalorder %s9, 0
    %p55 = por %p53, %p54
    %p56 = scmp.ne.s32.totalorder %s45, %s48
    %p57 = scmp.eq.s32.totalorder %s14, 1
    %p58 = por %p56, %p57
    %p59 = scmp.ne.s32.totalorder %s48, %s49
    %p60 = scmp.eq.s32.totalorder %s14, 0
    %p61 = por %p59, %p60
    %p62 = scmp.ne.s32.totalorder %s48, %s49
    %p63 = scmp.eq.s32.totalorder %s15, 1
    %p64 = por %p62, %p63
    %p66 = scmp.ne.s32.totalorder %s49, %s65
    %p67 = scmp.eq.s32.totalorder %s15, 0
    %p68 = por %p66, %p67
    %s69 = ssub.s32 %s9, %s16
    %p70 = scmp.eq.s32.totalorder %s69, 0
    %s72 = sadd.s32 %s71, 1
    %s73 = scalar_select %p70, %s71, %s72
    %p76 = pneg %p70
    %p77 = scmp.eq.s32.totalorder %s9, 1
    %p78 = por %p76, %p77
    %p79 = scmp.ne.s32.totalorder %s71, %s74
    %p80 = scmp.eq.s32.totalorder %s9, 0
    %p81 = por %p79, %p80
    %p82 = scmp.ne.s32.totalorder %s71, %s74
    %p83 = scmp.eq.s32.totalorder %s14, 1
    %p84 = por %p82, %p83
    %p85 = scmp.ne.s32.totalorder %s74, %s75
    %p86 = scmp.eq.s32.totalorder %s14, 0
    %p87 = por %p85, %p86
    %p88 = scmp.ne.s32.totalorder %s74, %s75
    %p89 = scmp.eq.s32.totalorder %s15, 1
    %p90 = por %p88, %p89
    %p92 = scmp.ne.s32.totalorder %s75, %s91
    %p93 = scmp.eq.s32.totalorder %s15, 0
    %p94 = por %p92, %p93
    %s95 = ssub.s32 %s9, %s16
    %p96 = scmp.eq.s32.totalorder %s95, 0
    %s98 = sadd.s32 %s97, 1
    %s99 = scalar_select %p96, %s97, %s98
    %p102 = pneg %p96
    %p103 = scmp.eq.s32.totalorder %s9, 1
    %p104 = por %p102, %p103
    %p105 = scmp.ne.s32.totalorder %s97, %s100
    %p106 = scmp.eq.s32.totalorder %s9, 0
    %p107 = por %p105, %p106
    %p108 = scmp.ne.s32.totalorder %s97, %s100
    %p109 = scmp.eq.s32.totalorder %s14, 1
    %p110 = por %p108, %p109
    %p111 = scmp.ne.s32.totalorder %s100, %s101
    %p112 = scmp.eq.s32.totalorder %s14, 0
    %p113 = por %p111, %p112
    %p114 = scmp.ne.s32.totalorder %s100, %s101
    %p115 = scmp.eq.s32.totalorder %s15, 1
    %p116 = por %p114, %p115
    %p118 = scmp.ne.s32.totalorder %s101, %s117
    %p119 = scmp.eq.s32.totalorder %s15, 0
    %p120 = por %p118, %p119
    %p121 = scmp.le.s32.totalorder 1, %s9
    %p122 = scmp.lt.s32.totalorder %s9, 3
    %p123 = pnand %p121, %p122
    %p124 = pneg %p123
    // Predicated region
    $region9: #{vit_block_forward.4} parent=5 // pred_check
      _
    $region10: #{vit_block_forward.4} parent=5 // pred_check_branch
      %126 = sbr.rel (%p123) target = $region12
    $region11: #{vit_block_forward.4} parent=5 // pred_region
      %s127 = ssub.s32 %s9, 1
    $region12: #{vit_block_forward.4} parent=5 // pred_fallthru
      _
    %p128 = scmp.lt.s32.totalorder %s9, 2
    // Predicated region
    $region13: #{vit_block_forward.4} parent=5 // pred_check
      %p129 = pneg %p128
    $region14: #{vit_block_forward.4} parent=5 // pred_check_branch
      %131 = sbr.rel (%p129) target = $region16
    $region15: #{vit_block_forward.4} parent=5 // pred_region
      // Predicated region
      $region17: #{vit_block_forward.4} parent=15 // pred_check
        %p132 = pneg %p29
      $region18: #{vit_block_forward.4} parent=15 // pred_check_branch
        %134 = sbr.rel (%p132) target = $region20
      $region19: #{vit_block_forward.4} parent=15 // pred_region
        %s135 = smul.u32 8, %s9
        %p136 = scmp.lt.s32.totalorder %s135, 15
        %s137 = scalar_select %p136, %s135, 15
        %s138 = smul.addr %s137, 2
        %s139 = smul.addr %s138, 4
        %s140 = scalar_lea.vmem %s0, %s139
        %s141 = smul.u32 8, %s9
      $region20: #{vit_block_forward.4} parent=15 // pred_fallthru
        _
      // Predicated region
      $region21: #{vit_block_forward.4} parent=15 // pred_check
        %p142 = pneg %p55
      $region22: #{vit_block_forward.4} parent=15 // pred_check_branch
        %144 = sbr.rel (%p142) target = $region24
      $region23: #{vit_block_forward.4} parent=15 // pred_region
        %s145 = smul.u32 8, %s9
        %p146 = scmp.lt.s32.totalorder %s145, 15
        %s147 = scalar_select %p146, %s145, 15
        %s148 = smul.addr %s147, 2
        %s149 = smul.addr %s148, 4
        %s150 = scalar_lea.vmem %s1, %s149
        %s151 = smul.u32 8, %s9
      $region24: #{vit_block_forward.4} parent=15 // pred_fallthru
        _
      // Predicated region
      $region25: #{vit_block_forward.4} parent=15 // pred_check
        %p152 = pneg %p81
      $region26: #{vit_block_forward.4} parent=15 // pred_check_branch
        %154 = sbr.rel (%p152) target = $region28
      $region27: #{vit_block_forward.4} parent=15 // pred_region
        %s155 = smul.u32 8, %s9
        %p156 = scmp.lt.s32.totalorder %s155, 15
        %s157 = scalar_select %p156, %s155, 15
        %s158 = smul.addr %s157, 2
        %s159 = smul.addr %s158, 4
        %s160 = scalar_lea.vmem %s2, %s159
        %s161 = smul.u32 8, %s9
      $region28: #{vit_block_forward.4} parent=15 // pred_fallthru
        _
    $region16: #{vit_block_forward.4} parent=5 // pred_fallthru
      _
    %p162 = scmp.le.s32.totalorder 1, %s9
    %p163 = scmp.lt.s32.totalorder %s9, 3
    %p164 = pnand %p162, %p163
    %p165 = pneg %p164
    // Predicated region
    $region29: #{vit_block_forward.4} parent=5 // pred_check
      _
    $region30: #{vit_block_forward.4} parent=5 // pred_check_branch
      %167 = sbr.rel (%p164) target = $region32
    $region31: #{vit_block_forward.4} parent=5 // pred_region
      %s168 = ssub.s32 %s9, 1
      %s169 = smul.u32 8, %s14
      %p170 = scmp.lt.s32.totalorder %s169, 15
      %s171 = scalar_select %p170, %s169, 15
      %s172 = smul.addr %s171, 2
      %s173 = smul.addr %s172, 4
      %s174 = scalar_lea.vmem %s0, %s173
      %p175 = pneg %p35
      %p176 = pneg %p32
      %s177 = smul.u32 8, %s14
      %p178 = scmp.lt.s32.totalorder %s177, 15
      %s179 = scalar_select %p178, %s177, 15
      %s180 = smul.addr %s179, 2
      %s181 = smul.addr %s180, 4
      %s182 = scalar_lea.vmem %s1, %s181
      %p183 = pneg %p61
      %p184 = pneg %p58
      %s185 = smul.u32 8, %s14
      %p186 = scmp.lt.s32.totalorder %s185, 15
      %s187 = scalar_select %p186, %s185, 15
      %s188 = smul.addr %s187, 2
      %s189 = smul.addr %s188, 4
      %s190 = scalar_lea.vmem %s2, %s189
      %p191 = pneg %p87
      %p192 = pneg %p84
      %p193 = pneg %p113
      %p194 = pneg %p110
      %s195 = smul.u32 8, %s14
      %p196 = scmp.lt.s32.totalorder %s195, 15
      %s197 = scalar_select %p196, %s195, 15
      %s198 = smul.addr %s197, 2
      %s199 = smul.addr %s198, 4
      %s200 = scalar_lea.vmem %s3, %s199
      %s201 = smul.u32 8, %s14
      %p202 = scmp.lt.s32.totalorder %s201, 15
      %s203 = scalar_select %p202, %s201, 15
      %s204 = smul.addr %s203, 2
      %s205 = smul.addr %s204, 4
      %s206 = scalar_lea.vmem %s0, %s205
      %s207 = smul.u32 8, %s14
      %s208 = smul.u32 8, %s14
      %p209 = scmp.lt.s32.totalorder %s208, 15
      %s210 = scalar_select %p209, %s208, 15
      %s211 = smul.addr %s210, 2
      %s212 = smul.addr %s211, 4
      %s213 = scalar_lea.vmem %s1, %s212
      %s214 = smul.u32 8, %s14
      %s215 = smul.u32 8, %s14
      %p216 = scmp.lt.s32.totalorder %s215, 15
      %s217 = scalar_select %p216, %s215, 15
      %s218 = smul.addr %s217, 2
      %s219 = smul.addr %s218, 4
      %s220 = scalar_lea.vmem %s2, %s219
      %s221 = smul.u32 8, %s14
      %s222 = smul.u32 8, %s14
      %p223 = scmp.lt.s32.totalorder %s222, 15
      %s224 = scalar_select %p223, %s222, 15
      %s225 = smul.addr %s224, 2
      %s226 = smul.addr %s225, 4
      %s227 = scalar_lea.vmem %s3, %s226
      %s228 = smul.u32 8, %s14
      %v230 = vld [vmem:[%s206] sm:$0xf]
      %v231 = vld [vmem:[%s206 + $0x4] sm:$0xf]
      %v232 = vld [vmem:[%s206 + $0x8] sm:$0xf]
      %v233 = vld [vmem:[%s206 + $0xc] sm:$0xf]
      %v234 = vld [vmem:[%s206 + $0x10] sm:$0xf]
      %v235 = vld [vmem:[%s206 + $0x14] sm:$0xf]
      %v236 = vld [vmem:[%s206 + $0x18] sm:$0xf]
      %v237 = vld [vmem:[%s206 + $0x1c] sm:$0xf]
      %v238 = vld [vmem:[%s206 + $0x20] sm:$0xf]
      %v239 = vld [vmem:[%s206 + $0x24] sm:$0xf]
      %v240 = vld [vmem:[%s206 + $0x28] sm:$0xf]
      %v241 = vld [vmem:[%s206 + $0x2c] sm:$0xf]
      %v242 = vld [vmem:[%s206 + $0x30] sm:$0xf]
      %v243 = vld [vmem:[%s206 + $0x34] sm:$0xf]
      %v244 = vld [vmem:[%s206 + $0x38] sm:$0xf]
      %v245 = vld [vmem:[%s206 + $0x3c] sm:$0xf]
      %v246 = vld [vmem:[%s213] sm:$0xf]
      %v247 = vld [vmem:[%s213 + $0x4] sm:$0xf]
      %v248 = vld [vmem:[%s213 + $0x8] sm:$0xf]
      %v249 = vld [vmem:[%s213 + $0xc] sm:$0xf]
      %v250 = vld [vmem:[%s213 + $0x10] sm:$0xf]
      %v251 = vld [vmem:[%s213 + $0x14] sm:$0xf]
      %v252 = vld [vmem:[%s213 + $0x18] sm:$0xf]
      %v253 = vld [vmem:[%s213 + $0x1c] sm:$0xf]
      %v254 = vld [vmem:[%s213 + $0x20] sm:$0xf]
      %v255 = vld [vmem:[%s213 + $0x24] sm:$0xf]
      %v256 = vld [vmem:[%s213 + $0x28] sm:$0xf]
      %v257 = vld [vmem:[%s213 + $0x2c] sm:$0xf]
      %v258 = vld [vmem:[%s213 + $0x30] sm:$0xf]
      %v259 = vld [vmem:[%s213 + $0x34] sm:$0xf]
      %v260 = vld [vmem:[%s213 + $0x38] sm:$0xf]
      %v261 = vld [vmem:[%s213 + $0x3c] sm:$0xf]
      %v264 = vunpack.c.l.b16 %v230
      %v265 = vunpack.c.l.b16 %v231
      %v266 = vpack.c.b16 %v265, %v264
      %v269 = vunpack.c.l.b16 %v246
      %v270 = vunpack.c.l.b16 %v247
      %v271 = vpack.c.b16 %v270, %v269
      %vm272 = vcmask 64512
      %v274 = vsel %vm272, %v266, 0
      %v277 = vsel %vm272, %v271, 0
      %279 = vmatprep.subr.bf16.mxu0 0
      %280 = vmatpush1.bf16.xpose.msra.mxu0 0
      %281 = vmatprep.subr.bf16.mxu0 0
      %282 = vmatpush1.bf16.xpose.msra.mxu0 0
      %283 = vmatprep.subr.bf16.mxu0 0
      %284 = vmatpush1.bf16.xpose.msra.mxu0 0
      %285 = vmatprep.subr.bf16.mxu0 0
      %286 = vmatpush1.bf16.xpose.msra.mxu0 0
      %287 = vmatprep.subr.bf16.mxu0 0
      %288 = vmatpush1.bf16.xpose.msra.mxu0 0
      %289 = vmatprep.subr.bf16.mxu0 0
      %290 = vmatpush1.bf16.xpose.msra.mxu0 0
      %291 = vmatprep.subr.bf16.mxu0 0
      %292 = vmatpush1.bf16.xpose.msra.mxu0 0
      %293 = vmatprep.subr.bf16.mxu0 0
      %294 = vmatpush1.bf16.xpose.msra.mxu0 %v277
      %295 = vmatprep.subr.bf16.mxu0 0
      %296 = vmatpush2.bf16.xpose.msra.mxu0 0
      %297 = vmatprep.subr.bf16.mxu0 0
      %298 = vmatpush2.bf16.xpose.msra.mxu0 0
      %299 = vmatprep.subr.bf16.mxu0 0
      %300 = vmatpush2.bf16.xpose.msra.mxu0 0
      %301 = vmatprep.subr.bf16.mxu0 0
      %302 = vmatpush2.bf16.xpose.msra.mxu0 0
      %303 = vmatprep.subr.bf16.mxu0 0
      %304 = vmatpush2.bf16.xpose.msra.mxu0 0
      %305 = vmatprep.subr.bf16.mxu0 0
      %306 = vmatpush2.bf16.xpose.msra.mxu0 0
      %307 = vmatprep.subr.bf16.mxu0 0
      %308 = vmatpush2.bf16.xpose.msra.mxu0 0
      %309 = vmatprep.subr.bf16.mxu0 0
      %310 = vmatpush2.bf16.xpose.msra.mxu0 0
      %311 = vmatprep.mubr.bf16.mxu0 0
      %312 = vmatmul.mubr.bf16.gmra.mxu0 %v274
      %v313 = vpop.f32.mrf.mxu0
      %v314 = vadd.f32 0.0, %v313
      %v315 = vpop.f32.mrf.mxu0
      %v316 = vpop.f32.mrf.mxu0
      %v317 = vadd.f32 0.0, %v316
      %v318 = vpop.f32.mrf.mxu0
      %319 = vdwg.mxu0
      %v322 = vunpack.c.l.b16 %v232
      %v323 = vunpack.c.l.b16 %v233
      %v324 = vpack.c.b16 %v323, %v322
      %v327 = vunpack.c.l.b16 %v248
      %v328 = vunpack.c.l.b16 %v249
      %v329 = vpack.c.b16 %v328, %v327
      %v331 = vsel %vm272, %v324, 0
      %v334 = vsel %vm272, %v329, 0
      %336 = vmatprep.subr.bf16.mxu0 0
      %337 = vmatpush1.bf16.xpose.msra.mxu0 0
      %338 = vmatprep.subr.bf16.mxu0 0
      %339 = vmatpush1.bf16.xpose.msra.mxu0 0
      %340 = vmatprep.subr.bf16.mxu0 0
      %341 = vmatpush1.bf16.xpose.msra.mxu0 0
      %342 = vmatprep.subr.bf16.mxu0 0
      %343 = vmatpush1.bf16.xpose.msra.mxu0 0
      %344 = vmatprep.subr.bf16.mxu0 0
      %345 = vmatpush1.bf16.xpose.msra.mxu0 0
      %346 = vmatprep.subr.bf16.mxu0 0
      %347 = vmatpush1.bf16.xpose.msra.mxu0 0
      %348 = vmatprep.subr.bf16.mxu0 0
      %349 = vmatpush1.bf16.xpose.msra.mxu0 0
      %350 = vmatprep.subr.bf16.mxu0 0
      %351 = vmatpush1.bf16.xpose.msra.mxu0 %v334
      %352 = vmatprep.subr.bf16.mxu0 0
      %353 = vmatpush2.bf16.xpose.msra.mxu0 0
      %354 = vmatprep.subr.bf16.mxu0 0
      %355 = vmatpush2.bf16.xpose.msra.mxu0 0
      %356 = vmatprep.subr.bf16.mxu0 0
      %357 = vmatpush2.bf16.xpose.msra.mxu0 0
      %358 = vmatprep.subr.bf16.mxu0 0
      %359 = vmatpush2.bf16.xpose.msra.mxu0 0
      %360 = vmatprep.subr.bf16.mxu0 0
      %361 = vmatpush2.bf16.xpose.msra.mxu0 0
      %362 = vmatprep.subr.bf16.mxu0 0
      %363 = vmatpush2.bf16.xpose.msra.mxu0 0
      %364 = vmatprep.subr.bf16.mxu0 0
      %365 = vmatpush2.bf16.xpose.msra.mxu0 0
      %366 = vmatprep.subr.bf16.mxu0 0
      %367 = vmatpush2.bf16.xpose.msra.mxu0 0
      %368 = vmatprep.mubr.bf16.mxu0 0
      %369 = vmatmul.mubr.bf16.gmra.mxu0 %v331
      %v370 = vpop.f32.mrf.mxu0
      %v371 = vadd.f32 0.0, %v370
      %v372 = vpop.f32.mrf.mxu0
      %v373 = vpop.f32.mrf.mxu0
      %v374 = vadd.f32 0.0, %v373
      %v375 = vpop.f32.mrf.mxu0
      %376 = vdwg.mxu0
      %v379 = vunpack.c.l.b16 %v234
      %v380 = vunpack.c.l.b16 %v235
      %v381 = vpack.c.b16 %v380, %v379
      %v384 = vunpack.c.l.b16 %v250
      %v385 = vunpack.c.l.b16 %v251
      %v386 = vpack.c.b16 %v385, %v384
      %v388 = vsel %vm272, %v381, 0
      %v391 = vsel %vm272, %v386, 0
      %393 = vmatprep.subr.bf16.mxu0 0
      %394 = vmatpush1.bf16.xpose.msra.mxu0 0
      %395 = vmatprep.subr.bf16.mxu0 0
      %396 = vmatpush1.bf16.xpose.msra.mxu0 0
      %397 = vmatprep.subr.bf16.mxu0 0
      %398 = vmatpush1.bf16.xpose.msra.mxu0 0
      %399 = vmatprep.subr.bf16.mxu0 0
      %400 = vmatpush1.bf16.xpose.msra.mxu0 0
      %401 = vmatprep.subr.bf16.mxu0 0
      %402 = vmatpush1.bf16.xpose.msra.mxu0 0
      %403 = vmatprep.subr.bf16.mxu0 0
      %404 = vmatpush1.bf16.xpose.msra.mxu0 0
      %405 = vmatprep.subr.bf16.mxu0 0
      %406 = vmatpush1.bf16.xpose.msra.mxu0 0
      %407 = vmatprep.subr.bf16.mxu0 0
      %408 = vmatpush1.bf16.xpose.msra.mxu0 %v391
      %409 = vmatprep.subr.bf16.mxu0 0
      %410 = vmatpush2.bf16.xpose.msra.mxu0 0
      %411 = vmatprep.subr.bf16.mxu0 0
      %412 = vmatpush2.bf16.xpose.msra.mxu0 0
      %413 = vmatprep.subr.bf16.mxu0 0
      %414 = vmatpush2.bf16.xpose.msra.mxu0 0
      %415 = vmatprep.subr.bf16.mxu0 0
      %416 = vmatpush2.bf16.xpose.msra.mxu0 0
      %417 = vmatprep.subr.bf16.mxu0 0
      %418 = vmatpush2.bf16.xpose.msra.mxu0 0
      %419 = vmatprep.subr.bf16.mxu0 0
      %420 = vmatpush2.bf16.xpose.msra.mxu0 0
      %421 = vmatprep.subr.bf16.mxu0 0
      %422 = vmatpush2.bf16.xpose.msra.mxu0 0
      %423 = vmatprep.subr.bf16.mxu0 0
      %424 = vmatpush2.bf16.xpose.msra.mxu0 0
      %425 = vmatprep.mubr.bf16.mxu0 0
      %426 = vmatmul.mubr.bf16.gmra.mxu0 %v388
      %v427 = vpop.f32.mrf.mxu0
      %v428 = vadd.f32 0.0, %v427
      %v429 = vpop.f32.mrf.mxu0
      %v430 = vpop.f32.mrf.mxu0
      %v431 = vadd.f32 0.0, %v430
      %v432 = vpop.f32.mrf.mxu0
      %433 = vdwg.mxu0
      %v436 = vunpack.c.l.b16 %v236
      %v437 = vunpack.c.l.b16 %v237
      %v438 = vpack.c.b16 %v437, %v436
      %v441 = vunpack.c.l.b16 %v252
      %v442 = vunpack.c.l.b16 %v253
      %v443 = vpack.c.b16 %v442, %v441
      %v445 = vsel %vm272, %v438, 0
      %v448 = vsel %vm272, %v443, 0
      %450 = vmatprep.subr.bf16.mxu0 0
      %451 = vmatpush1.bf16.xpose.msra.mxu0 0
      %452 = vmatprep.subr.bf16.mxu0 0
      %453 = vmatpush1.bf16.xpose.msra.mxu0 0
      %454 = vmatprep.subr.bf16.mxu0 0
      %455 = vmatpush1.bf16.xpose.msra.mxu0 0
      %456 = vmatprep.subr.bf16.mxu0 0
      %457 = vmatpush1.bf16.xpose.msra.mxu0 0
      %458 = vmatprep.subr.bf16.mxu0 0
      %459 = vmatpush1.bf16.xpose.msra.mxu0 0
      %460 = vmatprep.subr.bf16.mxu0 0
      %461 = vmatpush1.bf16.xpose.msra.mxu0 0
      %462 = vmatprep.subr.bf16.mxu0 0
      %463 = vmatpush1.bf16.xpose.msra.mxu0 0
      %464 = vmatprep.subr.bf16.mxu0 0
      %465 = vmatpush1.bf16.xpose.msra.mxu0 %v448
      %466 = vmatprep.subr.bf16.mxu0 0
      %467 = vmatpush2.bf16.xpose.msra.mxu0 0
      %468 = vmatprep.subr.bf16.mxu0 0
      %469 = vmatpush2.bf16.xpose.msra.mxu0 0
      %470 = vmatprep.subr.bf16.mxu0 0
      %471 = vmatpush2.bf16.xpose.msra.mxu0 0
      %472 = vmatprep.subr.bf16.mxu0 0
      %473 = vmatpush2.bf16.xpose.msra.mxu0 0
      %474 = vmatprep.subr.bf16.mxu0 0
      %475 = vmatpush2.bf16.xpose.msra.mxu0 0
      %476 = vmatprep.subr.bf16.mxu0 0
      %477 = vmatpush2.bf16.xpose.msra.mxu0 0
      %478 = vmatprep.subr.bf16.mxu0 0
      %479 = vmatpush2.bf16.xpose.msra.mxu0 0
      %480 = vmatprep.subr.bf16.mxu0 0
      %481 = vmatpush2.bf16.xpose.msra.mxu0 0
      %482 = vmatprep.mubr.bf16.mxu0 0
      %483 = vmatmul.mubr.bf16.gmra.mxu0 %v445
      %v484 = vpop.f32.mrf.mxu0
      %v485 = vadd.f32 0.0, %v484
      %v486 = vpop.f32.mrf.mxu0
      %v487 = vpop.f32.mrf.mxu0
      %v488 = vadd.f32 0.0, %v487
      %v489 = vpop.f32.mrf.mxu0
      %490 = vdwg.mxu0
      %v493 = vunpack.c.l.b16 %v238
      %v494 = vunpack.c.l.b16 %v239
      %v495 = vpack.c.b16 %v494, %v493
      %v498 = vunpack.c.l.b16 %v254
      %v499 = vunpack.c.l.b16 %v255
      %v500 = vpack.c.b16 %v499, %v498
      %v502 = vsel %vm272, %v495, 0
      %v505 = vsel %vm272, %v500, 0
      %507 = vmatprep.subr.bf16.mxu0 0
      %508 = vmatpush1.bf16.xpose.msra.mxu0 0
      %509 = vmatprep.subr.bf16.mxu0 0
      %510 = vmatpush1.bf16.xpose.msra.mxu0 0
      %511 = vmatprep.subr.bf16.mxu0 0
      %512 = vmatpush1.bf16.xpose.msra.mxu0 0
      %513 = vmatprep.subr.bf16.mxu0 0
      %514 = vmatpush1.bf16.xpose.msra.mxu0 0
      %515 = vmatprep.subr.bf16.mxu0 0
      %516 = vmatpush1.bf16.xpose.msra.mxu0 0
      %517 = vmatprep.subr.bf16.mxu0 0
      %518 = vmatpush1.bf16.xpose.msra.mxu0 0
      %519 = vmatprep.subr.bf16.mxu0 0
      %520 = vmatpush1.bf16.xpose.msra.mxu0 0
      %521 = vmatprep.subr.bf16.mxu0 0
      %522 = vmatpush1.bf16.xpose.msra.mxu0 %v505
      %523 = vmatprep.subr.bf16.mxu0 0
      %524 = vmatpush2.bf16.xpose.msra.mxu0 0
      %525 = vmatprep.subr.bf16.mxu0 0
      %526 = vmatpush2.bf16.xpose.msra.mxu0 0
      %527 = vmatprep.subr.bf16.mxu0 0
      %528 = vmatpush2.bf16.xpose.msra.mxu0 0
      %529 = vmatprep.subr.bf16.mxu0 0
      %530 = vmatpush2.bf16.xpose.msra.mxu0 0
      %531 = vmatprep.subr.bf16.mxu0 0
      %532 = vmatpush2.bf16.xpose.msra.mxu0 0
      %533 = vmatprep.subr.bf16.mxu0 0
      %534 = vmatpush2.bf16.xpose.msra.mxu0 0
      %535 = vmatprep.subr.bf16.mxu0 0
      %536 = vmatpush2.bf16.xpose.msra.mxu0 0
      %537 = vmatprep.subr.bf16.mxu0 0
      %538 = vmatpush2.bf16.xpose.msra.mxu0 0
      %539 = vmatprep.mubr.bf16.mxu0 0
      %540 = vmatmul.mubr.bf16.gmra.mxu0 %v502
      %v541 = vpop.f32.mrf.mxu0
      %v542 = vadd.f32 0.0, %v541
      %v543 = vpop.f32.mrf.mxu0
      %v544 = vpop.f32.mrf.mxu0
      %v545 = vadd.f32 0.0, %v544
      %v546 = vpop.f32.mrf.mxu0
      %547 = vdwg.mxu0
      %v550 = vunpack.c.l.b16 %v240
      %v551 = vunpack.c.l.b16 %v241
      %v552 = vpack.c.b16 %v551, %v550
      %v555 = vunpack.c.l.b16 %v256
      %v556 = vunpack.c.l.b16 %v257
      %v557 = vpack.c.b16 %v556, %v555
      %v559 = vsel %vm272, %v552, 0
      %v562 = vsel %vm272, %v557, 0
      %564 = vmatprep.subr.bf16.mxu0 0
      %565 = vmatpush1.bf16.xpose.msra.mxu0 0
      %566 = vmatprep.subr.bf16.mxu0 0
      %567 = vmatpush1.bf16.xpose.msra.mxu0 0
      %568 = vmatprep.subr.bf16.mxu0 0
      %569 = vmatpush1.bf16.xpose.msra.mxu0 0
      %570 = vmatprep.subr.bf16.mxu0 0
      %571 = vmatpush1.bf16.xpose.msra.mxu0 0
      %572 = vmatprep.subr.bf16.mxu0 0
      %573 = vmatpush1.bf16.xpose.msra.mxu0 0
      %574 = vmatprep.subr.bf16.mxu0 0
      %575 = vmatpush1.bf16.xpose.msra.mxu0 0
      %576 = vmatprep.subr.bf16.mxu0 0
      %577 = vmatpush1.bf16.xpose.msra.mxu0 0
      %578 = vmatprep.subr.bf16.mxu0 0
      %579 = vmatpush1.bf16.xpose.msra.mxu0 %v562
      %580 = vmatprep.subr.bf16.mxu0 0
      %581 = vmatpush2.bf16.xpose.msra.mxu0 0
      %582 = vmatprep.subr.bf16.mxu0 0
      %583 = vmatpush2.bf16.xpose.msra.mxu0 0
      %584 = vmatprep.subr.bf16.mxu0 0
      %585 = vmatpush2.bf16.xpose.msra.mxu0 0
      %586 = vmatprep.subr.bf16.mxu0 0
      %587 = vmatpush2.bf16.xpose.msra.mxu0 0
      %588 = vmatprep.subr.bf16.mxu0 0
      %589 = vmatpush2.bf16.xpose.msra.mxu0 0
      %590 = vmatprep.subr.bf16.mxu0 0
      %591 = vmatpush2.bf16.xpose.msra.mxu0 0
      %592 = vmatprep.subr.bf16.mxu0 0
      %593 = vmatpush2.bf16.xpose.msra.mxu0 0
      %594 = vmatprep.subr.bf16.mxu0 0
      %595 = vmatpush2.bf16.xpose.msra.mxu0 0
      %596 = vmatprep.mubr.bf16.mxu0 0
      %597 = vmatmul.mubr.bf16.gmra.mxu0 %v559
      %v598 = vpop.f32.mrf.mxu0
      %v599 = vadd.f32 0.0, %v598
      %v600 = vpop.f32.mrf.mxu0
      %v601 = vpop.f32.mrf.mxu0
      %v602 = vadd.f32 0.0, %v601
      %v603 = vpop.f32.mrf.mxu0
      %604 = vdwg.mxu0
      %v607 = vunpack.c.l.b16 %v242
      %v608 = vunpack.c.l.b16 %v243
      %v609 = vpack.c.b16 %v608, %v607
      %v612 = vunpack.c.l.b16 %v258
      %v613 = vunpack.c.l.b16 %v259
      %v614 = vpack.c.b16 %v613, %v612
      %v616 = vsel %vm272, %v609, 0
      %v619 = vsel %vm272, %v614, 0
      %621 = vmatprep.subr.bf16.mxu0 0
      %622 = vmatpush1.bf16.xpose.msra.mxu0 0
      %623 = vmatprep.subr.bf16.mxu0 0
      %624 = vmatpush1.bf16.xpose.msra.mxu0 0
      %625 = vmatprep.subr.bf16.mxu0 0
      %626 = vmatpush1.bf16.xpose.msra.mxu0 0
      %627 = vmatprep.subr.bf16.mxu0 0
      %628 = vmatpush1.bf16.xpose.msra.mxu0 0
      %629 = vmatprep.subr.bf16.mxu0 0
      %630 = vmatpush1.bf16.xpose.msra.mxu0 0
      %631 = vmatprep.subr.bf16.mxu0 0
      %632 = vmatpush1.bf16.xpose.msra.mxu0 0
      %633 = vmatprep.subr.bf16.mxu0 0
      %634 = vmatpush1.bf16.xpose.msra.mxu0 0
      %635 = vmatprep.subr.bf16.mxu0 0
      %636 = vmatpush1.bf16.xpose.msra.mxu0 %v619
      %637 = vmatprep.subr.bf16.mxu0 0
      %638 = vmatpush2.bf16.xpose.msra.mxu0 0
      %639 = vmatprep.subr.bf16.mxu0 0
      %640 = vmatpush2.bf16.xpose.msra.mxu0 0
      %641 = vmatprep.subr.bf16.mxu0 0
      %642 = vmatpush2.bf16.xpose.msra.mxu0 0
      %643 = vmatprep.subr.bf16.mxu0 0
      %644 = vmatpush2.bf16.xpose.msra.mxu0 0
      %645 = vmatprep.subr.bf16.mxu0 0
      %646 = vmatpush2.bf16.xpose.msra.mxu0 0
      %647 = vmatprep.subr.bf16.mxu0 0
      %648 = vmatpush2.bf16.xpose.msra.mxu0 0
      %649 = vmatprep.subr.bf16.mxu0 0
      %650 = vmatpush2.bf16.xpose.msra.mxu0 0
      %651 = vmatprep.subr.bf16.mxu0 0
      %652 = vmatpush2.bf16.xpose.msra.mxu0 0
      %653 = vmatprep.mubr.bf16.mxu0 0
      %654 = vmatmul.mubr.bf16.gmra.mxu0 %v616
      %v655 = vpop.f32.mrf.mxu0
      %v656 = vadd.f32 0.0, %v655
      %v657 = vpop.f32.mrf.mxu0
      %v658 = vpop.f32.mrf.mxu0
      %v659 = vadd.f32 0.0, %v658
      %v660 = vpop.f32.mrf.mxu0
      %661 = vdwg.mxu0
      %v664 = vunpack.c.l.b16 %v244
      %v665 = vunpack.c.l.b16 %v245
      %v666 = vpack.c.b16 %v665, %v664
      %v669 = vunpack.c.l.b16 %v260
      %v670 = vunpack.c.l.b16 %v261
      %v671 = vpack.c.b16 %v670, %v669
      %v673 = vsel %vm272, %v666, 0
      %v676 = vsel %vm272, %v671, 0
      %678 = vmatprep.subr.bf16.mxu0 0
      %679 = vmatpush1.bf16.xpose.msra.mxu0 0
      %680 = vmatprep.subr.bf16.mxu0 0
      %681 = vmatpush1.bf16.xpose.msra.mxu0 0
      %682 = vmatprep.subr.bf16.mxu0 0
      %683 = vmatpush1.bf16.xpose.msra.mxu0 0
      %684 = vmatprep.subr.bf16.mxu0 0
      %685 = vmatpush1.bf16.xpose.msra.mxu0 0
      %686 = vmatprep.subr.bf16.mxu0 0
      %687 = vmatpush1.bf16.xpose.msra.mxu0 0
      %688 = vmatprep.subr.bf16.mxu0 0
      %689 = vmatpush1.bf16.xpose.msra.mxu0 0
      %690 = vmatprep.subr.bf16.mxu0 0
      %691 = vmatpush1.bf16.xpose.msra.mxu0 0
      %692 = vmatprep.subr.bf16.mxu0 0
      %693 = vmatpush1.bf16.xpose.msra.mxu0 %v676
      %694 = vmatprep.subr.bf16.mxu0 0
      %695 = vmatpush2.bf16.xpose.msra.mxu0 0
      %696 = vmatprep.subr.bf16.mxu0 0
      %697 = vmatpush2.bf16.xpose.msra.mxu0 0
      %698 = vmatprep.subr.bf16.mxu0 0
      %699 = vmatpush2.bf16.xpose.msra.mxu0 0
      %700 = vmatprep.subr.bf16.mxu0 0
      %701 = vmatpush2.bf16.xpose.msra.mxu0 0
      %702 = vmatprep.subr.bf16.mxu0 0
      %703 = vmatpush2.bf16.xpose.msra.mxu0 0
      %704 = vmatprep.subr.bf16.mxu0 0
      %705 = vmatpush2.bf16.xpose.msra.mxu0 0
      %706 = vmatprep.subr.bf16.mxu0 0
      %707 = vmatpush2.bf16.xpose.msra.mxu0 0
      %708 = vmatprep.subr.bf16.mxu0 0
      %709 = vmatpush2.bf16.xpose.msra.mxu0 0
      %710 = vmatprep.mubr.bf16.mxu0 0
      %711 = vmatmul.mubr.bf16.gmra.mxu0 %v673
      %v712 = vpop.f32.mrf.mxu0
      %v713 = vadd.f32 0.0, %v712
      %v714 = vpop.f32.mrf.mxu0
      %v715 = vpop.f32.mrf.mxu0
      %v716 = vadd.f32 0.0, %v715
      %v717 = vpop.f32.mrf.mxu0
      %718 = vdwg.mxu0
      %vm719 = vcmask 130048
      %v720 = vsel %vm719, %v314, -inf
      %721 = vmax.xlane.f32.xlu0 %v720
      %v722 = vpop.xlane.xlu0 %721
      %v723 = vsel %vm719, %v317, -inf
      %724 = vmax.xlane.f32.xlu0 %v723
      %v725 = vpop.xlane.xlu0 %724
      %v726 = vsel %vm719, %v371, -inf
      %727 = vmax.xlane.f32.xlu0 %v726
      %v728 = vpop.xlane.xlu0 %727
      %v729 = vsel %vm719, %v374, -inf
      %730 = vmax.xlane.f32.xlu0 %v729
      %v731 = vpop.xlane.xlu0 %730
      %v732 = vsel %vm719, %v428, -inf
      %733 = vmax.xlane.f32.xlu0 %v732
      %v734 = vpop.xlane.xlu0 %733
      %v735 = vsel %vm719, %v431, -inf
      %736 = vmax.xlane.f32.xlu0 %v735
      %v737 = vpop.xlane.xlu0 %736
      %v738 = vsel %vm719, %v485, -inf
      %739 = vmax.xlane.f32.xlu0 %v738
      %v740 = vpop.xlane.xlu0 %739
      %v741 = vsel %vm719, %v488, -inf
      %742 = vmax.xlane.f32.xlu0 %v741
      %v743 = vpop.xlane.xlu0 %742
      %v744 = vsel %vm719, %v542, -inf
      %745 = vmax.xlane.f32.xlu0 %v744
      %v746 = vpop.xlane.xlu0 %745
      %v747 = vsel %vm719, %v545, -inf
      %748 = vmax.xlane.f32.xlu0 %v747
      %v749 = vpop.xlane.xlu0 %748
      %v750 = vsel %vm719, %v599, -inf
      %751 = vmax.xlane.f32.xlu0 %v750
      %v752 = vpop.xlane.xlu0 %751
      %v753 = vsel %vm719, %v602, -inf
      %754 = vmax.xlane.f32.xlu0 %v753
      %v755 = vpop.xlane.xlu0 %754
      %v756 = vsel %vm719, %v656, -inf
      %757 = vmax.xlane.f32.xlu0 %v756
      %v758 = vpop.xlane.xlu0 %757
      %v759 = vsel %vm719, %v659, -inf
      %760 = vmax.xlane.f32.xlu0 %v759
      %v761 = vpop.xlane.xlu0 %760
      %v762 = vsel %vm719, %v713, -inf
      %763 = vmax.xlane.f32.xlu0 %v762
      %v764 = vpop.xlane.xlu0 %763
      %v765 = vsel %vm719, %v716, -inf
      %766 = vmax.xlane.f32.xlu0 %v765
      %v767 = vpop.xlane.xlu0 %766
      %v768 = vsub.f32 %v314, %v722
      %v769 = vsub.f32 %v317, %v725
      %v770 = vsub.f32 %v371, %v728
      %v771 = vsub.f32 %v374, %v731
      %v772 = vsub.f32 %v428, %v734
      %v773 = vsub.f32 %v431, %v737
      %v774 = vsub.f32 %v485, %v740
      %v775 = vsub.f32 %v488, %v743
      %v776 = vsub.f32 %v542, %v746
      %v777 = vsub.f32 %v545, %v749
      %v778 = vsub.f32 %v599, %v752
      %v779 = vsub.f32 %v602, %v755
      %v780 = vsub.f32 %v656, %v758
      %v781 = vsub.f32 %v659, %v761
      %v782 = vsub.f32 %v713, %v764
      %v783 = vsub.f32 %v716, %v767
      %v784 = vmul.f32 %v768, 1.442695
      %v785 = vpow.pop %v784
      %v786 = vmul.f32 %v769, 1.442695
      %v787 = vpow.pop %v786
      %v788 = vmul.f32 %v770, 1.442695
      %v789 = vpow.pop %v788
      %v790 = vmul.f32 %v771, 1.442695
      %v791 = vpow.pop %v790
      %v792 = vmul.f32 %v772, 1.442695
      %v793 = vpow.pop %v792
      %v794 = vmul.f32 %v773, 1.442695
      %v795 = vpow.pop %v794
      %v796 = vmul.f32 %v774, 1.442695
      %v797 = vpow.pop %v796
      %v798 = vmul.f32 %v775, 1.442695
      %v799 = vpow.pop %v798
      %v800 = vmul.f32 %v776, 1.442695
      %v801 = vpow.pop %v800
      %v802 = vmul.f32 %v777, 1.442695
      %v803 = vpow.pop %v802
      %v804 = vmul.f32 %v778, 1.442695
      %v805 = vpow.pop %v804
      %v806 = vmul.f32 %v779, 1.442695
      %v807 = vpow.pop %v806
      %v808 = vmul.f32 %v780, 1.442695
      %v809 = vpow.pop %v808
      %v810 = vmul.f32 %v781, 1.442695
      %v811 = vpow.pop %v810
      %v812 = vmul.f32 %v782, 1.442695
      %v813 = vpow.pop %v812
      %v814 = vmul.f32 %v783, 1.442695
      %v815 = vpow.pop %v814
      %v816 = vsel %vm719, %v785, 0.0
      %817 = vadd.xlane.f32.xlu0 %v816
      %v818 = vpop.xlane.xlu0 %817
      %v819 = vsel %vm719, %v787, 0.0
      %820 = vadd.xlane.f32.xlu0 %v819
      %v821 = vpop.xlane.xlu0 %820
      %v822 = vsel %vm719, %v789, 0.0
      %823 = vadd.xlane.f32.xlu0 %v822
      %v824 = vpop.xlane.xlu0 %823
      %v825 = vsel %vm719, %v791, 0.0
      %826 = vadd.xlane.f32.xlu0 %v825
      %v827 = vpop.xlane.xlu0 %826
      %v828 = vsel %vm719, %v793, 0.0
      %829 = vadd.xlane.f32.xlu0 %v828
      %v830 = vpop.xlane.xlu0 %829
      %v831 = vsel %vm719, %v795, 0.0
      %832 = vadd.xlane.f32.xlu0 %v831
      %v833 = vpop.xlane.xlu0 %832
      %v834 = vsel %vm719, %v797, 0.0
      %835 = vadd.xlane.f32.xlu0 %v834
      %v836 = vpop.xlane.xlu0 %835
      %v837 = vsel %vm719, %v799, 0.0
      %838 = vadd.xlane.f32.xlu0 %v837
      %v839 = vpop.xlane.xlu0 %838
      %v840 = vsel %vm719, %v801, 0.0
      %841 = vadd.xlane.f32.xlu0 %v840
      %v842 = vpop.xlane.xlu0 %841
      %v843 = vsel %vm719, %v803, 0.0
      %844 = vadd.xlane.f32.xlu0 %v843
      %v845 = vpop.xlane.xlu0 %844
      %v846 = vsel %vm719, %v805, 0.0
      %847 = vadd.xlane.f32.xlu0 %v846
      %v848 = vpop.xlane.xlu0 %847
      %v849 = vsel %vm719, %v807, 0.0
      %850 = vadd.xlane.f32.xlu0 %v849
      %v851 = vpop.xlane.xlu0 %850
      %v852 = vsel %vm719, %v809, 0.0
      %853 = vadd.xlane.f32.xlu0 %v852
      %v854 = vpop.xlane.xlu0 %853
      %v855 = vsel %vm719, %v811, 0.0
      %856 = vadd.xlane.f32.xlu0 %v855
      %v857 = vpop.xlane.xlu0 %856
      %v858 = vsel %vm719, %v813, 0.0
      %859 = vadd.xlane.f32.xlu0 %v858
      %v860 = vpop.xlane.xlu0 %859
      %v861 = vsel %vm719, %v815, 0.0
      %862 = vadd.xlane.f32.xlu0 %v861
      %v863 = vpop.xlane.xlu0 %862
      %v864 = vrcp.pop %v818
      %v865 = vmul.f32 %v785, %v864
      %v866 = vrcp.pop %v821
      %v867 = vmul.f32 %v787, %v866
      %v868 = vrcp.pop %v824
      %v869 = vmul.f32 %v789, %v868
      %v870 = vrcp.pop %v827
      %v871 = vmul.f32 %v791, %v870
      %v872 = vrcp.pop %v830
      %v873 = vmul.f32 %v793, %v872
      %v874 = vrcp.pop %v833
      %v875 = vmul.f32 %v795, %v874
      %v876 = vrcp.pop %v836
      %v877 = vmul.f32 %v797, %v876
      %v878 = vrcp.pop %v839
      %v879 = vmul.f32 %v799, %v878
      %v880 = vrcp.pop %v842
      %v881 = vmul.f32 %v801, %v880
      %v882 = vrcp.pop %v845
      %v883 = vmul.f32 %v803, %v882
      %v884 = vrcp.pop %v848
      %v885 = vmul.f32 %v805, %v884
      %v886 = vrcp.pop %v851
      %v887 = vmul.f32 %v807, %v886
      %v888 = vrcp.pop %v854
      %v889 = vmul.f32 %v809, %v888
      %v890 = vrcp.pop %v857
      %v891 = vmul.f32 %v811, %v890
      %v892 = vrcp.pop %v860
      %v893 = vmul.f32 %v813, %v892
      %v894 = vrcp.pop %v863
      %v895 = vmul.f32 %v815, %v894
      %v896 = vpack.c.bf16 %v867, %v865
      %v897 = vpack.c.bf16 %v871, %v869
      %v898 = vpack.c.bf16 %v875, %v873
      %v899 = vpack.c.bf16 %v879, %v877
      %v900 = vpack.c.bf16 %v883, %v881
      %v901 = vpack.c.bf16 %v887, %v885
      %v902 = vpack.c.bf16 %v891, %v889
      %v903 = vpack.c.bf16 %v895, %v893
      %v904 = vld [vmem:[%s220] sm:$0xf]
      %v905 = vld [vmem:[%s220 + $0x4] sm:$0xf]
      %v906 = vld [vmem:[%s220 + $0x8] sm:$0xf]
      %v907 = vld [vmem:[%s220 + $0xc] sm:$0xf]
      %v908 = vld [vmem:[%s220 + $0x10] sm:$0xf]
      %v909 = vld [vmem:[%s220 + $0x14] sm:$0xf]
      %v910 = vld [vmem:[%s220 + $0x18] sm:$0xf]
      %v911 = vld [vmem:[%s220 + $0x1c] sm:$0xf]
      %v912 = vld [vmem:[%s220 + $0x20] sm:$0xf]
      %v913 = vld [vmem:[%s220 + $0x24] sm:$0xf]
      %v914 = vld [vmem:[%s220 + $0x28] sm:$0xf]
      %v915 = vld [vmem:[%s220 + $0x2c] sm:$0xf]
      %v916 = vld [vmem:[%s220 + $0x30] sm:$0xf]
      %v917 = vld [vmem:[%s220 + $0x34] sm:$0xf]
      %v918 = vld [vmem:[%s220 + $0x38] sm:$0xf]
      %v919 = vld [vmem:[%s220 + $0x3c] sm:$0xf]
      %v922 = vunpack.c.l.b16 %v904
      %v923 = vunpack.c.l.b16 %v905
      %v924 = vpack.c.b16 %v923, %v922
      %v927 = vsel %vm719, %v896, 0
      %929 = vmatprep.subr.bf16.mxu0 0
      %930 = vmatpush1.bf16.msra.mxu0 0
      %931 = vmatprep.subr.bf16.mxu0 0
      %932 = vmatpush1.bf16.msra.mxu0 0
      %933 = vmatprep.subr.bf16.mxu0 0
      %934 = vmatpush1.bf16.msra.mxu0 0
      %935 = vmatprep.subr.bf16.mxu0 0
      %936 = vmatpush1.bf16.msra.mxu0 0
      %937 = vmatprep.subr.bf16.mxu0 0
      %938 = vmatpush1.bf16.msra.mxu0 0
      %939 = vmatprep.subr.bf16.mxu0 0
      %940 = vmatpush1.bf16.msra.mxu0 0
      %941 = vmatprep.subr.bf16.mxu0 0
      %942 = vmatpush1.bf16.msra.mxu0 0
      %943 = vmatprep.subr.bf16.mxu0 0
      %944 = vmatpush1.bf16.msra.mxu0 %v924
      %945 = vmatprep.subr.bf16.mxu0 0
      %946 = vmatpush2.bf16.msra.mxu0 0
      %947 = vmatprep.subr.bf16.mxu0 0
      %948 = vmatpush2.bf16.msra.mxu0 0
      %949 = vmatprep.subr.bf16.mxu0 0
      %950 = vmatpush2.bf16.msra.mxu0 0
      %951 = vmatprep.subr.bf16.mxu0 0
      %952 = vmatpush2.bf16.msra.mxu0 0
      %953 = vmatprep.subr.bf16.mxu0 0
      %954 = vmatpush2.bf16.msra.mxu0 0
      %955 = vmatprep.subr.bf16.mxu0 0
      %956 = vmatpush2.bf16.msra.mxu0 0
      %957 = vmatprep.subr.bf16.mxu0 0
      %958 = vmatpush2.bf16.msra.mxu0 0
      %959 = vmatprep.subr.bf16.mxu0 0
      %960 = vmatpush2.bf16.msra.mxu0 0
      %961 = vmatprep.mubr.bf16.mxu0 0
      %962 = vmatmul.mubr.bf16.gmra.mxu0 %v927
      %v963 = vpop.f32.mrf.mxu0
      %v964 = vadd.f32 0.0, %v963
      %v965 = vpop.f32.mrf.mxu0
      %v966 = vpop.f32.mrf.mxu0
      %v967 = vadd.f32 0.0, %v966
      %v968 = vpop.f32.mrf.mxu0
      %969 = vdwg.mxu0
      %v972 = vunpack.c.l.b16 %v906
      %v973 = vunpack.c.l.b16 %v907
      %v974 = vpack.c.b16 %v973, %v972
      %v977 = vsel %vm719, %v897, 0
      %979 = vmatprep.subr.bf16.mxu0 0
      %980 = vmatpush1.bf16.msra.mxu0 0
      %981 = vmatprep.subr.bf16.mxu0 0
      %982 = vmatpush1.bf16.msra.mxu0 0
      %983 = vmatprep.subr.bf16.mxu0 0
      %984 = vmatpush1.bf16.msra.mxu0 0
      %985 = vmatprep.subr.bf16.mxu0 0
      %986 = vmatpush1.bf16.msra.mxu0 0
      %987 = vmatprep.subr.bf16.mxu0 0
      %988 = vmatpush1.bf16.msra.mxu0 0
      %989 = vmatprep.subr.bf16.mxu0 0
      %990 = vmatpush1.bf16.msra.mxu0 0
      %991 = vmatprep.subr.bf16.mxu0 0
      %992 = vmatpush1.bf16.msra.mxu0 0
      %993 = vmatprep.subr.bf16.mxu0 0
      %994 = vmatpush1.bf16.msra.mxu0 %v974
      %995 = vmatprep.subr.bf16.mxu0 0
      %996 = vmatpush2.bf16.msra.mxu0 0
      %997 = vmatprep.subr.bf16.mxu0 0
      %998 = vmatpush2.bf16.msra.mxu0 0
      %999 = vmatprep.subr.bf16.mxu0 0
      %1000 = vmatpush2.bf16.msra.mxu0 0
      %1001 = vmatprep.subr.bf16.mxu0 0
      %1002 = vmatpush2.bf16.msra.mxu0 0
      %1003 = vmatprep.subr.bf16.mxu0 0
      %1004 = vmatpush2.bf16.msra.mxu0 0
      %1005 = vmatprep.subr.bf16.mxu0 0
      %1006 = vmatpush2.bf16.msra.mxu0 0
      %1007 = vmatprep.subr.bf16.mxu0 0
      %1008 = vmatpush2.bf16.msra.mxu0 0
      %1009 = vmatprep.subr.bf16.mxu0 0
      %1010 = vmatpush2.bf16.msra.mxu0 0
      %1011 = vmatprep.mubr.bf16.mxu0 0
      %1012 = vmatmul.mubr.bf16.gmra.mxu0 %v977
      %v1013 = vpop.f32.mrf.mxu0
      %v1014 = vadd.f32 0.0, %v1013
      %v1015 = vpop.f32.mrf.mxu0
      %v1016 = vpop.f32.mrf.mxu0
      %v1017 = vadd.f32 0.0, %v1016
      %v1018 = vpop.f32.mrf.mxu0
      %1019 = vdwg.mxu0
      %v1022 = vunpack.c.l.b16 %v908
      %v1023 = vunpack.c.l.b16 %v909
      %v1024 = vpack.c.b16 %v1023, %v1022
      %v1027 = vsel %vm719, %v898, 0
      %1029 = vmatprep.subr.bf16.mxu0 0
      %1030 = vmatpush1.bf16.msra.mxu0 0
      %1031 = vmatprep.subr.bf16.mxu0 0
      %1032 = vmatpush1.bf16.msra.mxu0 0
      %1033 = vmatprep.subr.bf16.mxu0 0
      %1034 = vmatpush1.bf16.msra.mxu0 0
      %1035 = vmatprep.subr.bf16.mxu0 0
      %1036 = vmatpush1.bf16.msra.mxu0 0
      %1037 = vmatprep.subr.bf16.mxu0 0
      %1038 = vmatpush1.bf16.msra.mxu0 0
      %1039 = vmatprep.subr.bf16.mxu0 0
      %1040 = vmatpush1.bf16.msra.mxu0 0
      %1041 = vmatprep.subr.bf16.mxu0 0
      %1042 = vmatpush1.bf16.msra.mxu0 0
      %1043 = vmatprep.subr.bf16.mxu0 0
      %1044 = vmatpush1.bf16.msra.mxu0 %v1024
      %1045 = vmatprep.subr.bf16.mxu0 0
      %1046 = vmatpush2.bf16.msra.mxu0 0
      %1047 = vmatprep.subr.bf16.mxu0 0
      %1048 = vmatpush2.bf16.msra.mxu0 0
      %1049 = vmatprep.subr.bf16.mxu0 0
      %1050 = vmatpush2.bf16.msra.mxu0 0
      %1051 = vmatprep.subr.bf16.mxu0 0
      %1052 = vmatpush2.bf16.msra.mxu0 0
      %1053 = vmatprep.subr.bf16.mxu0 0
      %1054 = vmatpush2.bf16.msra.mxu0 0
      %1055 = vmatprep.subr.bf16.mxu0 0
      %1056 = vmatpush2.bf16.msra.mxu0 0
      %1057 = vmatprep.subr.bf16.mxu0 0
      %1058 = vmatpush2.bf16.msra.mxu0 0
      %1059 = vmatprep.subr.bf16.mxu0 0
      %1060 = vmatpush2.bf16.msra.mxu0 0
      %1061 = vmatprep.mubr.bf16.mxu0 0
      %1062 = vmatmul.mubr.bf16.gmra.mxu0 %v1027
      %v1063 = vpop.f32.mrf.mxu0
      %v1064 = vadd.f32 0.0, %v1063
      %v1065 = vpop.f32.mrf.mxu0
      %v1066 = vpop.f32.mrf.mxu0
      %v1067 = vadd.f32 0.0, %v1066
      %v1068 = vpop.f32.mrf.mxu0
      %1069 = vdwg.mxu0
      %v1072 = vunpack.c.l.b16 %v910
      %v1073 = vunpack.c.l.b16 %v911
      %v1074 = vpack.c.b16 %v1073, %v1072
      %v1077 = vsel %vm719, %v899, 0
      %1079 = vmatprep.subr.bf16.mxu0 0
      %1080 = vmatpush1.bf16.msra.mxu0 0
      %1081 = vmatprep.subr.bf16.mxu0 0
      %1082 = vmatpush1.bf16.msra.mxu0 0
      %1083 = vmatprep.subr.bf16.mxu0 0
      %1084 = vmatpush1.bf16.msra.mxu0 0
      %1085 = vmatprep.subr.bf16.mxu0 0
      %1086 = vmatpush1.bf16.msra.mxu0 0
      %1087 = vmatprep.subr.bf16.mxu0 0
      %1088 = vmatpush1.bf16.msra.mxu0 0
      %1089 = vmatprep.subr.bf16.mxu0 0
      %1090 = vmatpush1.bf16.msra.mxu0 0
      %1091 = vmatprep.subr.bf16.mxu0 0
      %1092 = vmatpush1.bf16.msra.mxu0 0
      %1093 = vmatprep.subr.bf16.mxu0 0
      %1094 = vmatpush1.bf16.msra.mxu0 %v1074
      %1095 = vmatprep.subr.bf16.mxu0 0
      %1096 = vmatpush2.bf16.msra.mxu0 0
      %1097 = vmatprep.subr.bf16.mxu0 0
      %1098 = vmatpush2.bf16.msra.mxu0 0
      %1099 = vmatprep.subr.bf16.mxu0 0
      %1100 = vmatpush2.bf16.msra.mxu0 0
      %1101 = vmatprep.subr.bf16.mxu0 0
      %1102 = vmatpush2.bf16.msra.mxu0 0
      %1103 = vmatprep.subr.bf16.mxu0 0
      %1104 = vmatpush2.bf16.msra.mxu0 0
      %1105 = vmatprep.subr.bf16.mxu0 0
      %1106 = vmatpush2.bf16.msra.mxu0 0
      %1107 = vmatprep.subr.bf16.mxu0 0
      %1108 = vmatpush2.bf16.msra.mxu0 0
      %1109 = vmatprep.subr.bf16.mxu0 0
      %1110 = vmatpush2.bf16.msra.mxu0 0
      %1111 = vmatprep.mubr.bf16.mxu0 0
      %1112 = vmatmul.mubr.bf16.gmra.mxu0 %v1077
      %v1113 = vpop.f32.mrf.mxu0
      %v1114 = vadd.f32 0.0, %v1113
      %v1115 = vpop.f32.mrf.mxu0
      %v1116 = vpop.f32.mrf.mxu0
      %v1117 = vadd.f32 0.0, %v1116
      %v1118 = vpop.f32.mrf.mxu0
      %1119 = vdwg.mxu0
      %v1122 = vunpack.c.l.b16 %v912
      %v1123 = vunpack.c.l.b16 %v913
      %v1124 = vpack.c.b16 %v1123, %v1122
      %v1127 = vsel %vm719, %v900, 0
      %1129 = vmatprep.subr.bf16.mxu0 0
      %1130 = vmatpush1.bf16.msra.mxu0 0
      %1131 = vmatprep.subr.bf16.mxu0 0
      %1132 = vmatpush1.bf16.msra.mxu0 0
      %1133 = vmatprep.subr.bf16.mxu0 0
      %1134 = vmatpush1.bf16.msra.mxu0 0
      %1135 = vmatprep.subr.bf16.mxu0 0
      %1136 = vmatpush1.bf16.msra.mxu0 0
      %1137 = vmatprep.subr.bf16.mxu0 0
      %1138 = vmatpush1.bf16.msra.mxu0 0
      %1139 = vmatprep.subr.bf16.mxu0 0
      %1140 = vmatpush1.bf16.msra.mxu0 0
      %1141 = vmatprep.subr.bf16.mxu0 0
      %1142 = vmatpush1.bf16.msra.mxu0 0
      %1143 = vmatprep.subr.bf16.mxu0 0
      %1144 = vmatpush1.bf16.msra.mxu0 %v1124
      %1145 = vmatprep.subr.bf16.mxu0 0
      %1146 = vmatpush2.bf16.msra.mxu0 0
      %1147 = vmatprep.subr.bf16.mxu0 0
      %1148 = vmatpush2.bf16.msra.mxu0 0
      %1149 = vmatprep.subr.bf16.mxu0 0
      %1150 = vmatpush2.bf16.msra.mxu0 0
      %1151 = vmatprep.subr.bf16.mxu0 0
      %1152 = vmatpush2.bf16.msra.mxu0 0
      %1153 = vmatprep.subr.bf16.mxu0 0
      %1154 = vmatpush2.bf16.msra.mxu0 0
      %1155 = vmatprep.subr.bf16.mxu0 0
      %1156 = vmatpush2.bf16.msra.mxu0 0
      %1157 = vmatprep.subr.bf16.mxu0 0
      %1158 = vmatpush2.bf16.msra.mxu0 0
      %1159 = vmatprep.subr.bf16.mxu0 0
      %1160 = vmatpush2.bf16.msra.mxu0 0
      %1161 = vmatprep.mubr.bf16.mxu0 0
      %1162 = vmatmul.mubr.bf16.gmra.mxu0 %v1127
      %v1163 = vpop.f32.mrf.mxu0
      %v1164 = vadd.f32 0.0, %v1163
      %v1165 = vpop.f32.mrf.mxu0
      %v1166 = vpop.f32.mrf.mxu0
      %v1167 = vadd.f32 0.0, %v1166
      %v1168 = vpop.f32.mrf.mxu0
      %1169 = vdwg.mxu0
      %v1172 = vunpack.c.l.b16 %v914
      %v1173 = vunpack.c.l.b16 %v915
      %v1174 = vpack.c.b16 %v1173, %v1172
      %v1177 = vsel %vm719, %v901, 0
      %1179 = vmatprep.subr.bf16.mxu0 0
      %1180 = vmatpush1.bf16.msra.mxu0 0
      %1181 = vmatprep.subr.bf16.mxu0 0
      %1182 = vmatpush1.bf16.msra.mxu0 0
      %1183 = vmatprep.subr.bf16.mxu0 0
      %1184 = vmatpush1.bf16.msra.mxu0 0
      %1185 = vmatprep.subr.bf16.mxu0 0
      %1186 = vmatpush1.bf16.msra.mxu0 0
      %1187 = vmatprep.subr.bf16.mxu0 0
      %1188 = vmatpush1.bf16.msra.mxu0 0
      %1189 = vmatprep.subr.bf16.mxu0 0
      %1190 = vmatpush1.bf16.msra.mxu0 0
      %1191 = vmatprep.subr.bf16.mxu0 0
      %1192 = vmatpush1.bf16.msra.mxu0 0
      %1193 = vmatprep.subr.bf16.mxu0 0
      %1194 = vmatpush1.bf16.msra.mxu0 %v1174
      %1195 = vmatprep.subr.bf16.mxu0 0
      %1196 = vmatpush2.bf16.msra.mxu0 0
      %1197 = vmatprep.subr.bf16.mxu0 0
      %1198 = vmatpush2.bf16.msra.mxu0 0
      %1199 = vmatprep.subr.bf16.mxu0 0
      %1200 = vmatpush2.bf16.msra.mxu0 0
      %1201 = vmatprep.subr.bf16.mxu0 0
      %1202 = vmatpush2.bf16.msra.mxu0 0
      %1203 = vmatprep.subr.bf16.mxu0 0
      %1204 = vmatpush2.bf16.msra.mxu0 0
      %1205 = vmatprep.subr.bf16.mxu0 0
      %1206 = vmatpush2.bf16.msra.mxu0 0
      %1207 = vmatprep.subr.bf16.mxu0 0
      %1208 = vmatpush2.bf16.msra.mxu0 0
      %1209 = vmatprep.subr.bf16.mxu0 0
      %1210 = vmatpush2.bf16.msra.mxu0 0
      %1211 = vmatprep.mubr.bf16.mxu0 0
      %1212 = vmatmul.mubr.bf16.gmra.mxu0 %v1177
      %v1213 = vpop.f32.mrf.mxu0
      %v1214 = vadd.f32 0.0, %v1213
      %v1215 = vpop.f32.mrf.mxu0
      %v1216 = vpop.f32.mrf.mxu0
      %v1217 = vadd.f32 0.0, %v1216
      %v1218 = vpop.f32.mrf.mxu0
      %1219 = vdwg.mxu0
      %v1222 = vunpack.c.l.b16 %v916
      %v1223 = vunpack.c.l.b16 %v917
      %v1224 = vpack.c.b16 %v1223, %v1222
      %v1227 = vsel %vm719, %v902, 0
      %1229 = vmatprep.subr.bf16.mxu0 0
      %1230 = vmatpush1.bf16.msra.mxu0 0
      %1231 = vmatprep.subr.bf16.mxu0 0
      %1232 = vmatpush1.bf16.msra.mxu0 0
      %1233 = vmatprep.subr.bf16.mxu0 0
      %1234 = vmatpush1.bf16.msra.mxu0 0
      %1235 = vmatprep.subr.bf16.mxu0 0
      %1236 = vmatpush1.bf16.msra.mxu0 0
      %1237 = vmatprep.subr.bf16.mxu0 0
      %1238 = vmatpush1.bf16.msra.mxu0 0
      %1239 = vmatprep.subr.bf16.mxu0 0
      %1240 = vmatpush1.bf16.msra.mxu0 0
      %1241 = vmatprep.subr.bf16.mxu0 0
      %1242 = vmatpush1.bf16.msra.mxu0 0
      %1243 = vmatprep.subr.bf16.mxu0 0
      %1244 = vmatpush1.bf16.msra.mxu0 %v1224
      %1245 = vmatprep.subr.bf16.mxu0 0
      %1246 = vmatpush2.bf16.msra.mxu0 0
      %1247 = vmatprep.subr.bf16.mxu0 0
      %1248 = vmatpush2.bf16.msra.mxu0 0
      %1249 = vmatprep.subr.bf16.mxu0 0
      %1250 = vmatpush2.bf16.msra.mxu0 0
      %1251 = vmatprep.subr.bf16.mxu0 0
      %1252 = vmatpush2.bf16.msra.mxu0 0
      %1253 = vmatprep.subr.bf16.mxu0 0
      %1254 = vmatpush2.bf16.msra.mxu0 0
      %1255 = vmatprep.subr.bf16.mxu0 0
      %1256 = vmatpush2.bf16.msra.mxu0 0
      %1257 = vmatprep.subr.bf16.mxu0 0
      %1258 = vmatpush2.bf16.msra.mxu0 0
      %1259 = vmatprep.subr.bf16.mxu0 0
      %1260 = vmatpush2.bf16.msra.mxu0 0
      %1261 = vmatprep.mubr.bf16.mxu0 0
      %1262 = vmatmul.mubr.bf16.gmra.mxu0 %v1227
      %v1263 = vpop.f32.mrf.mxu0
      %v1264 = vadd.f32 0.0, %v1263
      %v1265 = vpop.f32.mrf.mxu0
      %v1266 = vpop.f32.mrf.mxu0
      %v1267 = vadd.f32 0.0, %v1266
      %v1268 = vpop.f32.mrf.mxu0
      %1269 = vdwg.mxu0
      %v1272 = vunpack.c.l.b16 %v918
      %v1273 = vunpack.c.l.b16 %v919
      %v1274 = vpack.c.b16 %v1273, %v1272
      %v1277 = vsel %vm719, %v903, 0
      %1279 = vmatprep.subr.bf16.mxu0 0
      %1280 = vmatpush1.bf16.msra.mxu0 0
      %1281 = vmatprep.subr.bf16.mxu0 0
      %1282 = vmatpush1.bf16.msra.mxu0 0
      %1283 = vmatprep.subr.bf16.mxu0 0
      %1284 = vmatpush1.bf16.msra.mxu0 0
      %1285 = vmatprep.subr.bf16.mxu0 0
      %1286 = vmatpush1.bf16.msra.mxu0 0
      %1287 = vmatprep.subr.bf16.mxu0 0
      %1288 = vmatpush1.bf16.msra.mxu0 0
      %1289 = vmatprep.subr.bf16.mxu0 0
      %1290 = vmatpush1.bf16.msra.mxu0 0
      %1291 = vmatprep.subr.bf16.mxu0 0
      %1292 = vmatpush1.bf16.msra.mxu0 0
      %1293 = vmatprep.subr.bf16.mxu0 0
      %1294 = vmatpush1.bf16.msra.mxu0 %v1274
      %1295 = vmatprep.subr.bf16.mxu0 0
      %1296 = vmatpush2.bf16.msra.mxu0 0
      %1297 = vmatprep.subr.bf16.mxu0 0
      %1298 = vmatpush2.bf16.msra.mxu0 0
      %1299 = vmatprep.subr.bf16.mxu0 0
      %1300 = vmatpush2.bf16.msra.mxu0 0
      %1301 = vmatprep.subr.bf16.mxu0 0
      %1302 = vmatpush2.bf16.msra.mxu0 0
      %1303 = vmatprep.subr.bf16.mxu0 0
      %1304 = vmatpush2.bf16.msra.mxu0 0
      %1305 = vmatprep.subr.bf16.mxu0 0
      %1306 = vmatpush2.bf16.msra.mxu0 0
      %1307 = vmatprep.subr.bf16.mxu0 0
      %1308 = vmatpush2.bf16.msra.mxu0 0
      %1309 = vmatprep.subr.bf16.mxu0 0
      %1310 = vmatpush2.bf16.msra.mxu0 0
      %1311 = vmatprep.mubr.bf16.mxu0 0
      %1312 = vmatmul.mubr.bf16.gmra.mxu0 %v1277
      %v1313 = vpop.f32.mrf.mxu0
      %v1314 = vadd.f32 0.0, %v1313
      %v1315 = vpop.f32.mrf.mxu0
      %v1316 = vpop.f32.mrf.mxu0
      %v1317 = vadd.f32 0.0, %v1316
      %v1318 = vpop.f32.mrf.mxu0
      %1319 = vdwg.mxu0
      %v1320 = vpack.c.bf16 %v967, %v964
      %v1321 = vpack.c.bf16 %v1017, %v1014
      %v1322 = vpack.c.bf16 %v1067, %v1064
      %v1323 = vpack.c.bf16 %v1117, %v1114
      %v1324 = vpack.c.bf16 %v1167, %v1164
      %v1325 = vpack.c.bf16 %v1217, %v1214
      %v1326 = vpack.c.bf16 %v1267, %v1264
      %v1327 = vpack.c.bf16 %v1317, %v1314
      %v1336 = vunpack.c.l.b16 %v1320
      %v1337 = vunpack.c.h.b16 %v1320
      %v1338 = vunpack.c.l.b16 %v1321
      %v1339 = vunpack.c.h.b16 %v1321
      %v1340 = vunpack.c.l.b16 %v1322
      %v1341 = vunpack.c.h.b16 %v1322
      %v1342 = vunpack.c.l.b16 %v1323
      %v1343 = vunpack.c.h.b16 %v1323
      %v1344 = vunpack.c.l.b16 %v1324
      %v1345 = vunpack.c.h.b16 %v1324
      %v1346 = vunpack.c.l.b16 %v1325
      %v1347 = vunpack.c.h.b16 %v1325
      %v1348 = vunpack.c.l.b16 %v1326
      %v1349 = vunpack.c.h.b16 %v1326
      %v1350 = vunpack.c.l.b16 %v1327
      %v1351 = vunpack.c.h.b16 %v1327
      %v1352 = vpack.c.b16 %v1336, %v1336
      %v1353 = vpack.c.b16 %v1337, %v1337
      %v1354 = vpack.c.b16 %v1338, %v1338
      %v1355 = vpack.c.b16 %v1339, %v1339
      %v1356 = vpack.c.b16 %v1340, %v1340
      %v1357 = vpack.c.b16 %v1341, %v1341
      %v1358 = vpack.c.b16 %v1342, %v1342
      %v1359 = vpack.c.b16 %v1343, %v1343
      %v1360 = vpack.c.b16 %v1344, %v1344
      %v1361 = vpack.c.b16 %v1345, %v1345
      %v1362 = vpack.c.b16 %v1346, %v1346
      %v1363 = vpack.c.b16 %v1347, %v1347
      %v1364 = vpack.c.b16 %v1348, %v1348
      %v1365 = vpack.c.b16 %v1349, %v1349
      %v1366 = vpack.c.b16 %v1350, %v1350
      %v1367 = vpack.c.b16 %v1351, %v1351
      %vm1384 = vcmask 60416
      %1385 = vst.msk [vmem:[%s227] sm:$0xf] %vm1384, %v1352
      %1386 = vst.msk [vmem:[%s227 + $0x4] sm:$0xf] %vm1384, %v1353
      %1387 = vst.msk [vmem:[%s227 + $0x8] sm:$0xf] %vm1384, %v1354
      %1388 = vst.msk [vmem:[%s227 + $0xc] sm:$0xf] %vm1384, %v1355
      %1389 = vst.msk [vmem:[%s227 + $0x10] sm:$0xf] %vm1384, %v1356
      %1390 = vst.msk [vmem:[%s227 + $0x14] sm:$0xf] %vm1384, %v1357
      %1391 = vst.msk [vmem:[%s227 + $0x18] sm:$0xf] %vm1384, %v1358
      %1392 = vst.msk [vmem:[%s227 + $0x1c] sm:$0xf] %vm1384, %v1359
      %1393 = vst.msk [vmem:[%s227 + $0x20] sm:$0xf] %vm1384, %v1360
      %1394 = vst.msk [vmem:[%s227 + $0x24] sm:$0xf] %vm1384, %v1361
      %1395 = vst.msk [vmem:[%s227 + $0x28] sm:$0xf] %vm1384, %v1362
      %1396 = vst.msk [vmem:[%s227 + $0x2c] sm:$0xf] %vm1384, %v1363
      %1397 = vst.msk [vmem:[%s227 + $0x30] sm:$0xf] %vm1384, %v1364
      %1398 = vst.msk [vmem:[%s227 + $0x34] sm:$0xf] %vm1384, %v1365
      %1399 = vst.msk [vmem:[%s227 + $0x38] sm:$0xf] %vm1384, %v1366
      %1400 = vst.msk [vmem:[%s227 + $0x3c] sm:$0xf] %vm1384, %v1367
      %s1401 = smul.u32 8, %s14
      %p1402 = scmp.lt.s32.totalorder %s1401, 15
      %s1403 = scalar_select %p1402, %s1401, 15
      %s1404 = smul.addr %s1403, 2
      %s1405 = smul.addr %s1404, 4
      %s1406 = scalar_lea.vmem %s3, %s1405
      // Predicated region
      $region33: #{vit_block_forward.4} parent=31 // pred_check
        %p1407 = pneg %p110
      $region34: #{vit_block_forward.4} parent=31 // pred_check_branch
        %1409 = sbr.rel (%p1407) target = $region36
      $region35: #{vit_block_forward.4} parent=31 // pred_region
        %s1410 = smul.u32 8, %s14
      $region36: #{vit_block_forward.4} parent=31 // pred_fallthru
        _
    $region32: #{vit_block_forward.4} parent=5 // pred_fallthru
      _
    %p1411 = scmp.le.s32.totalorder 2, %s9
    // Predicated region
    $region37: #{vit_block_forward.4} parent=5 // pred_check
      %p1412 = pneg %p1411
    $region38: #{vit_block_forward.4} parent=5 // pred_check_branch
      %1414 = sbr.rel (%p1412) target = $region40
    $region39: #{vit_block_forward.4} parent=5 // pred_region
      %s1415 = ssub.s32 %s9, 2
      // Predicated region
      $region41: #{vit_block_forward.4} parent=39 // pred_check
        %p1416 = pneg %p116
      $region42: #{vit_block_forward.4} parent=39 // pred_check_branch
        %1418 = sbr.rel (%p1416) target = $region44
      $region43: #{vit_block_forward.4} parent=39 // pred_region
        %s1419 = smul.u32 8, %s15
        %p1420 = scmp.lt.s32.totalorder %s1419, 15
        %s1421 = scalar_select %p1420, %s1419, 15
        %s1422 = smul.addr %s1421, 2
        %s1423 = smul.addr %s1422, 4
        %s1424 = scalar_lea.vmem %s3, %s1423
      $region44: #{vit_block_forward.4} parent=39 // pred_fallthru
        _
    $region40: #{vit_block_forward.4} parent=5 // pred_fallthru
      _
  $region6: #{vit_block_forward.4} parent=0 // loop_footer
    %s13 = sadd.s32 1, %s9
  $region7: #{vit_block_forward.4} parent=0 // loop_footer_branch
    %8 = sbr.rel target = $region3
  $region8: #{vit_block_forward.4} parent=0 // loop_exit
    _

// kernel: vit_block_forward.5
$region0: #{vit_block_forward.5}
  #allocation0 [shape = 'u32[]', space=smem, size = 0x4, offset = 0x4, fixed_abs, tag = 'smem constant byte address 0x4 - core index']
  #allocation1 [shape = 'u32[144,128]{1,0:T(1,128)}', space=vmem, size = 0x12000, scoped, tag = 'internal scratch']
  %s0 = inlined_call_operand.vmem [shape: f32[64,32], index: 0, kind: input, shape index: {}]
  %s1 = inlined_call_operand.vmem [shape: bf16[64,32], index: 1, kind: input, shape index: {}]
  %s2 = inlined_call_operand.vmem [shape: bf16[32,32], index: 2, kind: input, shape index: {}]
  %s3 = inlined_call_operand.vmem [shape: f32[1,32], index: 3, kind: input, shape index: {}]
  %s4 = inlined_call_operand.vmem [shape: f32[1,32], index: 4, kind: input, shape index: {}]
  %s5 = inlined_call_operand.vmem [shape: f32[1,32], index: 5, kind: input, shape index: {}]
  %s6 = inlined_call_operand.vmem [shape: bf16[32,64], index: 6, kind: input, shape index: {}]
  %s7 = inlined_call_operand.vmem [shape: f32[1,64], index: 7, kind: input, shape index: {}]
  %s8 = inlined_call_operand.vmem [shape: bf16[64,32], index: 8, kind: input, shape index: {}]
  %s9 = inlined_call_operand.vmem [shape: f32[1,32], index: 9, kind: input, shape index: {}]
  %s10 = inlined_call_operand.hbm [shape: f32[64,32], index: 10, kind: output, shape index: {}]
  %s11 = sld [smem:[#allocation0]]
  $region73: #{vit_block_forward.5} parent=0
    _
  %s13 = ssub.s32 1, %s11
  %s14 = scalar_select 0, %s13, %s11
  $region1: #{vit_block_forward.5} parent=0
    #allocation2 [shape = 'u8[32768]{0}', space=vmem, size = 0x8000, scoped, tag = 'output window, operand 0']
    #allocation3 [shape = 's32[2]{0}', space=sflag, size = 0x8, scoped, tag = 'scoped memory for vit_block_forward.5']
    %15 = vsyncpa [#allocation3], 0
    %s16 = scalar_lea.sflag [#allocation3], 1
    %17 = vsyncpa %s16, 0
    loop: start=0, step=1, limit=4
    $region2: #{vit_block_forward.5} parent=1 // loop_pre_header
      _
    $region3: #{vit_block_forward.5} parent=1 // loop_header
      %s19 = sphi 0, %s23
      %p20 = scmp.ge.s32.totalorder %s19, 4
      %s29 = sphi 0, %s31
      %s32 = sphi 0, %s29
      %s33 = sphi 0, %s32
      %s49 = sphi 0, %s33
      %s55 = sphi 0, %s57
      %s58 = sphi 0, %s55
      %s59 = sphi 0, %s58
      %s75 = sphi 0, %s59
      %s79 = sphi 0, %s79
      %s81 = sphi 0, %s79
      %s82 = sphi 0, %s81
      %s96 = sphi 0, %s82
      %s100 = sphi 0, %s100
      %s102 = sphi 0, %s100
      %s103 = sphi 0, %s102
      %s117 = sphi 0, %s103
      %s121 = sphi 0, %s121
      %s123 = sphi 0, %s121
      %s124 = sphi 0, %s123
      %s138 = sphi 0, %s124
      %s142 = sphi 0, %s142
      %s144 = sphi 0, %s142
      %s145 = sphi 0, %s144
      %s159 = sphi 0, %s145
      %s163 = sphi 0, %s163
      %s165 = sphi 0, %s163
      %s166 = sphi 0, %s165
      %s180 = sphi 0, %s166
      %s184 = sphi 0, %s184
      %s186 = sphi 0, %s184
      %s187 = sphi 0, %s186
      %s201 = sphi 0, %s187
      %s205 = sphi 0, %s205
      %s207 = sphi 0, %s205
      %s208 = sphi 0, %s207
      %s222 = sphi 0, %s208
      %s226 = sphi 0, %s226
      %s228 = sphi 0, %s226
      %s229 = sphi 0, %s228
      %s243 = sphi 0, %s229
      %s249 = sphi 0, %s251
      %s252 = sphi 0, %s249
      %s253 = sphi 0, %s252
      %s269 = sphi 0, %s253
    $region4: #{vit_block_forward.5} parent=1 // loop_header_branch
      %22 = sbr.rel (%p20) target = $region8
    $region5: #{vit_block_forward.5} parent=1 // loop_body
      %s24 = ssub.s32 %s19, 1
      %s25 = ssub.s32 %s19, 2
      %s26 = sadd.s32 %s19, 1
      %s27 = ssub.s32 %s19, %s26
      %p28 = scmp.eq.s32.totalorder %s27, 0
      %s30 = sadd.s32 %s29, 1
      %s31 = scalar_select %p28, %s29, %s30
      %p34 = pneg %p28
      %p35 = scmp.eq.s32.totalorder %s19, 1
      %p36 = por %p34, %p35
      %p37 = scmp.ne.s32.totalorder %s29, %s32
      %p38 = scmp.eq.s32.totalorder %s19, 0
      %p39 = por %p37, %p38
      %p40 = scmp.ne.s32.totalorder %s29, %s32
      %p41 = scmp.eq.s32.totalorder %s24, 1
      %p42 = por %p40, %p41
      %p43 = scmp.ne.s32.totalorder %s32, %s33
      %p44 = scmp.eq.s32.totalorder %s24, 0
      %p45 = por %p43, %p44
      %p46 = scmp.ne.s32.totalorder %s32, %s33
      %p47 = scmp.eq.s32.totalorder %s25, 1
      %p48 = por %p46, %p47
      %p50 = scmp.ne.s32.totalorder %s33, %s49
      %p51 = scmp.eq.s32.totalorder %s25, 0
      %p52 = por %p50, %p51
      %s53 = ssub.s32 %s19, %s26
      %p54 = scmp.eq.s32.totalorder %s53, 0
      %s56 = sadd.s32 %s55, 1
      %s57 = scalar_select %p54, %s55, %s56
      %p60 = pneg %p54
      %p61 = scmp.eq.s32.totalorder %s19, 1
      %p62 = por %p60, %p61
      %p63 = scmp.ne.s32.totalorder %s55, %s58
      %p64 = scmp.eq.s32.totalorder %s19, 0
      %p65 = por %p63, %p64
      %p66 = scmp.ne.s32.totalorder %s55, %s58
      %p67 = scmp.eq.s32.totalorder %s24, 1
      %p68 = por %p66, %p67
      %p69 = scmp.ne.s32.totalorder %s58, %s59
      %p70 = scmp.eq.s32.totalorder %s24, 0
      %p71 = por %p69, %p70
      %p72 = scmp.ne.s32.totalorder %s58, %s59
      %p73 = scmp.eq.s32.totalorder %s25, 1
      %p74 = por %p72, %p73
      %p76 = scmp.ne.s32.totalorder %s59, %s75
      %p77 = scmp.eq.s32.totalorder %s25, 0
      %p78 = por %p76, %p77
      %s80 = sadd.s32 %s79, 1
      %p83 = scmp.eq.s32.totalorder %s19, 1
      %p84 = scmp.ne.s32.totalorder %s79, %s81
      %p85 = scmp.eq.s32.totalorder %s19, 0
      %p86 = por %p84, %p85
      %p87 = scmp.ne.s32.totalorder %s79, %s81
      %p88 = scmp.eq.s32.totalorder %s24, 1
      %p89 = por %p87, %p88
      %p90 = scmp.ne.s32.totalorder %s81, %s82
      %p91 = scmp.eq.s32.totalorder %s24, 0
      %p92 = por %p90, %p91
      %p93 = scmp.ne.s32.totalorder %s81, %s82
      %p94 = scmp.eq.s32.totalorder %s25, 1
      %p95 = por %p93, %p94
      %p97 = scmp.ne.s32.totalorder %s82, %s96
      %p98 = scmp.eq.s32.totalorder %s25, 0
      %p99 = por %p97, %p98
      %s101 = sadd.s32 %s100, 1
      %p104 = scmp.eq.s32.totalorder %s19, 1
      %p105 = scmp.ne.s32.totalorder %s100, %s102
      %p106 = scmp.eq.s32.totalorder %s19, 0
      %p107 = por %p105, %p106
      %p108 = scmp.ne.s32.totalorder %s100, %s102
      %p109 = scmp.eq.s32.totalorder %s24, 1
      %p110 = por %p108, %p109
      %p111 = scmp.ne.s32.totalorder %s102, %s103
      %p112 = scmp.eq.s32.totalorder %s24, 0
      %p113 = por %p111, %p112
      %p114 = scmp.ne.s32.totalorder %s102, %s103
      %p115 = scmp.eq.s32.totalorder %s25, 1
      %p116 = por %p114, %p115
      %p118 = scmp.ne.s32.totalorder %s103, %s117
      %p119 = scmp.eq.s32.totalorder %s25, 0
      %p120 = por %p118, %p119
      %s122 = sadd.s32 %s121, 1
      %p125 = scmp.eq.s32.totalorder %s19, 1
      %p126 = scmp.ne.s32.totalorder %s121, %s123
      %p127 = scmp.eq.s32.totalorder %s19, 0
      %p128 = por %p126, %p127
      %p129 = scmp.ne.s32.totalorder %s121, %s123
      %p130 = scmp.eq.s32.totalorder %s24, 1
      %p131 = por %p129, %p130
      %p132 = scmp.ne.s32.totalorder %s123, %s124
      %p133 = scmp.eq.s32.totalorder %s24, 0
      %p134 = por %p132, %p133
      %p135 = scmp.ne.s32.totalorder %s123, %s124
      %p136 = scmp.eq.s32.totalorder %s25, 1
      %p137 = por %p135, %p136
      %p139 = scmp.ne.s32.totalorder %s124, %s138
      %p140 = scmp.eq.s32.totalorder %s25, 0
      %p141 = por %p139, %p140
      %s143 = sadd.s32 %s142, 1
      %p146 = scmp.eq.s32.totalorder %s19, 1
      %p147 = scmp.ne.s32.totalorder %s142, %s144
      %p148 = scmp.eq.s32.totalorder %s19, 0
      %p149 = por %p147, %p148
      %p150 = scmp.ne.s32.totalorder %s142, %s144
      %p151 = scmp.eq.s32.totalorder %s24, 1
      %p152 = por %p150, %p151
      %p153 = scmp.ne.s32.totalorder %s144, %s145
      %p154 = scmp.eq.s32.totalorder %s24, 0
      %p155 = por %p153, %p154
      %p156 = scmp.ne.s32.totalorder %s144, %s145
      %p157 = scmp.eq.s32.totalorder %s25, 1
      %p158 = por %p156, %p157
      %p160 = scmp.ne.s32.totalorder %s145, %s159
      %p161 = scmp.eq.s32.totalorder %s25, 0
      %p162 = por %p160, %p161
      %s164 = sadd.s32 %s163, 1
      %p167 = scmp.eq.s32.totalorder %s19, 1
      %p168 = scmp.ne.s32.totalorder %s163, %s165
      %p169 = scmp.eq.s32.totalorder %s19, 0
      %p170 = por %p168, %p169
      %p171 = scmp.ne.s32.totalorder %s163, %s165
      %p172 = scmp.eq.s32.totalorder %s24, 1
      %p173 = por %p171, %p172
      %p174 = scmp.ne.s32.totalorder %s165, %s166
      %p175 = scmp.eq.s32.totalorder %s24, 0
      %p176 = por %p174, %p175
      %p177 = scmp.ne.s32.totalorder %s165, %s166
      %p178 = scmp.eq.s32.totalorder %s25, 1
      %p179 = por %p177, %p178
      %p181 = scmp.ne.s32.totalorder %s166, %s180
      %p182 = scmp.eq.s32.totalorder %s25, 0
      %p183 = por %p181, %p182
      %s185 = sadd.s32 %s184, 1
      %p188 = scmp.eq.s32.totalorder %s19, 1
      %p189 = scmp.ne.s32.totalorder %s184, %s186
      %p190 = scmp.eq.s32.totalorder %s19, 0
      %p191 = por %p189, %p190
      %p192 = scmp.ne.s32.totalorder %s184, %s186
      %p193 = scmp.eq.s32.totalorder %s24, 1
      %p194 = por %p192, %p193
      %p195 = scmp.ne.s32.totalorder %s186, %s187
      %p196 = scmp.eq.s32.totalorder %s24, 0
      %p197 = por %p195, %p196
      %p198 = scmp.ne.s32.totalorder %s186, %s187
      %p199 = scmp.eq.s32.totalorder %s25, 1
      %p200 = por %p198, %p199
      %p202 = scmp.ne.s32.totalorder %s187, %s201
      %p203 = scmp.eq.s32.totalorder %s25, 0
      %p204 = por %p202, %p203
      %s206 = sadd.s32 %s205, 1
      %p209 = scmp.eq.s32.totalorder %s19, 1
      %p210 = scmp.ne.s32.totalorder %s205, %s207
      %p211 = scmp.eq.s32.totalorder %s19, 0
      %p212 = por %p210, %p211
      %p213 = scmp.ne.s32.totalorder %s205, %s207
      %p214 = scmp.eq.s32.totalorder %s24, 1
      %p215 = por %p213, %p214
      %p216 = scmp.ne.s32.totalorder %s207, %s208
      %p217 = scmp.eq.s32.totalorder %s24, 0
      %p218 = por %p216, %p217
      %p219 = scmp.ne.s32.totalorder %s207, %s208
      %p220 = scmp.eq.s32.totalorder %s25, 1
      %p221 = por %p219, %p220
      %p223 = scmp.ne.s32.totalorder %s208, %s222
      %p224 = scmp.eq.s32.totalorder %s25, 0
      %p225 = por %p223, %p224
      %s227 = sadd.s32 %s226, 1
      %p230 = scmp.eq.s32.totalorder %s19, 1
      %p231 = scmp.ne.s32.totalorder %s226, %s228
      %p232 = scmp.eq.s32.totalorder %s19, 0
      %p233 = por %p231, %p232
      %p234 = scmp.ne.s32.totalorder %s226, %s228
      %p235 = scmp.eq.s32.totalorder %s24, 1
      %p236 = por %p234, %p235
      %p237 = scmp.ne.s32.totalorder %s228, %s229
      %p238 = scmp.eq.s32.totalorder %s24, 0
      %p239 = por %p237, %p238
      %p240 = scmp.ne.s32.totalorder %s228, %s229
      %p241 = scmp.eq.s32.totalorder %s25, 1
      %p242 = por %p240, %p241
      %p244 = scmp.ne.s32.totalorder %s229, %s243
      %p245 = scmp.eq.s32.totalorder %s25, 0
      %p246 = por %p244, %p245
      %s247 = ssub.s32 %s19, %s26
      %p248 = scmp.eq.s32.totalorder %s247, 0
      %s250 = sadd.s32 %s249, 1
      %s251 = scalar_select %p248, %s249, %s250
      %p254 = pneg %p248
      %p255 = scmp.eq.s32.totalorder %s19, 1
      %p256 = por %p254, %p255
      %p257 = scmp.ne.s32.totalorder %s249, %s252
      %p258 = scmp.eq.s32.totalorder %s19, 0
      %p259 = por %p257, %p258
      %p260 = scmp.ne.s32.totalorder %s249, %s252
      %p261 = scmp.eq.s32.totalorder %s24, 1
      %p262 = por %p260, %p261
      %p263 = scmp.ne.s32.totalorder %s252, %s253
      %p264 = scmp.eq.s32.totalorder %s24, 0
      %p265 = por %p263, %p264
      %p266 = scmp.ne.s32.totalorder %s252, %s253
      %p267 = scmp.eq.s32.totalorder %s25, 1
      %p268 = por %p266, %p267
      %p270 = scmp.ne.s32.totalorder %s253, %s269
      %p271 = scmp.eq.s32.totalorder %s25, 0
      %p272 = por %p270, %p271
      %p273 = scmp.le.s32.totalorder 1, %s19
      %p274 = scmp.lt.s32.totalorder %s19, 3
      %p275 = pnand %p273, %p274
      %p276 = pneg %p275
      // Predicated region
      $region9: #{vit_block_forward.5} parent=5 // pred_check
        _
      $region10: #{vit_block_forward.5} parent=5 // pred_check_branch
        %278 = sbr.rel (%p275) target = $region12
      $region11: #{vit_block_forward.5} parent=5 // pred_region
        %s279 = ssub.s32 %s19, 1
        // Predicated region
        $region13: #{vit_block_forward.5} parent=11 // pred_check
          %p280 = pneg %p92
        $region14: #{vit_block_forward.5} parent=11 // pred_check_branch
          %282 = sbr.rel (%p280) target = $region16
        $region15: #{vit_block_forward.5} parent=11 // pred_region
          _
        $region16: #{vit_block_forward.5} parent=11 // pred_fallthru
          _
        // Predicated region
        $region17: #{vit_block_forward.5} parent=11 // pred_check
          %p283 = pneg %p113
        $region18: #{vit_block_forward.5} parent=11 // pred_check_branch
          %285 = sbr.rel (%p283) target = $region20
        $region19: #{vit_block_forward.5} parent=11 // pred_region
          _
        $region20: #{vit_block_forward.5} parent=11 // pred_fallthru
          _
        // Predicated region
        $region21: #{vit_block_forward.5} parent=11 // pred_check
          %p286 = pneg %p134
        $region22: #{vit_block_forward.5} parent=11 // pred_check_branch
          %288 = sbr.rel (%p286) target = $region24
        $region23: #{vit_block_forward.5} parent=11 // pred_region
          _
        $region24: #{vit_block_forward.5} parent=11 // pred_fallthru
          _
        // Predicated region
        $region25: #{vit_block_forward.5} parent=11 // pred_check
          %p289 = pneg %p155
        $region26: #{vit_block_forward.5} parent=11 // pred_check_branch
          %291 = sbr.rel (%p289) target = $region28
        $region27: #{vit_block_forward.5} parent=11 // pred_region
          _
        $region28: #{vit_block_forward.5} parent=11 // pred_fallthru
          _
        // Predicated region
        $region29: #{vit_block_forward.5} parent=11 // pred_check
          %p292 = pneg %p176
        $region30: #{vit_block_forward.5} parent=11 // pred_check_branch
          %294 = sbr.rel (%p292) target = $region32
        $region31: #{vit_block_forward.5} parent=11 // pred_region
          _
        $region32: #{vit_block_forward.5} parent=11 // pred_fallthru
          _
        // Predicated region
        $region33: #{vit_block_forward.5} parent=11 // pred_check
          %p295 = pneg %p197
        $region34: #{vit_block_forward.5} parent=11 // pred_check_branch
          %297 = sbr.rel (%p295) target = $region36
        $region35: #{vit_block_forward.5} parent=11 // pred_region
          _
        $region36: #{vit_block_forward.5} parent=11 // pred_fallthru
          _
        // Predicated region
        $region37: #{vit_block_forward.5} parent=11 // pred_check
          %p298 = pneg %p218
        $region38: #{vit_block_forward.5} parent=11 // pred_check_branch
          %300 = sbr.rel (%p298) target = $region40
        $region39: #{vit_block_forward.5} parent=11 // pred_region
          _
        $region40: #{vit_block_forward.5} parent=11 // pred_fallthru
          _
        // Predicated region
        $region41: #{vit_block_forward.5} parent=11 // pred_check
          %p301 = pneg %p239
        $region42: #{vit_block_forward.5} parent=11 // pred_check_branch
          %303 = sbr.rel (%p301) target = $region44
        $region43: #{vit_block_forward.5} parent=11 // pred_region
          _
        $region44: #{vit_block_forward.5} parent=11 // pred_fallthru
          _
      $region12: #{vit_block_forward.5} parent=5 // pred_fallthru
        _
      %p304 = scmp.lt.s32.totalorder %s19, 2
      // Predicated region
      $region45: #{vit_block_forward.5} parent=5 // pred_check
        %p305 = pneg %p304
      $region46: #{vit_block_forward.5} parent=5 // pred_check_branch
        %307 = sbr.rel (%p305) target = $region48
      $region47: #{vit_block_forward.5} parent=5 // pred_region
        // Predicated region
        $region49: #{vit_block_forward.5} parent=47 // pred_check
          %p308 = pneg %p39
        $region50: #{vit_block_forward.5} parent=47 // pred_check_branch
          %310 = sbr.rel (%p308) target = $region52
        $region51: #{vit_block_forward.5} parent=47 // pred_region
          %s311 = smul.u32 4, %s19
          %p312 = scmp.lt.s32.totalorder %s311, 7
          %s313 = scalar_select %p312, %s311, 7
          %s314 = smul.addr %s313, 8
          %s315 = scalar_lea.vmem %s0, %s314
          %s316 = smul.u32 4, %s19
        $region52: #{vit_block_forward.5} parent=47 // pred_fallthru
          _
        // Predicated region
        $region53: #{vit_block_forward.5} parent=47 // pred_check
          %p317 = pneg %p65
        $region54: #{vit_block_forward.5} parent=47 // pred_check_branch
          %319 = sbr.rel (%p317) target = $region56
        $region55: #{vit_block_forward.5} parent=47 // pred_region
          %s320 = smul.u32 4, %s19
          %p321 = scmp.lt.s32.totalorder %s320, 7
          %s322 = scalar_select %p321, %s320, 7
          %s323 = smul.addr %s322, 4
          %s324 = scalar_lea.vmem %s1, %s323
          %s325 = smul.u32 4, %s19
        $region56: #{vit_block_forward.5} parent=47 // pred_fallthru
          _
      $region48: #{vit_block_forward.5} parent=5 // pred_fallthru
        _
      %p326 = scmp.le.s32.totalorder 1, %s19
      %p327 = scmp.lt.s32.totalorder %s19, 3
      %p328 = pnand %p326, %p327
      %p329 = pneg %p328
      // Predicated region
      $region57: #{vit_block_forward.5} parent=5 // pred_check
        _
      $region58: #{vit_block_forward.5} parent=5 // pred_check_branch
        %331 = sbr.rel (%p328) target = $region60
      $region59: #{vit_block_forward.5} parent=5 // pred_region
        %s332 = ssub.s32 %s19, 1
        %s333 = smul.u32 4, %s24
        %p334 = scmp.lt.s32.totalorder %s333, 7
        %s335 = scalar_select %p334, %s333, 7
        %s336 = smul.addr %s335, 8
        %s337 = scalar_lea.vmem %s0, %s336
        %p338 = pneg %p45
        %p339 = pneg %p42
        %s340 = smul.u32 4, %s24
        %p341 = scmp.lt.s32.totalorder %s340, 7
        %s342 = scalar_select %p341, %s340, 7
        %s343 = smul.addr %s342, 4
        %s344 = scalar_lea.vmem %s1, %s343
        %p345 = pneg %p71
        %p346 = pneg %p68
        %p347 = pneg %p92
        %p348 = pneg %p89
        %p349 = pneg %p113
        %p350 = pneg %p110
        %p351 = pneg %p134
        %p352 = pneg %p131
        %p353 = pneg %p155
        %p354 = pneg %p152
        %p355 = pneg %p176
        %p356 = pneg %p173
        %p357 = pneg %p197
        %p358 = pneg %p194
        %p359 = pneg %p218
        %p360 = pneg %p215
        %p361 = pneg %p239
        %p362 = pneg %p236
        %p363 = pneg %p265
        %p364 = pneg %p262
        %s365 = sand.u32 %s252, 1
        %s366 = scalar_lea.sflag [#allocation3], %s365
        %s367 = sand.u32 %s252, 1
        %s368 = smul.addr %s367, 32
        %s369 = scalar_lea.vmem [#allocation2], %s368
        %s370 = smul.u32 4, %s24
        %p371 = scmp.lt.s32.totalorder %s370, 7
        %s372 = scalar_select %p371, %s370, 7
        %s373 = smul.addr %s372, 8
        %s374 = scalar_lea.vmem %s0, %s373
        %s375 = smul.u32 4, %s24
        %s376 = smul.u32 4, %s24
        %p377 = scmp.lt.s32.totalorder %s376, 7
        %s378 = scalar_select %p377, %s376, 7
        %s379 = smul.addr %s378, 4
        %s380 = scalar_lea.vmem %s1, %s379
        %s381 = smul.u32 4, %s24
        %s382 = smul.u32 4, %s24
        %v384 = vld [vmem:[%s380] sm:$0xf]
        %v385 = vld [vmem:[%s380 + $0x4] sm:$0xf]
        %v386 = vld [vmem:[%s380 + $0x8] sm:$0xf]
        %v387 = vld [vmem:[%s380 + $0xc] sm:$0xf]
        %v388 = vld [vmem:[%s2] sm:$0xf]
        %v389 = vld [vmem:[%s2 + $0x4] sm:$0xf]
        %v390 = vld [vmem:[%s2 + $0x8] sm:$0xf]
        %v391 = vld [vmem:[%s2 + $0xc] sm:$0xf]
        %v392 = vld [vmem:[%s3] sm:$0x1]
        %v394 = vlaneseq
        %v395 = vshrl.u32 %v394, 7
        %v396 = vsub.s32 0, %v395
        %v397 = vrot.slane %v392, %v396
        %v403 = vunpack.c.l.b16 %v384
        %v404 = vunpack.c.l.b16 %v385
        %v405 = vunpack.c.l.b16 %v386
        %v406 = vunpack.c.l.b16 %v387
        %v407 = vpack.c.b16 %v404, %v403
        %v408 = vpack.c.b16 %v406, %v405
        %v413 = vunpack.c.l.b16 %v388
        %v414 = vunpack.c.l.b16 %v389
        %v415 = vunpack.c.l.b16 %v390
        %v416 = vunpack.c.l.b16 %v391
        %v417 = vpack.c.b16 %v414, %v413
        %v418 = vpack.c.b16 %v416, %v415
        %vm421 = vcmask 261120
        %v423 = vsel %vm421, %v407, 0
        %v426 = vsel %vm421, %v408, 0
        %428 = vmatprep.subr.bf16.mxu0 0
        %429 = vmatpush1.bf16.msra.mxu0 0
        %430 = vmatprep.subr.bf16.mxu0 0
        %431 = vmatpush1.bf16.msra.mxu0 0
        %432 = vmatprep.subr.bf16.mxu0 0
        %433 = vmatpush1.bf16.msra.mxu0 0
        %434 = vmatprep.subr.bf16.mxu0 0
        %435 = vmatpush1.bf16.msra.mxu0 0
        %436 = vmatprep.subr.bf16.mxu0 0
        %437 = vmatpush1.bf16.msra.mxu0 0
        %438 = vmatprep.subr.bf16.mxu0 0
        %439 = vmatpush1.bf16.msra.mxu0 0
        %440 = vmatprep.subr.bf16.mxu0 0
        %441 = vmatpush1.bf16.msra.mxu0 %v418
        %442 = vmatprep.subr.bf16.mxu0 0
        %443 = vmatpush1.bf16.msra.mxu0 %v417
        %444 = vmatprep.subr.bf16.mxu0 0
        %445 = vmatpush2.bf16.msra.mxu0 0
        %446 = vmatprep.subr.bf16.mxu0 0
        %447 = vmatpush2.bf16.msra.mxu0 0
        %448 = vmatprep.subr.bf16.mxu0 0
        %449 = vmatpush2.bf16.msra.mxu0 0
        %450 = vmatprep.subr.bf16.mxu0 0
        %451 = vmatpush2.bf16.msra.mxu0 0
        %452 = vmatprep.subr.bf16.mxu0 0
        %453 = vmatpush2.bf16.msra.mxu0 0
        %454 = vmatprep.subr.bf16.mxu0 0
        %455 = vmatpush2.bf16.msra.mxu0 0
        %456 = vmatprep.subr.bf16.mxu0 0
        %457 = vmatpush2.bf16.msra.mxu0 0
        %458 = vmatprep.subr.bf16.mxu0 0
        %459 = vmatpush2.bf16.msra.mxu0 0
        %460 = vmatprep.mubr.bf16.mxu0 0
        %461 = vmatmul.mubr.bf16.gmra.mxu0 %v423
        %v462 = vpop.f32.mrf.mxu0
        %v463 = vadd.f32 %v397, %v462
        %v464 = vpop.f32.mrf.mxu0
        %v465 = vpop.f32.mrf.mxu0
        %v466 = vadd.f32 %v397, %v465
        %v467 = vpop.f32.mrf.mxu0
        %468 = vmatprep.mubr.bf16.mxu0 0
        %469 = vmatmul.mubr.bf16.gmra.mxu0 %v426
        %v470 = vpop.f32.mrf.mxu0
        %v471 = vadd.f32 %v397, %v470
        %v472 = vpop.f32.mrf.mxu0
        %v473 = vpop.f32.mrf.mxu0
        %v474 = vadd.f32 %v397, %v473
        %v475 = vpop.f32.mrf.mxu0
        %476 = vdwg.mxu0
        %v477 = vld [vmem:[%s374] sm:$0xff]
        %v478 = vld [vmem:[%s374 + $0x8] sm:$0xff]
        %v479 = vld [vmem:[%s374 + $0x10] sm:$0xff]
        %v480 = vld [vmem:[%s374 + $0x18] sm:$0xff]
        %v481 = vadd.f32 %v477, %v463
        %v482 = vadd.f32 %v478, %v466
        %v483 = vadd.f32 %v479, %v471
        %v484 = vadd.f32 %v480, %v474
        %v485 = vld [vmem:[%s4] sm:$0x1]
        %v486 = vld [vmem:[%s5] sm:$0x1]
        %v487 = vsel %vm421, %v481, 0.0
        %488 = vadd.xlane.f32.xlu0 %v487
        %v489 = vpop.xlane.xlu0 %488
        %v490 = vsel %vm421, %v482, 0.0
        %491 = vadd.xlane.f32.xlu0 %v490
        %v492 = vpop.xlane.xlu0 %491
        %v493 = vsel %vm421, %v483, 0.0
        %494 = vadd.xlane.f32.xlu0 %v493
        %v495 = vpop.xlane.xlu0 %494
        %v496 = vsel %vm421, %v484, 0.0
        %497 = vadd.xlane.f32.xlu0 %v496
        %v498 = vpop.xlane.xlu0 %497
        %v499 = vrcp.pop 32.0
        %v500 = vmul.f32 %v489, %v499
        %v501 = vmul.f32 %v492, %v499
        %v502 = vmul.f32 %v495, %v499
        %v503 = vmul.f32 %v498, %v499
        %v504 = vsub.f32 %v481, %v500
        %v505 = vsub.f32 %v482, %v501
        %v506 = vsub.f32 %v483, %v502
        %v507 = vsub.f32 %v484, %v503
        %v508 = vmul.f32 %v504, %v504
        %v509 = vmul.f32 %v505, %v505
        %v510 = vmul.f32 %v506, %v506
        %v511 = vmul.f32 %v507, %v507
        %v512 = vsel %vm421, %v508, 0.0
        %513 = vadd.xlane.f32.xlu0 %v512
        %v514 = vpop.xlane.xlu0 %513
        %v515 = vsel %vm421, %v509, 0.0
        %516 = vadd.xlane.f32.xlu0 %v515
        %v517 = vpop.xlane.xlu0 %516
        %v518 = vsel %vm421, %v510, 0.0
        %519 = vadd.xlane.f32.xlu0 %v518
        %v520 = vpop.xlane.xlu0 %519
        %v521 = vsel %vm421, %v511, 0.0
        %522 = vadd.xlane.f32.xlu0 %v521
        %v523 = vpop.xlane.xlu0 %522
        %v524 = vmul.f32 %v514, %v499
        %v525 = vmul.f32 %v517, %v499
        %v526 = vmul.f32 %v520, %v499
        %v527 = vmul.f32 %v523, %v499
        %v528 = vadd.f32 %v524, 1e-05
        %v529 = vadd.f32 %v525, 1e-05
        %v530 = vadd.f32 %v526, 1e-05
        %v531 = vadd.f32 %v527, 1e-05
        %v532 = vrsqrt.pop %v528
        %v533 = vrsqrt.pop %v529
        %v534 = vrsqrt.pop %v530
        %v535 = vrsqrt.pop %v531
        %v536 = vmul.f32 %v504, %v532
        %v537 = vmul.f32 %v505, %v533
        %v538 = vmul.f32 %v506, %v534
        %v539 = vmul.f32 %v507, %v535
        %v541 = vlaneseq
        %v542 = vshrl.u32 %v541, 7
        %v543 = vsub.s32 0, %v542
        %v544 = vrot.slane %v485, %v543
        %v546 = vmul.f32 %v536, %v544
        %v547 = vmul.f32 %v537, %v544
        %v548 = vmul.f32 %v538, %v544
        %v549 = vmul.f32 %v539, %v544
        %v551 = vlaneseq
        %v552 = vshrl.u32 %v551, 7
        %v553 = vsub.s32 0, %v552
        %v554 = vrot.slane %v486, %v553
        %v556 = vadd.f32 %v546, %v554
        %v557 = vadd.f32 %v547, %v554
        %v558 = vadd.f32 %v548, %v554
        %v559 = vadd.f32 %v549, %v554
        %v560 = vpack.c.bf16 %v557, %v556
        %v561 = vpack.c.bf16 %v559, %v558
        %v562 = vld [vmem:[%s6] sm:$0xf]
        %v563 = vld [vmem:[%s6 + $0x4] sm:$0xf]
        %v564 = vld [vmem:[%s6 + $0x8] sm:$0xf]
        %v565 = vld [vmem:[%s6 + $0xc] sm:$0xf]
        %v566 = vld [vmem:[%s7] sm:$0x1]
        %v568 = vlaneseq
        %v569 = vshrl.u32 %v568, 7
        %v570 = vsub.s32 0, %v569
        %v571 = vrot.slane %v566, %v570
        %v577 = vunpack.c.l.b16 %v562
        %v578 = vunpack.c.l.b16 %v563
        %v579 = vunpack.c.l.b16 %v564
        %v580 = vunpack.c.l.b16 %v565
        %v581 = vpack.c.b16 %v578, %v577
        %v582 = vpack.c.b16 %v580, %v579
        %v586 = vsel %vm421, %v560, 0
        %v589 = vsel %vm421, %v561, 0
        %591 = vmatprep.subr.bf16.mxu0 0
        %592 = vmatpush1.bf16.msra.mxu0 0
        %593 = vmatprep.subr.bf16.mxu0 0
        %594 = vmatpush1.bf16.msra.mxu0 0
        %595 = vmatprep.subr.bf16.mxu0 0
        %596 = vmatpush1.bf16.msra.mxu0 0
        %597 = vmatprep.subr.bf16.mxu0 0
        %598 = vmatpush1.bf16.msra.mxu0 0
        %599 = vmatprep.subr.bf16.mxu0 0
        %600 = vmatpush1.bf16.msra.mxu0 0
        %601 = vmatprep.subr.bf16.mxu0 0
        %602 = vmatpush1.bf16.msra.mxu0 0
        %603 = vmatprep.subr.bf16.mxu0 0
        %604 = vmatpush1.bf16.msra.mxu0 %v582
        %605 = vmatprep.subr.bf16.mxu0 0
        %606 = vmatpush1.bf16.msra.mxu0 %v581
        %607 = vmatprep.subr.bf16.mxu0 0
        %608 = vmatpush2.bf16.msra.mxu0 0
        %609 = vmatprep.subr.bf16.mxu0 0
        %610 = vmatpush2.bf16.msra.mxu0 0
        %611 = vmatprep.subr.bf16.mxu0 0
        %612 = vmatpush2.bf16.msra.mxu0 0
        %613 = vmatprep.subr.bf16.mxu0 0
        %614 = vmatpush2.bf16.msra.mxu0 0
        %615 = vmatprep.subr.bf16.mxu0 0
        %616 = vmatpush2.bf16.msra.mxu0 0
        %617 = vmatprep.subr.bf16.mxu0 0
        %618 = vmatpush2.bf16.msra.mxu0 0
        %619 = vmatprep.subr.bf16.mxu0 0
        %620 = vmatpush2.bf16.msra.mxu0 0
        %621 = vmatprep.subr.bf16.mxu0 0
        %622 = vmatpush2.bf16.msra.mxu0 0
        %623 = vmatprep.mubr.bf16.mxu0 0
        %624 = vmatmul.mubr.bf16.gmra.mxu0 %v586
        %v625 = vpop.f32.mrf.mxu0
        %v626 = vadd.f32 %v571, %v625
        %v627 = vpop.f32.mrf.mxu0
        %v628 = vpop.f32.mrf.mxu0
        %v629 = vadd.f32 %v571, %v628
        %v630 = vpop.f32.mrf.mxu0
        %631 = vmatprep.mubr.bf16.mxu0 0
        %632 = vmatmul.mubr.bf16.gmra.mxu0 %v589
        %v633 = vpop.f32.mrf.mxu0
        %v634 = vadd.f32 %v571, %v633
        %v635 = vpop.f32.mrf.mxu0
        %v636 = vpop.f32.mrf.mxu0
        %v637 = vadd.f32 %v571, %v636
        %v638 = vpop.f32.mrf.mxu0
        %639 = vdwg.mxu0
        %vm640 = vcmp.ge.f32.partialorder %v626, 1.0
        %vm641 = vcmp.ge.f32.partialorder %v629, 1.0
        %vm642 = vcmp.ge.f32.partialorder %v634, 1.0
        %vm643 = vcmp.ge.f32.partialorder %v637, 1.0
        %v644 = vsel %vm640, 1, 0
        %v645 = vsel %vm641, 1, 0
        %v646 = vsel %vm642, 1, 0
        %v647 = vsel %vm643, 1, 0
        %v648 = vcvt.s32.f32 %v644
        %v649 = vcvt.s32.f32 %v645
        %v650 = vcvt.s32.f32 %v646
        %v651 = vcvt.s32.f32 %v647
        %v652 = vpack.c.bf16 %v649, %v648
        %v653 = vpack.c.bf16 %v651, %v650
        %v654 = vld [vmem:[%s8] sm:$0xf]
        %v655 = vld [vmem:[%s8 + $0x4] sm:$0xf]
        %v656 = vld [vmem:[%s8 + $0x8] sm:$0xf]
        %v657 = vld [vmem:[%s8 + $0xc] sm:$0xf]
        %v658 = vld [vmem:[%s8 + $0x10] sm:$0xf]
        %v659 = vld [vmem:[%s8 + $0x14] sm:$0xf]
        %v660 = vld [vmem:[%s8 + $0x18] sm:$0xf]
        %v661 = vld [vmem:[%s8 + $0x1c] sm:$0xf]
        %v670 = vunpack.c.l.b16 %v654
        %v671 = vunpack.c.l.b16 %v655
        %v672 = vunpack.c.l.b16 %v656
        %v673 = vunpack.c.l.b16 %v657
        %v674 = vunpack.c.l.b16 %v658
        %v675 = vunpack.c.l.b16 %v659
        %v676 = vunpack.c.l.b16 %v660
        %v677 = vunpack.c.l.b16 %v661
        %v678 = vpack.c.b16 %v671, %v670
        %v679 = vpack.c.b16 %v673, %v672
        %v680 = vpack.c.b16 %v675, %v674
        %v681 = vpack.c.b16 %v677, %v676
        %vm686 = vcmask 523264
        %v688 = vsel %vm686, %v652, 0
        %v691 = vsel %vm686, %v653, 0
        %693 = vmatprep.subr.bf16.mxu0 0
        %694 = vmatpush1.bf16.msra.mxu0 0
        %695 = vmatprep.subr.bf16.mxu0 0
        %696 = vmatpush1.bf16.msra.mxu0 0
        %697 = vmatprep.subr.bf16.mxu0 0
        %698 = vmatpush1.bf16.msra.mxu0 0
        %699 = vmatprep.subr.bf16.mxu0 0
        %700 = vmatpush1.bf16.msra.mxu0 0
        %701 = vmatprep.subr.bf16.mxu0 0
        %702 = vmatpush1.bf16.msra.mxu0 %v681
        %703 = vmatprep.subr.bf16.mxu0 0
        %704 = vmatpush1.bf16.msra.mxu0 %v680
        %705 = vmatprep.subr.bf16.mxu0 0
        %706 = vmatpush1.bf16.msra.mxu0 %v679
        %707 = vmatprep.subr.bf16.mxu0 0
        %708 = vmatpush1.bf16.msra.mxu0 %v678
        %709 = vmatprep.subr.bf16.mxu0 0
        %710 = vmatpush2.bf16.msra.mxu0 0
        %711 = vmatprep.subr.bf16.mxu0 0
        %712 = vmatpush2.bf16.msra.mxu0 0
        %713 = vmatprep.subr.bf16.mxu0 0
        %714 = vmatpush2.bf16.msra.mxu0 0
        %715 = vmatprep.subr.bf16.mxu0 0
        %716 = vmatpush2.bf16.msra.mxu0 0
        %717 = vmatprep.subr.bf16.mxu0 0
        %718 = vmatpush2.bf16.msra.mxu0 0
        %719 = vmatprep.subr.bf16.mxu0 0
        %720 = vmatpush2.bf16.msra.mxu0 0
        %721 = vmatprep.subr.bf16.mxu0 0
        %722 = vmatpush2.bf16.msra.mxu0 0
        %723 = vmatprep.subr.bf16.mxu0 0
        %724 = vmatpush2.bf16.msra.mxu0 0
        %725 = vmatprep.mubr.bf16.mxu0 0
        %726 = vmatmul.mubr.bf16.gmra.mxu0 %v688
        %v727 = vpop.f32.mrf.mxu0
        %v728 = vadd.f32 0.0, %v727
        %v729 = vpop.f32.mrf.mxu0
        %v730 = vpop.f32.mrf.mxu0
        %v731 = vadd.f32 0.0, %v730
        %v732 = vpop.f32.mrf.mxu0
        %733 = vmatprep.mubr.bf16.mxu0 0
        %734 = vmatmul.mubr.bf16.gmra.mxu0 %v691
        %v735 = vpop.f32.mrf.mxu0
        %v736 = vadd.f32 0.0, %v735
        %v737 = vpop.f32.mrf.mxu0
        %v738 = vpop.f32.mrf.mxu0
        %v739 = vadd.f32 0.0, %v738
        %v740 = vpop.f32.mrf.mxu0
        %741 = vdwg.mxu0
        %v742 = vadd.f32 %v556, %v728
        %v743 = vadd.f32 %v557, %v731
        %v744 = vadd.f32 %v558, %v736
        %v745 = vadd.f32 %v559, %v739
        %v746 = vld [vmem:[%s9] sm:$0x1]
        %v748 = vlaneseq
        %v749 = vshrl.u32 %v748, 7
        %v750 = vsub.s32 0, %v749
        %v751 = vrot.slane %v746, %v750
        %v753 = vadd.f32 %v742, %v751
        %v754 = vadd.f32 %v743, %v751
        %v755 = vadd.f32 %v744, %v751
        %v756 = vadd.f32 %v745, %v751
        %757 = vst.msk [vmem:[%s369] sm:$0xff] %vm421, %v753
        %758 = vst.msk [vmem:[%s369 + $0x8] sm:$0xff] %vm421, %v754
        %759 = vst.msk [vmem:[%s369 + $0x10] sm:$0xff] %vm421, %v755
        %760 = vst.msk [vmem:[%s369 + $0x18] sm:$0xff] %vm421, %v756
        %s761 = sand.u32 %s252, 1
        %s762 = scalar_lea.sflag [#allocation3], %s761
        %s763 = sand.u32 %s252, 1
        %s764 = smul.addr %s763, 32
        %s765 = scalar_lea.vmem [#allocation2], %s764
        // Predicated region
        $region61: #{vit_block_forward.5} parent=59 // pred_check
          %p766 = pneg %p262
        $region62: #{vit_block_forward.5} parent=59 // pred_check_branch
          %768 = sbr.rel (%p766) target = $region64
        $region63: #{vit_block_forward.5} parent=59 // pred_region
          %s769 = smul.u32 4, %s24
          %s771 = ssub.s32 512, 512
          %772 = vsyncadd %s762, %s771
          %s773 = smul.addr %s769, 128
          %s774 = scalar_lea.hbm %s10, %s773
          %s775 = sshll.u32 %s765, 4
          %s776 = int_to_ptr.vmem [resolvable:$true] %s775
          %781 = dma.vmem_to_hbm [thread:$0]  %s776, 512, %s774, %s762, 128, 128, 8
        $region64: #{vit_block_forward.5} parent=59 // pred_fallthru
          _
      $region60: #{vit_block_forward.5} parent=5 // pred_fallthru
        _
      %p782 = scmp.le.s32.totalorder 2, %s19
      // Predicated region
      $region65: #{vit_block_forward.5} parent=5 // pred_check
        %p783 = pneg %p782
      $region66: #{vit_block_forward.5} parent=5 // pred_check_branch
        %785 = sbr.rel (%p783) target = $region68
      $region67: #{vit_block_forward.5} parent=5 // pred_region
        %s786 = ssub.s32 %s19, 2
        // Predicated region
        $region69: #{vit_block_forward.5} parent=67 // pred_check
          %p787 = pneg %p268
        $region70: #{vit_block_forward.5} parent=67 // pred_check_branch
          %789 = sbr.rel (%p787) target = $region72
        $region71: #{vit_block_forward.5} parent=67 // pred_region
          %s790 = sand.u32 %s253, 1
          %s791 = scalar_lea.sflag [#allocation3], %s790
          %s792 = sand.u32 %s253, 1
          %s793 = smul.addr %s792, 32
          %s794 = scalar_lea.vmem [#allocation2], %s793
          %795 = dma.done %s791, 512
        $region72: #{vit_block_forward.5} parent=67 // pred_fallthru
          _
      $region68: #{vit_block_forward.5} parent=5 // pred_fallthru
        _
    $region6: #{vit_block_forward.5} parent=1 // loop_footer
      %s23 = sadd.s32 1, %s19
    $region7: #{vit_block_forward.5} parent=1 // loop_footer_branch
      %18 = sbr.rel target = $region3
    $region8: #{vit_block_forward.5} parent=1 // loop_exit
      _
    %796 = vsyncpa [#allocation3], 1
    %s797 = scalar_lea.sflag [#allocation3], 1
    %798 = vsyncpa %s797, 1

</llo_original>
